<compile_context>
chip_gen: v6e
topology: v6e:2x2x1
jax: 0.10.0
libtpu: 0.0.40
codegen_flags: <defaults>
</compile_context>

<pallas_src>
import functools

import jax
import jax.numpy as jnp
from jax.experimental import pallas as pl
from jax.experimental.pallas import tpu as pltpu

EPS = 1e-5


def _instance_norm(x):
    """InstanceNorm over axis 0 of an (H*W, C) f32 matrix.

    Single-pass stats: sum and sum-of-squares together (biased variance, eps=1e-5),
    matching PyTorch nn.InstanceNorm2d(affine=False).
    """
    n = x.shape[0]
    s1 = jnp.sum(x, axis=0, keepdims=True)
    s2 = jnp.sum(x * x, axis=0, keepdims=True)
    mean = s1 * (1.0 / n)
    var = s2 * (1.0 / n) - mean * mean          # biased variance
    return (x - mean) * jax.lax.rsqrt(var + EPS)


def _write_padded(pad_ref, val, hh, ww, c):
    """Write `val` (hh, ww, c) into the interior of a (hh+2, ww+2, c) VMEM scratch.

    Only the 1-pixel border is zeroed, and it is re-zeroed every grid step (cheap,
    ~2*(hh+ww)*c elements) instead of once at program_id==0: the batch axis is marked
    "parallel", so a given core is not guaranteed to ever execute step 0.
    """
    zrow = jnp.zeros((1, ww + 2, c), jnp.float32)
    zcol = jnp.zeros((hh, 1, c), jnp.float32)
    pad_ref[0:1, :, :] = zrow
    pad_ref[hh + 1:hh + 2, :, :] = zrow
    pad_ref[1:hh + 1, 0:1, :] = zcol
    pad_ref[1:hh + 1, ww + 1:ww + 2, :] = zcol
    pad_ref[1:hh + 1, 1:ww + 1, :] = val


def _im2col_3x3(pad_ref, ho, wo, c, s):
    """Gather the 9 3x3 taps from a zero-padded VMEM ref into an (ho*wo, 9*c) matrix.

    Taps are read directly from the ref (static slices for stride 1, strided pl.ds
    otherwise); channel order is (ky*3 + kx)*c + ci, matching the reshaped weights.
    """
    cols = []
    for ky in range(3):
        for kx in range(3):
            if s == 1:
                cols.append(pad_ref[ky:ky + ho, kx:kx + wo, :])
            else:
                cols.append(pad_ref[pl.ds(ky, ho, stride=s), pl.ds(kx, wo, stride=s), :])
    return jnp.concatenate(cols, axis=-1).reshape(ho * wo, 9 * c)


def basic_block_kernel(x_ref, w1_ref, w2_ref, ws_ref, o_ref, xpad_ref, ypad_ref, *, stride):
    """One grid step = one batch element.

    x_ref   : (1, H, W, Cin)        bf16 unpadded input (NHWC)
    w1_ref  : (9*Cin, Cout)         bf16 first 3x3 conv weights (im2col layout)
    w2_ref  : (9*Cout, Cout)        bf16 second 3x3 conv weights (im2col layout)
    ws_ref  : (Cin, Cout)           bf16 1x1 shortcut conv weights
    o_ref   : (1, Cout, Ho*Wo)      f32 output, NCHW-flat (lane-dense store)
    xpad_ref: (H+2, W+2, Cin)       f32 VMEM scratch (zero-padded input)
    ypad_ref: (Ho+2, Wo+2, Cout)    f32 VMEM scratch (zero-padded intermediate)
    """
    s = stride
    H, W, Cin = x_ref.shape[1], x_ref.shape[2], x_ref.shape[3]
    Cout = ws_ref.shape[1]
    Ho = (H - 1) // s + 1
    Wo = (W - 1) // s + 1
    f32 = jnp.float32
    bf16 = jnp.bfloat16

    # ---- zero-pad x inside the kernel (replaces the wrapper-side jnp.pad HBM copy) ----
    x = x_ref[0]                                            # (H, W, Cin) bf16
    _write_padded(xpad_ref, x.astype(f32), H, W, Cin)

    # ---- residual conv1: im2col -> one MXU matmul, K = 9*Cin ----
    p1 = _im2col_3x3(xpad_ref, Ho, Wo, Cin, s).astype(bf16)         # (Ho*Wo, 9*Cin)
    acc1 = jnp.dot(p1, w1_ref[...], preferred_element_type=f32)     # (Ho*Wo, Cout) f32
    y1 = jnp.maximum(_instance_norm(acc1), 0.0)                     # IN + ReLU

    # ---- residual conv2: pad intermediate in VMEM, im2col -> one matmul, K = 9*Cout ----
    _write_padded(ypad_ref, y1.reshape(Ho, Wo, Cout), Ho, Wo, Cout)
    p2 = _im2col_3x3(ypad_ref, Ho, Wo, Cout, 1).astype(bf16)        # (Ho*Wo, 9*Cout)
    y2 = _instance_norm(jnp.dot(p2, w2_ref[...], preferred_element_type=f32))

    # ---- shortcut: 1x1 conv (stride s, no pad, reads the aligned unpadded block) + IN ----
    if s == 1:
        xs = x.reshape(H * W, Cin)
    else:
        xs = x_ref[0, pl.ds(0, Ho, stride=s), pl.ds(0, Wo, stride=s), :].reshape(Ho * Wo, Cin)
    sc = _instance_norm(jnp.dot(xs, ws_ref[...], preferred_element_type=f32))

    # ---- add + final ReLU; store transposed (Cout, Ho*Wo) so the vst is lane-dense ----
    out = jnp.maximum(y2 + sc, 0.0)                                 # (Ho*Wo, Cout) f32
    o_ref[0] = out.T.astype(o_ref.dtype)                            # (Cout, Ho*Wo)


def basic_block(x_nchw, w1, w2, ws, *, stride=1):
    """x_nchw: (N, Cin, H, W); w1: (Cout, Cin, 3, 3); w2: (Cout, Cout, 3, 3); ws: (Cout, Cin, 1, 1)."""
    N, Cin, H, W = x_nchw.shape
    Cout = w1.shape[0]
    Ho = (H - 1) // stride + 1
    Wo = (W - 1) // stride + 1

    # NCHW -> NHWC for the kernel input; bf16 halves the activation/weight DMA bytes.
    # TODO(synk): keep the surrounding network NHWC end-to-end to drop this transpose too.
    x_nhwc = jnp.transpose(x_nchw, (0, 2, 3, 1)).astype(jnp.bfloat16)

    # OIHW -> im2col layouts: row index (ky*3 + kx)*Cin + ci, matching _im2col_3x3.
    w1t = jnp.transpose(w1, (2, 3, 1, 0)).reshape(9 * Cin, Cout).astype(jnp.bfloat16)
    w2t = jnp.transpose(w2, (2, 3, 1, 0)).reshape(9 * Cout, Cout).astype(jnp.bfloat16)
    wst = jnp.transpose(ws[:, :, 0, 0], (1, 0)).astype(jnp.bfloat16)

    kernel = functools.partial(basic_block_kernel, stride=stride)

    flops = 2 * N * Ho * Wo * Cout * (9 * Cin + 9 * Cout + Cin)
    bytes_accessed = (x_nhwc.size * 2
                      + (w1t.size + w2t.size + wst.size) * 2
                      + N * Cout * Ho * Wo * 4)
    cost = pl.CostEstimate(flops=flops, transcendentals=3 * N * Cout,
                           bytes_accessed=bytes_accessed)

    out_flat = pl.pallas_call(
        kernel,
        out_shape=jax.ShapeDtypeStruct((N, Cout, Ho * Wo), jnp.float32),
        grid_spec=pltpu.PrefetchScalarGridSpec(
            num_scalar_prefetch=0,
            grid=(N,),
            in_specs=[
                pl.BlockSpec((1, H, W, Cin), lambda n: (n, 0, 0, 0)),
                pl.BlockSpec((9 * Cin, Cout), lambda n: (0, 0)),
                pl.BlockSpec((9 * Cout, Cout), lambda n: (0, 0)),
                pl.BlockSpec((Cin, Cout), lambda n: (0, 0)),
            ],
            out_specs=pl.BlockSpec((1, Cout, Ho * Wo), lambda n: (n, 0, 0)),
            scratch_shapes=[
                pltpu.VMEM((H + 2, W + 2, Cin), jnp.float32),
                pltpu.VMEM((Ho + 2, Wo + 2, Cout), jnp.float32),
            ],
        ),
        compiler_params=pltpu.CompilerParams(
            dimension_semantics=("parallel",),       # batch steps are independent -> 2x on v7x
            vmem_limit_bytes=32 * 1024 * 1024,
        ),
        cost_estimate=cost,
    )(x_nhwc, w1t, w2t, wst)

    # Output is already NCHW-flat; only a metadata reshape is needed (no transpose).
    return out_flat.reshape(N, Cout, Ho, Wo)


def basic_block_reference(x, w1, w2, ws, *, stride=1):
    """Plain-JAX f32 reference mirroring the PyTorch module (NCHW)."""
    def conv(x, w, s, p):
        return jax.lax.conv_general_dilated(
            x, w, (s, s), [(p, p), (p, p)],
            dimension_numbers=("NCHW", "OIHW", "NCHW"))

    def inorm(x):
        m = jnp.mean(x, axis=(2, 3), keepdims=True)
        v = jnp.mean((x - m) ** 2, axis=(2, 3), keepdims=True)
        return (x - m) / jnp.sqrt(v + EPS)

    y = jnp.maximum(inorm(conv(x, w1, stride, 1)), 0.0)
    y = inorm(conv(y, w2, 1, 1))
    s = inorm(conv(x, ws, stride, 0))
    return jnp.maximum(y + s, 0.0)


if __name__ == "__main__":
    key = jax.random.PRNGKey(0)
    kx, k1, k2, k3 = jax.random.split(key, 4)

    N, Cin, Cout, H, W = 2, 4, 8, 16, 16
    stride = 1  # shortcut conv path is exercised because Cin != Cout

    x = jax.random.normal(kx, (N, Cin, H, W), jnp.float32)
    w1 = jax.random.normal(k1, (Cout, Cin, 3, 3), jnp.float32) * 0.1
    w2 = jax.random.normal(k2, (Cout, Cout, 3, 3), jnp.float32) * 0.1
    ws = jax.random.normal(k3, (Cout, Cin, 1, 1), jnp.float32) * 0.1

    out = jax.block_until_ready(basic_block(x, w1, w2, ws, stride=stride))
    ref = jax.block_until_ready(basic_block_reference(x, w1, w2, ws, stride=stride))

    assert out.shape == ref.shape == (N, Cout, H, W)
    # Tolerance accounts for bf16 MXU inputs (f32 accumulation) through two chained convs.
    assert jnp.allclose(out, ref, atol=5e-2, rtol=5e-2), float(jnp.max(jnp.abs(out - ref)))

    print("KERNEL_OK")
</pallas_src>

<mosaic_0001>
module attributes {stable_mosaic.version = 11 : i64} {
  func.func @basic_block_kernel(%arg0: i32, %arg1: memref<1x16x16x4xbf16, #tpu.memory_space<vmem>>, %arg2: memref<36x8xbf16, #tpu.memory_space<vmem>>, %arg3: memref<72x8xbf16, #tpu.memory_space<vmem>>, %arg4: memref<4x8xbf16, #tpu.memory_space<vmem>>, %arg5: memref<1x8x256xf32, #tpu.memory_space<vmem>>, %arg6: memref<18x18x4xf32, #tpu.memory_space<vmem>>, %arg7: memref<18x18x8xf32, #tpu.memory_space<vmem>>) attributes {dimension_semantics = [#tpu.dimension_semantics<parallel>], iteration_bounds = array<i64: 2>, scalar_prefetch = 0 : i64, scratch_operands = 2 : i64, tpu.core_type = #tpu.core_type<tc>, window_params = [{transform_indices = @transform_0, window_bounds = array<i64: 1, 16, 16, 4>}, {pipeline_mode = #tpu.pipeline_mode<synchronous>, transform_indices = @transform_1, window_bounds = array<i64: 36, 8>}, {pipeline_mode = #tpu.pipeline_mode<synchronous>, transform_indices = @transform_2, window_bounds = array<i64: 72, 8>}, {pipeline_mode = #tpu.pipeline_mode<synchronous>, transform_indices = @transform_3, window_bounds = array<i64: 4, 8>}, {transform_indices = @transform_4, window_bounds = array<i64: 1, 8, 256>}]} {
    %c0 = arith.constant 0 : index
    %c0_0 = arith.constant 0 : index
    %c0_1 = arith.constant 0 : index
    %c0_2 = arith.constant 0 : index
    %0 = vector.load %arg1[%c0, %c0_0, %c0_1, %c0_2] : memref<1x16x16x4xbf16, #tpu.memory_space<vmem>>, vector<1x16x16x4xbf16>
    %1 = vector.shape_cast %0 : vector<1x16x16x4xbf16> to vector<16x16x4xbf16>
    %2 = arith.extf %1 : vector<16x16x4xbf16> to vector<16x16x4xf32>
    %cst = arith.constant 0.000000e+00 : f32
    %3 = vector.broadcast %cst : f32 to vector<1x18x4xf32>
    %cst_3 = arith.constant 0.000000e+00 : f32
    %4 = vector.broadcast %cst_3 : f32 to vector<16x1x4xf32>
    %c0_4 = arith.constant 0 : index
    %c0_5 = arith.constant 0 : index
    %c0_6 = arith.constant 0 : index
    %5 = vector.load %arg6[%c0_4, %c0_5, %c0_6] : memref<18x18x4xf32, #tpu.memory_space<vmem>>, vector<1x18x4xf32>
    tpu.vector_store %arg6[%c0_4, %c0_5, %c0_6], %3 {strides = array<i32>} : memref<18x18x4xf32, #tpu.memory_space<vmem>>, vector<1x18x4xf32>,
    %c17 = arith.constant 17 : index
    %c0_7 = arith.constant 0 : index
    %c0_8 = arith.constant 0 : index
    %6 = vector.load %arg6[%c17, %c0_7, %c0_8] : memref<18x18x4xf32, #tpu.memory_space<vmem>>, vector<1x18x4xf32>
    tpu.vector_store %arg6[%c17, %c0_7, %c0_8], %3 {strides = array<i32>} : memref<18x18x4xf32, #tpu.memory_space<vmem>>, vector<1x18x4xf32>,
    %c1 = arith.constant 1 : index
    %c0_9 = arith.constant 0 : index
    %c0_10 = arith.constant 0 : index
    %7 = vector.load %arg6[%c1, %c0_9, %c0_10] : memref<18x18x4xf32, #tpu.memory_space<vmem>>, vector<16x1x4xf32>
    tpu.vector_store %arg6[%c1, %c0_9, %c0_10], %4 {strides = array<i32>} : memref<18x18x4xf32, #tpu.memory_space<vmem>>, vector<16x1x4xf32>,
    %c1_11 = arith.constant 1 : index
    %c17_12 = arith.constant 17 : index
    %c0_13 = arith.constant 0 : index
    %8 = vector.load %arg6[%c1_11, %c17_12, %c0_13] : memref<18x18x4xf32, #tpu.memory_space<vmem>>, vector<16x1x4xf32>
    tpu.vector_store %arg6[%c1_11, %c17_12, %c0_13], %4 {strides = array<i32>} : memref<18x18x4xf32, #tpu.memory_space<vmem>>, vector<16x1x4xf32>,
    %c1_14 = arith.constant 1 : index
    %c1_15 = arith.constant 1 : index
    %c0_16 = arith.constant 0 : index
    %9 = vector.load %arg6[%c1_14, %c1_15, %c0_16] : memref<18x18x4xf32, #tpu.memory_space<vmem>>, vector<16x16x4xf32>
    tpu.vector_store %arg6[%c1_14, %c1_15, %c0_16], %2 {strides = array<i32>} : memref<18x18x4xf32, #tpu.memory_space<vmem>>, vector<16x16x4xf32>,
    %c0_17 = arith.constant 0 : index
    %c0_18 = arith.constant 0 : index
    %c0_19 = arith.constant 0 : index
    %10 = vector.load %arg6[%c0_17, %c0_18, %c0_19] : memref<18x18x4xf32, #tpu.memory_space<vmem>>, vector<16x16x4xf32>
    %c0_20 = arith.constant 0 : index
    %c1_21 = arith.constant 1 : index
    %c0_22 = arith.constant 0 : index
    %11 = vector.load %arg6[%c0_20, %c1_21, %c0_22] : memref<18x18x4xf32, #tpu.memory_space<vmem>>, vector<16x16x4xf32>
    %c0_23 = arith.constant 0 : index
    %c2 = arith.constant 2 : index
    %c0_24 = arith.constant 0 : index
    %12 = vector.load %arg6[%c0_23, %c2, %c0_24] : memref<18x18x4xf32, #tpu.memory_space<vmem>>, vector<16x16x4xf32>
    %c1_25 = arith.constant 1 : index
    %c0_26 = arith.constant 0 : index
    %c0_27 = arith.constant 0 : index
    %13 = vector.load %arg6[%c1_25, %c0_26, %c0_27] : memref<18x18x4xf32, #tpu.memory_space<vmem>>, vector<16x16x4xf32>
    %c1_28 = arith.constant 1 : index
    %c1_29 = arith.constant 1 : index
    %c0_30 = arith.constant 0 : index
    %14 = vector.load %arg6[%c1_28, %c1_29, %c0_30] : memref<18x18x4xf32, #tpu.memory_space<vmem>>, vector<16x16x4xf32>
    %c1_31 = arith.constant 1 : index
    %c2_32 = arith.constant 2 : index
    %c0_33 = arith.constant 0 : index
    %15 = vector.load %arg6[%c1_31, %c2_32, %c0_33] : memref<18x18x4xf32, #tpu.memory_space<vmem>>, vector<16x16x4xf32>
    %c2_34 = arith.constant 2 : index
    %c0_35 = arith.constant 0 : index
    %c0_36 = arith.constant 0 : index
    %16 = vector.load %arg6[%c2_34, %c0_35, %c0_36] : memref<18x18x4xf32, #tpu.memory_space<vmem>>, vector<16x16x4xf32>
    %c2_37 = arith.constant 2 : index
    %c1_38 = arith.constant 1 : index
    %c0_39 = arith.constant 0 : index
    %17 = vector.load %arg6[%c2_37, %c1_38, %c0_39] : memref<18x18x4xf32, #tpu.memory_space<vmem>>, vector<16x16x4xf32>
    %c2_40 = arith.constant 2 : index
    %c2_41 = arith.constant 2 : index
    %c0_42 = arith.constant 0 : index
    %18 = vector.load %arg6[%c2_40, %c2_41, %c0_42] : memref<18x18x4xf32, #tpu.memory_space<vmem>>, vector<16x16x4xf32>
    %19 = tpu.concatenate %10, %11, %12, %13, %14, %15, %16, %17, %18 in 2 : vector<16x16x4xf32>, vector<16x16x4xf32>, vector<16x16x4xf32>, vector<16x16x4xf32>, vector<16x16x4xf32>, vector<16x16x4xf32>, vector<16x16x4xf32>, vector<16x16x4xf32>, vector<16x16x4xf32> -> vector<16x16x36xf32>
    %20 = vector.shape_cast %19 : vector<16x16x36xf32> to vector<256x36xf32>
    %21 = arith.truncf %20 : vector<256x36xf32> to vector<256x36xbf16>
    %c0_43 = arith.constant 0 : index
    %c0_44 = arith.constant 0 : index
    %22 = vector.load %arg2[%c0_43, %c0_44] : memref<36x8xbf16, #tpu.memory_space<vmem>>, vector<36x8xbf16>
    %cst_45 = arith.constant dense<0.000000e+00> : vector<256x8xf32>
    %23 = tpu.matmul %21, %22, %cst_45 {dimension_numbers = #tpu.dot_dimension_numbers<[1], [0], [0], [1], [0, 0, 1, 1], [], []>} : vector<256x36xbf16>, vector<36x8xbf16>, vector<256x8xf32> -> vector<256x8xf32>
    %cst_46 = arith.constant dense<0.000000e+00> : vector<8xf32>
    %24 = vector.multi_reduction <add>, %23, %cst_46 [0] : vector<256x8xf32> to vector<8xf32>
    %25 = vector.shape_cast %24 : vector<8xf32> to vector<1x8xf32>
    %26 = arith.mulf %23, %23 : vector<256x8xf32>
    %cst_47 = arith.constant dense<0.000000e+00> : vector<8xf32>
    %27 = vector.multi_reduction <add>, %26, %cst_47 [0] : vector<256x8xf32> to vector<8xf32>
    %28 = vector.shape_cast %27 : vector<8xf32> to vector<1x8xf32>
    %cst_48 = arith.constant 3.906250e-03 : f32
    %29 = vector.broadcast %cst_48 : f32 to vector<1x8xf32>
    %30 = arith.mulf %25, %29 : vector<1x8xf32>
    %cst_49 = arith.constant 3.906250e-03 : f32
    %31 = vector.broadcast %cst_49 : f32 to vector<1x8xf32>
    %32 = arith.mulf %28, %31 : vector<1x8xf32>
    %33 = arith.mulf %30, %30 : vector<1x8xf32>
    %34 = arith.subf %32, %33 : vector<1x8xf32>
    %35 = vector.broadcast %30 : vector<1x8xf32> to vector<256x8xf32>
    %36 = arith.subf %23, %35 : vector<256x8xf32>
    %cst_50 = arith.constant 9.99999974E-6 : f32
    %37 = vector.broadcast %cst_50 : f32 to vector<1x8xf32>
    %38 = arith.addf %34, %37 : vector<1x8xf32>
    %39 = math.rsqrt %38 : vector<1x8xf32>
    %40 = vector.broadcast %39 : vector<1x8xf32> to vector<256x8xf32>
    %41 = arith.mulf %36, %40 : vector<256x8xf32>
    %cst_51 = arith.constant 0.000000e+00 : f32
    %42 = vector.broadcast %cst_51 : f32 to vector<256x8xf32>
    %43 = arith.maximumf %41, %42 : vector<256x8xf32>
    %44 = vector.shape_cast %43 : vector<256x8xf32> to vector<16x16x8xf32>
    %cst_52 = arith.constant 0.000000e+00 : f32
    %45 = vector.broadcast %cst_52 : f32 to vector<1x18x8xf32>
    %cst_53 = arith.constant 0.000000e+00 : f32
    %46 = vector.broadcast %cst_53 : f32 to vector<16x1x8xf32>
    %c0_54 = arith.constant 0 : index
    %c0_55 = arith.constant 0 : index
    %c0_56 = arith.constant 0 : index
    %47 = vector.load %arg7[%c0_54, %c0_55, %c0_56] : memref<18x18x8xf32, #tpu.memory_space<vmem>>, vector<1x18x8xf32>
    tpu.vector_store %arg7[%c0_54, %c0_55, %c0_56], %45 {strides = array<i32>} : memref<18x18x8xf32, #tpu.memory_space<vmem>>, vector<1x18x8xf32>,
    %c17_57 = arith.constant 17 : index
    %c0_58 = arith.constant 0 : index
    %c0_59 = arith.constant 0 : index
    %48 = vector.load %arg7[%c17_57, %c0_58, %c0_59] : memref<18x18x8xf32, #tpu.memory_space<vmem>>, vector<1x18x8xf32>
    tpu.vector_store %arg7[%c17_57, %c0_58, %c0_59], %45 {strides = array<i32>} : memref<18x18x8xf32, #tpu.memory_space<vmem>>, vector<1x18x8xf32>,
    %c1_60 = arith.constant 1 : index
    %c0_61 = arith.constant 0 : index
    %c0_62 = arith.constant 0 : index
    %49 = vector.load %arg7[%c1_60, %c0_61, %c0_62] : memref<18x18x8xf32, #tpu.memory_space<vmem>>, vector<16x1x8xf32>
    tpu.vector_store %arg7[%c1_60, %c0_61, %c0_62], %46 {strides = array<i32>} : memref<18x18x8xf32, #tpu.memory_space<vmem>>, vector<16x1x8xf32>,
    %c1_63 = arith.constant 1 : index
    %c17_64 = arith.constant 17 : index
    %c0_65 = arith.constant 0 : index
    %50 = vector.load %arg7[%c1_63, %c17_64, %c0_65] : memref<18x18x8xf32, #tpu.memory_space<vmem>>, vector<16x1x8xf32>
    tpu.vector_store %arg7[%c1_63, %c17_64, %c0_65], %46 {strides = array<i32>} : memref<18x18x8xf32, #tpu.memory_space<vmem>>, vector<16x1x8xf32>,
    %c1_66 = arith.constant 1 : index
    %c1_67 = arith.constant 1 : index
    %c0_68 = arith.constant 0 : index
    %51 = vector.load %arg7[%c1_66, %c1_67, %c0_68] : memref<18x18x8xf32, #tpu.memory_space<vmem>>, vector<16x16x8xf32>
    tpu.vector_store %arg7[%c1_66, %c1_67, %c0_68], %44 {strides = array<i32>} : memref<18x18x8xf32, #tpu.memory_space<vmem>>, vector<16x16x8xf32>,
    %c0_69 = arith.constant 0 : index
    %c0_70 = arith.constant 0 : index
    %c0_71 = arith.constant 0 : index
    %52 = vector.load %arg7[%c0_69, %c0_70, %c0_71] : memref<18x18x8xf32, #tpu.memory_space<vmem>>, vector<16x16x8xf32>
    %c0_72 = arith.constant 0 : index
    %c1_73 = arith.constant 1 : index
    %c0_74 = arith.constant 0 : index
    %53 = vector.load %arg7[%c0_72, %c1_73, %c0_74] : memref<18x18x8xf32, #tpu.memory_space<vmem>>, vector<16x16x8xf32>
    %c0_75 = arith.constant 0 : index
    %c2_76 = arith.constant 2 : index
    %c0_77 = arith.constant 0 : index
    %54 = vector.load %arg7[%c0_75, %c2_76, %c0_77] : memref<18x18x8xf32, #tpu.memory_space<vmem>>, vector<16x16x8xf32>
    %c1_78 = arith.constant 1 : index
    %c0_79 = arith.constant 0 : index
    %c0_80 = arith.constant 0 : index
    %55 = vector.load %arg7[%c1_78, %c0_79, %c0_80] : memref<18x18x8xf32, #tpu.memory_space<vmem>>, vector<16x16x8xf32>
    %c1_81 = arith.constant 1 : index
    %c1_82 = arith.constant 1 : index
    %c0_83 = arith.constant 0 : index
    %56 = vector.load %arg7[%c1_81, %c1_82, %c0_83] : memref<18x18x8xf32, #tpu.memory_space<vmem>>, vector<16x16x8xf32>
    %c1_84 = arith.constant 1 : index
    %c2_85 = arith.constant 2 : index
    %c0_86 = arith.constant 0 : index
    %57 = vector.load %arg7[%c1_84, %c2_85, %c0_86] : memref<18x18x8xf32, #tpu.memory_space<vmem>>, vector<16x16x8xf32>
    %c2_87 = arith.constant 2 : index
    %c0_88 = arith.constant 0 : index
    %c0_89 = arith.constant 0 : index
    %58 = vector.load %arg7[%c2_87, %c0_88, %c0_89] : memref<18x18x8xf32, #tpu.memory_space<vmem>>, vector<16x16x8xf32>
    %c2_90 = arith.constant 2 : index
    %c1_91 = arith.constant 1 : index
    %c0_92 = arith.constant 0 : index
    %59 = vector.load %arg7[%c2_90, %c1_91, %c0_92] : memref<18x18x8xf32, #tpu.memory_space<vmem>>, vector<16x16x8xf32>
    %c2_93 = arith.constant 2 : index
    %c2_94 = arith.constant 2 : index
    %c0_95 = arith.constant 0 : index
    %60 = vector.load %arg7[%c2_93, %c2_94, %c0_95] : memref<18x18x8xf32, #tpu.memory_space<vmem>>, vector<16x16x8xf32>
    %61 = tpu.concatenate %52, %53, %54, %55, %56, %57, %58, %59, %60 in 2 : vector<16x16x8xf32>, vector<16x16x8xf32>, vector<16x16x8xf32>, vector<16x16x8xf32>, vector<16x16x8xf32>, vector<16x16x8xf32>, vector<16x16x8xf32>, vector<16x16x8xf32>, vector<16x16x8xf32> -> vector<16x16x72xf32>
    %62 = vector.shape_cast %61 : vector<16x16x72xf32> to vector<256x72xf32>
    %63 = arith.truncf %62 : vector<256x72xf32> to vector<256x72xbf16>
    %c0_96 = arith.constant 0 : index
    %c0_97 = arith.constant 0 : index
    %64 = vector.load %arg3[%c0_96, %c0_97] : memref<72x8xbf16, #tpu.memory_space<vmem>>, vector<72x8xbf16>
    %cst_98 = arith.constant dense<0.000000e+00> : vector<256x8xf32>
    %65 = tpu.matmul %63, %64, %cst_98 {dimension_numbers = #tpu.dot_dimension_numbers<[1], [0], [0], [1], [0, 0, 1, 1], [], []>} : vector<256x72xbf16>, vector<72x8xbf16>, vector<256x8xf32> -> vector<256x8xf32>
    %cst_99 = arith.constant dense<0.000000e+00> : vector<8xf32>
    %66 = vector.multi_reduction <add>, %65, %cst_99 [0] : vector<256x8xf32> to vector<8xf32>
    %67 = vector.shape_cast %66 : vector<8xf32> to vector<1x8xf32>
    %68 = arith.mulf %65, %65 : vector<256x8xf32>
    %cst_100 = arith.constant dense<0.000000e+00> : vector<8xf32>
    %69 = vector.multi_reduction <add>, %68, %cst_100 [0] : vector<256x8xf32> to vector<8xf32>
    %70 = vector.shape_cast %69 : vector<8xf32> to vector<1x8xf32>
    %cst_101 = arith.constant 3.906250e-03 : f32
    %71 = vector.broadcast %cst_101 : f32 to vector<1x8xf32>
    %72 = arith.mulf %67, %71 : vector<1x8xf32>
    %cst_102 = arith.constant 3.906250e-03 : f32
    %73 = vector.broadcast %cst_102 : f32 to vector<1x8xf32>
    %74 = arith.mulf %70, %73 : vector<1x8xf32>
    %75 = arith.mulf %72, %72 : vector<1x8xf32>
    %76 = arith.subf %74, %75 : vector<1x8xf32>
    %77 = vector.broadcast %72 : vector<1x8xf32> to vector<256x8xf32>
    %78 = arith.subf %65, %77 : vector<256x8xf32>
    %cst_103 = arith.constant 9.99999974E-6 : f32
    %79 = vector.broadcast %cst_103 : f32 to vector<1x8xf32>
    %80 = arith.addf %76, %79 : vector<1x8xf32>
    %81 = math.rsqrt %80 : vector<1x8xf32>
    %82 = vector.broadcast %81 : vector<1x8xf32> to vector<256x8xf32>
    %83 = arith.mulf %78, %82 : vector<256x8xf32>
    %84 = vector.shape_cast %1 : vector<16x16x4xbf16> to vector<256x4xbf16>
    %c0_104 = arith.constant 0 : index
    %c0_105 = arith.constant 0 : index
    %85 = vector.load %arg4[%c0_104, %c0_105] : memref<4x8xbf16, #tpu.memory_space<vmem>>, vector<4x8xbf16>
    %cst_106 = arith.constant dense<0.000000e+00> : vector<256x8xf32>
    %86 = tpu.matmul %84, %85, %cst_106 {dimension_numbers = #tpu.dot_dimension_numbers<[1], [0], [0], [1], [0, 0, 1, 1], [], []>} : vector<256x4xbf16>, vector<4x8xbf16>, vector<256x8xf32> -> vector<256x8xf32>
    %cst_107 = arith.constant dense<0.000000e+00> : vector<8xf32>
    %87 = vector.multi_reduction <add>, %86, %cst_107 [0] : vector<256x8xf32> to vector<8xf32>
    %88 = vector.shape_cast %87 : vector<8xf32> to vector<1x8xf32>
    %89 = arith.mulf %86, %86 : vector<256x8xf32>
    %cst_108 = arith.constant dense<0.000000e+00> : vector<8xf32>
    %90 = vector.multi_reduction <add>, %89, %cst_108 [0] : vector<256x8xf32> to vector<8xf32>
    %91 = vector.shape_cast %90 : vector<8xf32> to vector<1x8xf32>
    %cst_109 = arith.constant 3.906250e-03 : f32
    %92 = vector.broadcast %cst_109 : f32 to vector<1x8xf32>
    %93 = arith.mulf %88, %92 : vector<1x8xf32>
    %cst_110 = arith.constant 3.906250e-03 : f32
    %94 = vector.broadcast %cst_110 : f32 to vector<1x8xf32>
    %95 = arith.mulf %91, %94 : vector<1x8xf32>
    %96 = arith.mulf %93, %93 : vector<1x8xf32>
    %97 = arith.subf %95, %96 : vector<1x8xf32>
    %98 = vector.broadcast %93 : vector<1x8xf32> to vector<256x8xf32>
    %99 = arith.subf %86, %98 : vector<256x8xf32>
    %cst_111 = arith.constant 9.99999974E-6 : f32
    %100 = vector.broadcast %cst_111 : f32 to vector<1x8xf32>
    %101 = arith.addf %97, %100 : vector<1x8xf32>
    %102 = math.rsqrt %101 : vector<1x8xf32>
    %103 = vector.broadcast %102 : vector<1x8xf32> to vector<256x8xf32>
    %104 = arith.mulf %99, %103 : vector<256x8xf32>
    %105 = arith.addf %83, %104 : vector<256x8xf32>
    %cst_112 = arith.constant 0.000000e+00 : f32
    %106 = vector.broadcast %cst_112 : f32 to vector<256x8xf32>
    %107 = arith.maximumf %105, %106 : vector<256x8xf32>
    %108 = tpu.transpose %107, [1, 0] : vector<256x8xf32> -> vector<8x256xf32>
    %c0_113 = arith.constant 0 : index
    %c0_114 = arith.constant 0 : index
    %c0_115 = arith.constant 0 : index
    %109 = vector.load %arg5[%c0_113, %c0_114, %c0_115] : memref<1x8x256xf32, #tpu.memory_space<vmem>>, vector<1x8x256xf32>
    %110 = vector.shape_cast %109 : vector<1x8x256xf32> to vector<8x256xf32>
    %111 = vector.shape_cast %108 : vector<8x256xf32> to vector<1x8x256xf32>
    tpu.vector_store %arg5[%c0_113, %c0_114, %c0_115], %111 {strides = array<i32>} : memref<1x8x256xf32, #tpu.memory_space<vmem>>, vector<1x8x256xf32>,
    return
  }
  func.func @transform_0(%arg0: i32) -> (i32, i32, i32, i32) {
    %c0_i32 = arith.constant 0 : i32
    %c0_i32_0 = arith.constant 0 : i32
    %c0_i32_1 = arith.constant 0 : i32
    %c0_i32_2 = arith.constant 0 : i32
    return %arg0, %c0_i32, %c0_i32_0, %c0_i32_1 : i32, i32, i32, i32
  }
  func.func @transform_1(%arg0: i32) -> (i32, i32) {
    %c0_i32 = arith.constant 0 : i32
    %c0_i32_0 = arith.constant 0 : i32
    %c0_i32_1 = arith.constant 0 : i32
    return %c0_i32, %c0_i32_0 : i32, i32
  }
  func.func @transform_2(%arg0: i32) -> (i32, i32) {
    %c0_i32 = arith.constant 0 : i32
    %c0_i32_0 = arith.constant 0 : i32
    %c0_i32_1 = arith.constant 0 : i32
    return %c0_i32, %c0_i32_0 : i32, i32
  }
  func.func @transform_3(%arg0: i32) -> (i32, i32) {
    %c0_i32 = arith.constant 0 : i32
    %c0_i32_0 = arith.constant 0 : i32
    %c0_i32_1 = arith.constant 0 : i32
    return %c0_i32, %c0_i32_0 : i32, i32
  }
  func.func @transform_4(%arg0: i32) -> (i32, i32, i32) {
    %c0_i32 = arith.constant 0 : i32
    %c0_i32_0 = arith.constant 0 : i32
    %c0_i32_1 = arith.constant 0 : i32
    return %arg0, %c0_i32, %c0_i32_0 : i32, i32, i32
  }
}

</mosaic_0001>

<llo_original>
// kernel: tpu_custom_call.1
$region0: #{tpu_custom_call.1}
  #allocation0 [shape = 'u32[]', space=smem, size = 0x4, offset = 0x4, fixed_abs, tag = 'smem constant byte address 0x4 - core index']
  #allocation1 [shape = 'u32[144,128]{1,0:T(1,128)}', space=vmem, size = 0x12000, scoped, tag = 'internal scratch']
  #allocation2 [shape = 'f32[18,18,4]{2,1,0:T(8,128)}', space=vmem, size = 0x36000, scoped, tag = 'scratch operand']
  #allocation3 [shape = 'f32[18,18,8]{2,1,0:T(8,128)}', space=vmem, size = 0x36000, scoped, tag = 'scratch operand']
  %s0 = inlined_call_operand.vmem [shape: bf16[2,16,16,4], index: 0, kind: input, shape index: {}]
  %s1 = inlined_call_operand.vmem [shape: bf16[36,8], index: 1, kind: input, shape index: {}]
  %s2 = inlined_call_operand.vmem [shape: bf16[72,8], index: 2, kind: input, shape index: {}]
  %s3 = inlined_call_operand.vmem [shape: bf16[4,8], index: 3, kind: input, shape index: {}]
  %s4 = inlined_call_operand.hbm [shape: f32[2,8,256], index: 4, kind: output, shape index: {}]
  %s5 = sld [smem:[#allocation0]]
  $region49: #{tpu_custom_call.1} parent=0
    _
  %s7 = ssub.s32 1, %s5
  %s8 = scalar_select 0, %s7, %s5
  $region1: #{tpu_custom_call.1} parent=0
    #allocation4 [shape = 'u8[16384]{0}', space=vmem, size = 0x4000, scoped, tag = 'output window, operand 0']
    #allocation5 [shape = 's32[2]{0}', space=sflag, size = 0x8, scoped, tag = 'scoped memory for tpu_custom_call.1']
    %9 = vsyncpa [#allocation5], 0
    %s10 = scalar_lea.sflag [#allocation5], 1
    %11 = vsyncpa %s10, 0
    loop: start=0, step=1, limit=4
    $region2: #{tpu_custom_call.1} parent=1 // loop_pre_header
      _
    $region3: #{tpu_custom_call.1} parent=1 // loop_header
      %s13 = sphi 0, %s17
      %p14 = scmp.ge.s32.totalorder %s13, 4
      %s23 = sphi 0, %s25
      %s26 = sphi 0, %s23
      %s27 = sphi 0, %s26
      %s43 = sphi 0, %s27
      %s47 = sphi 0, %s47
      %s49 = sphi 0, %s47
      %s50 = sphi 0, %s49
      %s64 = sphi 0, %s50
      %s68 = sphi 0, %s68
      %s70 = sphi 0, %s68
      %s71 = sphi 0, %s70
      %s85 = sphi 0, %s71
      %s89 = sphi 0, %s89
      %s91 = sphi 0, %s89
      %s92 = sphi 0, %s91
      %s106 = sphi 0, %s92
      %s112 = sphi 0, %s114
      %s115 = sphi 0, %s112
      %s116 = sphi 0, %s115
      %s132 = sphi 0, %s116
    $region4: #{tpu_custom_call.1} parent=1 // loop_header_branch
      %16 = sbr.rel (%p14) target = $region8
    $region5: #{tpu_custom_call.1} parent=1 // loop_body
      %s18 = ssub.s32 %s13, 1
      %s19 = ssub.s32 %s13, 2
      %s20 = sadd.s32 %s13, 1
      %s21 = ssub.s32 %s13, %s20
      %p22 = scmp.eq.s32.totalorder %s21, 0
      %s24 = sadd.s32 %s23, 1
      %s25 = scalar_select %p22, %s23, %s24
      %p28 = pneg %p22
      %p29 = scmp.eq.s32.totalorder %s13, 1
      %p30 = por %p28, %p29
      %p31 = scmp.ne.s32.totalorder %s23, %s26
      %p32 = scmp.eq.s32.totalorder %s13, 0
      %p33 = por %p31, %p32
      %p34 = scmp.ne.s32.totalorder %s23, %s26
      %p35 = scmp.eq.s32.totalorder %s18, 1
      %p36 = por %p34, %p35
      %p37 = scmp.ne.s32.totalorder %s26, %s27
      %p38 = scmp.eq.s32.totalorder %s18, 0
      %p39 = por %p37, %p38
      %p40 = scmp.ne.s32.totalorder %s26, %s27
      %p41 = scmp.eq.s32.totalorder %s19, 1
      %p42 = por %p40, %p41
      %p44 = scmp.ne.s32.totalorder %s27, %s43
      %p45 = scmp.eq.s32.totalorder %s19, 0
      %p46 = por %p44, %p45
      %s48 = sadd.s32 %s47, 1
      %p51 = scmp.eq.s32.totalorder %s13, 1
      %p52 = scmp.ne.s32.totalorder %s47, %s49
      %p53 = scmp.eq.s32.totalorder %s13, 0
      %p54 = por %p52, %p53
      %p55 = scmp.ne.s32.totalorder %s47, %s49
      %p56 = scmp.eq.s32.totalorder %s18, 1
      %p57 = por %p55, %p56
      %p58 = scmp.ne.s32.totalorder %s49, %s50
      %p59 = scmp.eq.s32.totalorder %s18, 0
      %p60 = por %p58, %p59
      %p61 = scmp.ne.s32.totalorder %s49, %s50
      %p62 = scmp.eq.s32.totalorder %s19, 1
      %p63 = por %p61, %p62
      %p65 = scmp.ne.s32.totalorder %s50, %s64
      %p66 = scmp.eq.s32.totalorder %s19, 0
      %p67 = por %p65, %p66
      %s69 = sadd.s32 %s68, 1
      %p72 = scmp.eq.s32.totalorder %s13, 1
      %p73 = scmp.ne.s32.totalorder %s68, %s70
      %p74 = scmp.eq.s32.totalorder %s13, 0
      %p75 = por %p73, %p74
      %p76 = scmp.ne.s32.totalorder %s68, %s70
      %p77 = scmp.eq.s32.totalorder %s18, 1
      %p78 = por %p76, %p77
      %p79 = scmp.ne.s32.totalorder %s70, %s71
      %p80 = scmp.eq.s32.totalorder %s18, 0
      %p81 = por %p79, %p80
      %p82 = scmp.ne.s32.totalorder %s70, %s71
      %p83 = scmp.eq.s32.totalorder %s19, 1
      %p84 = por %p82, %p83
      %p86 = scmp.ne.s32.totalorder %s71, %s85
      %p87 = scmp.eq.s32.totalorder %s19, 0
      %p88 = por %p86, %p87
      %s90 = sadd.s32 %s89, 1
      %p93 = scmp.eq.s32.totalorder %s13, 1
      %p94 = scmp.ne.s32.totalorder %s89, %s91
      %p95 = scmp.eq.s32.totalorder %s13, 0
      %p96 = por %p94, %p95
      %p97 = scmp.ne.s32.totalorder %s89, %s91
      %p98 = scmp.eq.s32.totalorder %s18, 1
      %p99 = por %p97, %p98
      %p100 = scmp.ne.s32.totalorder %s91, %s92
      %p101 = scmp.eq.s32.totalorder %s18, 0
      %p102 = por %p100, %p101
      %p103 = scmp.ne.s32.totalorder %s91, %s92
      %p104 = scmp.eq.s32.totalorder %s19, 1
      %p105 = por %p103, %p104
      %p107 = scmp.ne.s32.totalorder %s92, %s106
      %p108 = scmp.eq.s32.totalorder %s19, 0
      %p109 = por %p107, %p108
      %s110 = ssub.s32 %s13, %s20
      %p111 = scmp.eq.s32.totalorder %s110, 0
      %s113 = sadd.s32 %s112, 1
      %s114 = scalar_select %p111, %s112, %s113
      %p117 = pneg %p111
      %p118 = scmp.eq.s32.totalorder %s13, 1
      %p119 = por %p117, %p118
      %p120 = scmp.ne.s32.totalorder %s112, %s115
      %p121 = scmp.eq.s32.totalorder %s13, 0
      %p122 = por %p120, %p121
      %p123 = scmp.ne.s32.totalorder %s112, %s115
      %p124 = scmp.eq.s32.totalorder %s18, 1
      %p125 = por %p123, %p124
      %p126 = scmp.ne.s32.totalorder %s115, %s116
      %p127 = scmp.eq.s32.totalorder %s18, 0
      %p128 = por %p126, %p127
      %p129 = scmp.ne.s32.totalorder %s115, %s116
      %p130 = scmp.eq.s32.totalorder %s19, 1
      %p131 = por %p129, %p130
      %p133 = scmp.ne.s32.totalorder %s116, %s132
      %p134 = scmp.eq.s32.totalorder %s19, 0
      %p135 = por %p133, %p134
      %p136 = scmp.le.s32.totalorder 1, %s13
      %p137 = scmp.lt.s32.totalorder %s13, 3
      %p138 = pnand %p136, %p137
      %p139 = pneg %p138
      // Predicated region
      $region9: #{tpu_custom_call.1} parent=5 // pred_check
        _
      $region10: #{tpu_custom_call.1} parent=5 // pred_check_branch
        %141 = sbr.rel (%p138) target = $region12
      $region11: #{tpu_custom_call.1} parent=5 // pred_region
        %s142 = ssub.s32 %s13, 1
        // Predicated region
        $region13: #{tpu_custom_call.1} parent=11 // pred_check
          %p143 = pneg %p60
        $region14: #{tpu_custom_call.1} parent=11 // pred_check_branch
          %145 = sbr.rel (%p143) target = $region16
        $region15: #{tpu_custom_call.1} parent=11 // pred_region
          _
        $region16: #{tpu_custom_call.1} parent=11 // pred_fallthru
          _
        // Predicated region
        $region17: #{tpu_custom_call.1} parent=11 // pred_check
          %p146 = pneg %p81
        $region18: #{tpu_custom_call.1} parent=11 // pred_check_branch
          %148 = sbr.rel (%p146) target = $region20
        $region19: #{tpu_custom_call.1} parent=11 // pred_region
          _
        $region20: #{tpu_custom_call.1} parent=11 // pred_fallthru
          _
        // Predicated region
        $region21: #{tpu_custom_call.1} parent=11 // pred_check
          %p149 = pneg %p102
        $region22: #{tpu_custom_call.1} parent=11 // pred_check_branch
          %151 = sbr.rel (%p149) target = $region24
        $region23: #{tpu_custom_call.1} parent=11 // pred_region
          _
        $region24: #{tpu_custom_call.1} parent=11 // pred_fallthru
          _
      $region12: #{tpu_custom_call.1} parent=5 // pred_fallthru
        _
      %p152 = scmp.lt.s32.totalorder %s13, 2
      // Predicated region
      $region25: #{tpu_custom_call.1} parent=5 // pred_check
        %p153 = pneg %p152
      $region26: #{tpu_custom_call.1} parent=5 // pred_check_branch
        %155 = sbr.rel (%p153) target = $region28
      $region27: #{tpu_custom_call.1} parent=5 // pred_region
        // Predicated region
        $region29: #{tpu_custom_call.1} parent=27 // pred_check
          %p156 = pneg %p33
        $region30: #{tpu_custom_call.1} parent=27 // pred_check_branch
          %158 = sbr.rel (%p156) target = $region32
        $region31: #{tpu_custom_call.1} parent=27 // pred_region
          %p159 = scmp.lt.s32.totalorder %s13, 1
          %s160 = scalar_select %p159, %s13, 1
          %s161 = smul.addr %s160, 32
          %s162 = smul.addr %s161, 4
          %s163 = scalar_lea.vmem %s0, %s162
        $region32: #{tpu_custom_call.1} parent=27 // pred_fallthru
          _
      $region28: #{tpu_custom_call.1} parent=5 // pred_fallthru
        _
      %p164 = scmp.le.s32.totalorder 1, %s13
      %p165 = scmp.lt.s32.totalorder %s13, 3
      %p166 = pnand %p164, %p165
      %p167 = pneg %p166
      // Predicated region
      $region33: #{tpu_custom_call.1} parent=5 // pred_check
        _
      $region34: #{tpu_custom_call.1} parent=5 // pred_check_branch
        %169 = sbr.rel (%p166) target = $region36
      $region35: #{tpu_custom_call.1} parent=5 // pred_region
        %s170 = ssub.s32 %s13, 1
        %p171 = scmp.lt.s32.totalorder %s18, 1
        %s172 = scalar_select %p171, %s18, 1
        %s173 = smul.addr %s172, 32
        %s174 = smul.addr %s173, 4
        %s175 = scalar_lea.vmem %s0, %s174
        %p176 = pneg %p39
        %p177 = pneg %p36
        %p178 = pneg %p60
        %p179 = pneg %p57
        %p180 = pneg %p81
        %p181 = pneg %p78
        %p182 = pneg %p102
        %p183 = pneg %p99
        %p184 = pneg %p128
        %p185 = pneg %p125
        %s186 = sand.u32 %s115, 1
        %s187 = scalar_lea.sflag [#allocation5], %s186
        %s188 = sand.u32 %s115, 1
        %s189 = smul.addr %s188, 16
        %s190 = scalar_lea.vmem [#allocation4], %s189
        %p191 = scmp.lt.s32.totalorder %s18, 1
        %s192 = scalar_select %p191, %s18, 1
        %s193 = smul.addr %s192, 32
        %s194 = smul.addr %s193, 4
        %s195 = scalar_lea.vmem %s0, %s194
        %v197 = vld [vmem:[%s195] sm:$0xf]
        %v198 = vld [vmem:[%s195 + $0x4] sm:$0xf]
        %v199 = vld [vmem:[%s195 + $0x8] sm:$0xf]
        %v200 = vld [vmem:[%s195 + $0xc] sm:$0xf]
        %v201 = vld [vmem:[%s195 + $0x10] sm:$0xf]
        %v202 = vld [vmem:[%s195 + $0x14] sm:$0xf]
        %v203 = vld [vmem:[%s195 + $0x18] sm:$0xf]
        %v204 = vld [vmem:[%s195 + $0x1c] sm:$0xf]
        %v205 = vld [vmem:[%s195 + $0x20] sm:$0xf]
        %v206 = vld [vmem:[%s195 + $0x24] sm:$0xf]
        %v207 = vld [vmem:[%s195 + $0x28] sm:$0xf]
        %v208 = vld [vmem:[%s195 + $0x2c] sm:$0xf]
        %v209 = vld [vmem:[%s195 + $0x30] sm:$0xf]
        %v210 = vld [vmem:[%s195 + $0x34] sm:$0xf]
        %v211 = vld [vmem:[%s195 + $0x38] sm:$0xf]
        %v212 = vld [vmem:[%s195 + $0x3c] sm:$0xf]
        %v213 = vld [vmem:[%s195 + $0x40] sm:$0xf]
        %v214 = vld [vmem:[%s195 + $0x44] sm:$0xf]
        %v215 = vld [vmem:[%s195 + $0x48] sm:$0xf]
        %v216 = vld [vmem:[%s195 + $0x4c] sm:$0xf]
        %v217 = vld [vmem:[%s195 + $0x50] sm:$0xf]
        %v218 = vld [vmem:[%s195 + $0x54] sm:$0xf]
        %v219 = vld [vmem:[%s195 + $0x58] sm:$0xf]
        %v220 = vld [vmem:[%s195 + $0x5c] sm:$0xf]
        %v221 = vld [vmem:[%s195 + $0x60] sm:$0xf]
        %v222 = vld [vmem:[%s195 + $0x64] sm:$0xf]
        %v223 = vld [vmem:[%s195 + $0x68] sm:$0xf]
        %v224 = vld [vmem:[%s195 + $0x6c] sm:$0xf]
        %v225 = vld [vmem:[%s195 + $0x70] sm:$0xf]
        %v226 = vld [vmem:[%s195 + $0x74] sm:$0xf]
        %v227 = vld [vmem:[%s195 + $0x78] sm:$0xf]
        %v228 = vld [vmem:[%s195 + $0x7c] sm:$0xf]
        %v229 = vunpack.c.l.bf16 %v197
        %v230 = vunpack.c.l.bf16 %v198
        %v231 = vunpack.c.l.bf16 %v199
        %v232 = vunpack.c.l.bf16 %v200
        %v233 = vunpack.c.l.bf16 %v201
        %v234 = vunpack.c.l.bf16 %v202
        %v235 = vunpack.c.l.bf16 %v203
        %v236 = vunpack.c.l.bf16 %v204
        %v237 = vunpack.c.l.bf16 %v205
        %v238 = vunpack.c.l.bf16 %v206
        %v239 = vunpack.c.l.bf16 %v207
        %v240 = vunpack.c.l.bf16 %v208
        %v241 = vunpack.c.l.bf16 %v209
        %v242 = vunpack.c.l.bf16 %v210
        %v243 = vunpack.c.l.bf16 %v211
        %v244 = vunpack.c.l.bf16 %v212
        %v245 = vunpack.c.l.bf16 %v213
        %v246 = vunpack.c.l.bf16 %v214
        %v247 = vunpack.c.l.bf16 %v215
        %v248 = vunpack.c.l.bf16 %v216
        %v249 = vunpack.c.l.bf16 %v217
        %v250 = vunpack.c.l.bf16 %v218
        %v251 = vunpack.c.l.bf16 %v219
        %v252 = vunpack.c.l.bf16 %v220
        %v253 = vunpack.c.l.bf16 %v221
        %v254 = vunpack.c.l.bf16 %v222
        %v255 = vunpack.c.l.bf16 %v223
        %v256 = vunpack.c.l.bf16 %v224
        %v257 = vunpack.c.l.bf16 %v225
        %v258 = vunpack.c.l.bf16 %v226
        %v259 = vunpack.c.l.bf16 %v227
        %v260 = vunpack.c.l.bf16 %v228
        %vm261 = vcmask 31744
        %262 = vst.msk [vmem:[#allocation2] sm:$0xff] %vm261, 0.0
        %263 = vst.msk [vmem:[#allocation2 + $0x8] sm:$0xff] %vm261, 0.0
        %vm264 = vcmask 25600
        %265 = vst.msk [vmem:[#allocation2 + $0x10] sm:$0x3] %vm264, 0.0
        %s266 = scalar_lea.vmem [#allocation2], 408
        %267 = vst.msk [vmem:[%s266] sm:$0xff] %vm261, 0.0
        %268 = vst.msk [vmem:[%s266 + $0x8] sm:$0xff] %vm261, 0.0
        %269 = vst.msk [vmem:[%s266 + $0x10] sm:$0x3] %vm264, 0.0
        %s270 = scalar_lea.vmem [#allocation2], 24
        %vm271 = vcmask 24576
        %272 = vst.msk [vmem:[%s270] sm:$0x1] %vm271, 0.0
        %273 = vst.msk [vmem:[%s270 + $0x18] sm:$0x1] %vm271, 0.0
        %274 = vst.msk [vmem:[%s270 + $0x30] sm:$0x1] %vm271, 0.0
        %275 = vst.msk [vmem:[%s270 + $0x48] sm:$0x1] %vm271, 0.0
        %276 = vst.msk [vmem:[%s270 + $0x60] sm:$0x1] %vm271, 0.0
        %277 = vst.msk [vmem:[%s270 + $0x78] sm:$0x1] %vm271, 0.0
        %278 = vst.msk [vmem:[%s270 + $0x90] sm:$0x1] %vm271, 0.0
        %279 = vst.msk [vmem:[%s270 + $0xa8] sm:$0x1] %vm271, 0.0
        %280 = vst.msk [vmem:[%s270 + $0xc0] sm:$0x1] %vm271, 0.0
        %281 = vst.msk [vmem:[%s270 + $0xd8] sm:$0x1] %vm271, 0.0
        %282 = vst.msk [vmem:[%s270 + $0xf0] sm:$0x1] %vm271, 0.0
        %283 = vst.msk [vmem:[%s270 + $0x108] sm:$0x1] %vm271, 0.0
        %284 = vst.msk [vmem:[%s270 + $0x120] sm:$0x1] %vm271, 0.0
        %285 = vst.msk [vmem:[%s270 + $0x138] sm:$0x1] %vm271, 0.0
        %286 = vst.msk [vmem:[%s270 + $0x150] sm:$0x1] %vm271, 0.0
        %287 = vst.msk [vmem:[%s270 + $0x168] sm:$0x1] %vm271, 0.0
        %288 = vst.msk [vmem:[%s270 + $0x11] sm:$0x1] %vm271, 0.0
        %289 = vst.msk [vmem:[%s270 + $0x29] sm:$0x1] %vm271, 0.0
        %290 = vst.msk [vmem:[%s270 + $0x41] sm:$0x1] %vm271, 0.0
        %291 = vst.msk [vmem:[%s270 + $0x59] sm:$0x1] %vm271, 0.0
        %292 = vst.msk [vmem:[%s270 + $0x71] sm:$0x1] %vm271, 0.0
        %293 = vst.msk [vmem:[%s270 + $0x89] sm:$0x1] %vm271, 0.0
        %294 = vst.msk [vmem:[%s270 + $0xa1] sm:$0x1] %vm271, 0.0
        %295 = vst.msk [vmem:[%s270 + $0xb9] sm:$0x1] %vm271, 0.0
        %296 = vst.msk [vmem:[%s270 + $0xd1] sm:$0x1] %vm271, 0.0
        %297 = vst.msk [vmem:[%s270 + $0xe9] sm:$0x1] %vm271, 0.0
        %298 = vst.msk [vmem:[%s270 + $0x101] sm:$0x1] %vm271, 0.0
        %299 = vst.msk [vmem:[%s270 + $0x119] sm:$0x1] %vm271, 0.0
        %300 = vst.msk [vmem:[%s270 + $0x131] sm:$0x1] %vm271, 0.0
        %301 = vst.msk [vmem:[%s270 + $0x149] sm:$0x1] %vm271, 0.0
        %302 = vst.msk [vmem:[%s270 + $0x161] sm:$0x1] %vm271, 0.0
        %303 = vst.msk [vmem:[%s270 + $0x179] sm:$0x1] %vm271, 0.0
        %304 = vst.msk [vmem:[%s270 + $0x1] sm:$0xff] %vm261, %v229
        %305 = vst.msk [vmem:[%s270 + $0x9] sm:$0xff] %vm261, %v230
        %306 = vst.msk [vmem:[%s270 + $0x19] sm:$0xff] %vm261, %v231
        %307 = vst.msk [vmem:[%s270 + $0x21] sm:$0xff] %vm261, %v232
        %308 = vst.msk [vmem:[%s270 + $0x31] sm:$0xff] %vm261, %v233
        %309 = vst.msk [vmem:[%s270 + $0x39] sm:$0xff] %vm261, %v234
        %310 = vst.msk [vmem:[%s270 + $0x49] sm:$0xff] %vm261, %v235
        %311 = vst.msk [vmem:[%s270 + $0x51] sm:$0xff] %vm261, %v236
        %312 = vst.msk [vmem:[%s270 + $0x61] sm:$0xff] %vm261, %v237
        %313 = vst.msk [vmem:[%s270 + $0x69] sm:$0xff] %vm261, %v238
        %314 = vst.msk [vmem:[%s270 + $0x79] sm:$0xff] %vm261, %v239
        %315 = vst.msk [vmem:[%s270 + $0x81] sm:$0xff] %vm261, %v240
        %316 = vst.msk [vmem:[%s270 + $0x91] sm:$0xff] %vm261, %v241
        %317 = vst.msk [vmem:[%s270 + $0x99] sm:$0xff] %vm261, %v242
        %318 = vst.msk [vmem:[%s270 + $0xa9] sm:$0xff] %vm261, %v243
        %319 = vst.msk [vmem:[%s270 + $0xb1] sm:$0xff] %vm261, %v244
        %320 = vst.msk [vmem:[%s270 + $0xc1] sm:$0xff] %vm261, %v245
        %321 = vst.msk [vmem:[%s270 + $0xc9] sm:$0xff] %vm261, %v246
        %322 = vst.msk [vmem:[%s270 + $0xd9] sm:$0xff] %vm261, %v247
        %323 = vst.msk [vmem:[%s270 + $0xe1] sm:$0xff] %vm261, %v248
        %324 = vst.msk [vmem:[%s270 + $0xf1] sm:$0xff] %vm261, %v249
        %325 = vst.msk [vmem:[%s270 + $0xf9] sm:$0xff] %vm261, %v250
        %326 = vst.msk [vmem:[%s270 + $0x109] sm:$0xff] %vm261, %v251
        %327 = vst.msk [vmem:[%s270 + $0x111] sm:$0xff] %vm261, %v252
        %328 = vst.msk [vmem:[%s270 + $0x121] sm:$0xff] %vm261, %v253
        %329 = vst.msk [vmem:[%s270 + $0x129] sm:$0xff] %vm261, %v254
        %330 = vst.msk [vmem:[%s270 + $0x139] sm:$0xff] %vm261, %v255
        %331 = vst.msk [vmem:[%s270 + $0x141] sm:$0xff] %vm261, %v256
        %332 = vst.msk [vmem:[%s270 + $0x151] sm:$0xff] %vm261, %v257
        %333 = vst.msk [vmem:[%s270 + $0x159] sm:$0xff] %vm261, %v258
        %334 = vst.msk [vmem:[%s270 + $0x169] sm:$0xff] %vm261, %v259
        %335 = vst.msk [vmem:[%s270 + $0x171] sm:$0xff] %vm261, %v260
        %v336 = vld [vmem:[#allocation2] sm:$0xff]
        %v337 = vld [vmem:[#allocation2 + $0x8] sm:$0xff]
        %v338 = vld [vmem:[#allocation2 + $0x18] sm:$0xff]
        %v339 = vld [vmem:[#allocation2 + $0x20] sm:$0xff]
        %v340 = vld [vmem:[#allocation2 + $0x30] sm:$0xff]
        %v341 = vld [vmem:[#allocation2 + $0x38] sm:$0xff]
        %v342 = vld [vmem:[#allocation2 + $0x48] sm:$0xff]
        %v343 = vld [vmem:[#allocation2 + $0x50] sm:$0xff]
        %v344 = vld [vmem:[#allocation2 + $0x60] sm:$0xff]
        %v345 = vld [vmem:[#allocation2 + $0x68] sm:$0xff]
        %v346 = vld [vmem:[#allocation2 + $0x78] sm:$0xff]
        %v347 = vld [vmem:[#allocation2 + $0x80] sm:$0xff]
        %v348 = vld [vmem:[#allocation2 + $0x90] sm:$0xff]
        %v349 = vld [vmem:[#allocation2 + $0x98] sm:$0xff]
        %v350 = vld [vmem:[#allocation2 + $0xa8] sm:$0xff]
        %v351 = vld [vmem:[#allocation2 + $0xb0] sm:$0xff]
        %v352 = vld [vmem:[#allocation2 + $0xc0] sm:$0xff]
        %v353 = vld [vmem:[#allocation2 + $0xc8] sm:$0xff]
        %v354 = vld [vmem:[#allocation2 + $0xd8] sm:$0xff]
        %v355 = vld [vmem:[#allocation2 + $0xe0] sm:$0xff]
        %v356 = vld [vmem:[#allocation2 + $0xf0] sm:$0xff]
        %v357 = vld [vmem:[#allocation2 + $0xf8] sm:$0xff]
        %v358 = vld [vmem:[#allocation2 + $0x108] sm:$0xff]
        %v359 = vld [vmem:[#allocation2 + $0x110] sm:$0xff]
        %v360 = vld [vmem:[#allocation2 + $0x120] sm:$0xff]
        %v361 = vld [vmem:[#allocation2 + $0x128] sm:$0xff]
        %v362 = vld [vmem:[#allocation2 + $0x138] sm:$0xff]
        %v363 = vld [vmem:[#allocation2 + $0x140] sm:$0xff]
        %v364 = vld [vmem:[#allocation2 + $0x150] sm:$0xff]
        %v365 = vld [vmem:[#allocation2 + $0x158] sm:$0xff]
        %v366 = vld [vmem:[#allocation2 + $0x168] sm:$0xff]
        %v367 = vld [vmem:[#allocation2 + $0x170] sm:$0xff]
        %v368 = vld [vmem:[#allocation2 + $0x1] sm:$0xff]
        %v369 = vld [vmem:[#allocation2 + $0x9] sm:$0xff]
        %v370 = vld [vmem:[#allocation2 + $0x19] sm:$0xff]
        %v371 = vld [vmem:[#allocation2 + $0x21] sm:$0xff]
        %v372 = vld [vmem:[#allocation2 + $0x31] sm:$0xff]
        %v373 = vld [vmem:[#allocation2 + $0x39] sm:$0xff]
        %v374 = vld [vmem:[#allocation2 + $0x49] sm:$0xff]
        %v375 = vld [vmem:[#allocation2 + $0x51] sm:$0xff]
        %v376 = vld [vmem:[#allocation2 + $0x61] sm:$0xff]
        %v377 = vld [vmem:[#allocation2 + $0x69] sm:$0xff]
        %v378 = vld [vmem:[#allocation2 + $0x79] sm:$0xff]
        %v379 = vld [vmem:[#allocation2 + $0x81] sm:$0xff]
        %v380 = vld [vmem:[#allocation2 + $0x91] sm:$0xff]
        %v381 = vld [vmem:[#allocation2 + $0x99] sm:$0xff]
        %v382 = vld [vmem:[#allocation2 + $0xa9] sm:$0xff]
        %v383 = vld [vmem:[#allocation2 + $0xb1] sm:$0xff]
        %v384 = vld [vmem:[#allocation2 + $0xc1] sm:$0xff]
        %v385 = vld [vmem:[#allocation2 + $0xc9] sm:$0xff]
        %v386 = vld [vmem:[#allocation2 + $0xd9] sm:$0xff]
        %v387 = vld [vmem:[#allocation2 + $0xe1] sm:$0xff]
        %v388 = vld [vmem:[#allocation2 + $0xf1] sm:$0xff]
        %v389 = vld [vmem:[#allocation2 + $0xf9] sm:$0xff]
        %v390 = vld [vmem:[#allocation2 + $0x109] sm:$0xff]
        %v391 = vld [vmem:[#allocation2 + $0x111] sm:$0xff]
        %v392 = vld [vmem:[#allocation2 + $0x121] sm:$0xff]
        %v393 = vld [vmem:[#allocation2 + $0x129] sm:$0xff]
        %v394 = vld [vmem:[#allocation2 + $0x139] sm:$0xff]
        %v395 = vld [vmem:[#allocation2 + $0x141] sm:$0xff]
        %v396 = vld [vmem:[#allocation2 + $0x151] sm:$0xff]
        %v397 = vld [vmem:[#allocation2 + $0x159] sm:$0xff]
        %v398 = vld [vmem:[#allocation2 + $0x169] sm:$0xff]
        %v399 = vld [vmem:[#allocation2 + $0x171] sm:$0xff]
        %v400 = vld [vmem:[#allocation2 + $0x2] sm:$0xff]
        %v401 = vld [vmem:[#allocation2 + $0xa] sm:$0xff]
        %v402 = vld [vmem:[#allocation2 + $0x1a] sm:$0xff]
        %v403 = vld [vmem:[#allocation2 + $0x22] sm:$0xff]
        %v404 = vld [vmem:[#allocation2 + $0x32] sm:$0xff]
        %v405 = vld [vmem:[#allocation2 + $0x3a] sm:$0xff]
        %v406 = vld [vmem:[#allocation2 + $0x4a] sm:$0xff]
        %v407 = vld [vmem:[#allocation2 + $0x52] sm:$0xff]
        %v408 = vld [vmem:[#allocation2 + $0x62] sm:$0xff]
        %v409 = vld [vmem:[#allocation2 + $0x6a] sm:$0xff]
        %v410 = vld [vmem:[#allocation2 + $0x7a] sm:$0xff]
        %v411 = vld [vmem:[#allocation2 + $0x82] sm:$0xff]
        %v412 = vld [vmem:[#allocation2 + $0x92] sm:$0xff]
        %v413 = vld [vmem:[#allocation2 + $0x9a] sm:$0xff]
        %v414 = vld [vmem:[#allocation2 + $0xaa] sm:$0xff]
        %v415 = vld [vmem:[#allocation2 + $0xb2] sm:$0xff]
        %v416 = vld [vmem:[#allocation2 + $0xc2] sm:$0xff]
        %v417 = vld [vmem:[#allocation2 + $0xca] sm:$0xff]
        %v418 = vld [vmem:[#allocation2 + $0xda] sm:$0xff]
        %v419 = vld [vmem:[#allocation2 + $0xe2] sm:$0xff]
        %v420 = vld [vmem:[#allocation2 + $0xf2] sm:$0xff]
        %v421 = vld [vmem:[#allocation2 + $0xfa] sm:$0xff]
        %v422 = vld [vmem:[#allocation2 + $0x10a] sm:$0xff]
        %v423 = vld [vmem:[#allocation2 + $0x112] sm:$0xff]
        %v424 = vld [vmem:[#allocation2 + $0x122] sm:$0xff]
        %v425 = vld [vmem:[#allocation2 + $0x12a] sm:$0xff]
        %v426 = vld [vmem:[#allocation2 + $0x13a] sm:$0xff]
        %v427 = vld [vmem:[#allocation2 + $0x142] sm:$0xff]
        %v428 = vld [vmem:[#allocation2 + $0x152] sm:$0xff]
        %v429 = vld [vmem:[#allocation2 + $0x15a] sm:$0xff]
        %v430 = vld [vmem:[#allocation2 + $0x16a] sm:$0xff]
        %v431 = vld [vmem:[#allocation2 + $0x172] sm:$0xff]
        %v432 = vld [vmem:[%s270] sm:$0xff]
        %v433 = vld [vmem:[%s270 + $0x8] sm:$0xff]
        %v434 = vld [vmem:[%s270 + $0x18] sm:$0xff]
        %v435 = vld [vmem:[%s270 + $0x20] sm:$0xff]
        %v436 = vld [vmem:[%s270 + $0x30] sm:$0xff]
        %v437 = vld [vmem:[%s270 + $0x38] sm:$0xff]
        %v438 = vld [vmem:[%s270 + $0x48] sm:$0xff]
        %v439 = vld [vmem:[%s270 + $0x50] sm:$0xff]
        %v440 = vld [vmem:[%s270 + $0x60] sm:$0xff]
        %v441 = vld [vmem:[%s270 + $0x68] sm:$0xff]
        %v442 = vld [vmem:[%s270 + $0x78] sm:$0xff]
        %v443 = vld [vmem:[%s270 + $0x80] sm:$0xff]
        %v444 = vld [vmem:[%s270 + $0x90] sm:$0xff]
        %v445 = vld [vmem:[%s270 + $0x98] sm:$0xff]
        %v446 = vld [vmem:[%s270 + $0xa8] sm:$0xff]
        %v447 = vld [vmem:[%s270 + $0xb0] sm:$0xff]
        %v448 = vld [vmem:[%s270 + $0xc0] sm:$0xff]
        %v449 = vld [vmem:[%s270 + $0xc8] sm:$0xff]
        %v450 = vld [vmem:[%s270 + $0xd8] sm:$0xff]
        %v451 = vld [vmem:[%s270 + $0xe0] sm:$0xff]
        %v452 = vld [vmem:[%s270 + $0xf0] sm:$0xff]
        %v453 = vld [vmem:[%s270 + $0xf8] sm:$0xff]
        %v454 = vld [vmem:[%s270 + $0x108] sm:$0xff]
        %v455 = vld [vmem:[%s270 + $0x110] sm:$0xff]
        %v456 = vld [vmem:[%s270 + $0x120] sm:$0xff]
        %v457 = vld [vmem:[%s270 + $0x128] sm:$0xff]
        %v458 = vld [vmem:[%s270 + $0x138] sm:$0xff]
        %v459 = vld [vmem:[%s270 + $0x140] sm:$0xff]
        %v460 = vld [vmem:[%s270 + $0x150] sm:$0xff]
        %v461 = vld [vmem:[%s270 + $0x158] sm:$0xff]
        %v462 = vld [vmem:[%s270 + $0x168] sm:$0xff]
        %v463 = vld [vmem:[%s270 + $0x170] sm:$0xff]
        %v464 = vld [vmem:[%s270 + $0x1] sm:$0xff]
        %v465 = vld [vmem:[%s270 + $0x9] sm:$0xff]
        %v466 = vld [vmem:[%s270 + $0x19] sm:$0xff]
        %v467 = vld [vmem:[%s270 + $0x21] sm:$0xff]
        %v468 = vld [vmem:[%s270 + $0x31] sm:$0xff]
        %v469 = vld [vmem:[%s270 + $0x39] sm:$0xff]
        %v470 = vld [vmem:[%s270 + $0x49] sm:$0xff]
        %v471 = vld [vmem:[%s270 + $0x51] sm:$0xff]
        %v472 = vld [vmem:[%s270 + $0x61] sm:$0xff]
        %v473 = vld [vmem:[%s270 + $0x69] sm:$0xff]
        %v474 = vld [vmem:[%s270 + $0x79] sm:$0xff]
        %v475 = vld [vmem:[%s270 + $0x81] sm:$0xff]
        %v476 = vld [vmem:[%s270 + $0x91] sm:$0xff]
        %v477 = vld [vmem:[%s270 + $0x99] sm:$0xff]
        %v478 = vld [vmem:[%s270 + $0xa9] sm:$0xff]
        %v479 = vld [vmem:[%s270 + $0xb1] sm:$0xff]
        %v480 = vld [vmem:[%s270 + $0xc1] sm:$0xff]
        %v481 = vld [vmem:[%s270 + $0xc9] sm:$0xff]
        %v482 = vld [vmem:[%s270 + $0xd9] sm:$0xff]
        %v483 = vld [vmem:[%s270 + $0xe1] sm:$0xff]
        %v484 = vld [vmem:[%s270 + $0xf1] sm:$0xff]
        %v485 = vld [vmem:[%s270 + $0xf9] sm:$0xff]
        %v486 = vld [vmem:[%s270 + $0x109] sm:$0xff]
        %v487 = vld [vmem:[%s270 + $0x111] sm:$0xff]
        %v488 = vld [vmem:[%s270 + $0x121] sm:$0xff]
        %v489 = vld [vmem:[%s270 + $0x129] sm:$0xff]
        %v490 = vld [vmem:[%s270 + $0x139] sm:$0xff]
        %v491 = vld [vmem:[%s270 + $0x141] sm:$0xff]
        %v492 = vld [vmem:[%s270 + $0x151] sm:$0xff]
        %v493 = vld [vmem:[%s270 + $0x159] sm:$0xff]
        %v494 = vld [vmem:[%s270 + $0x169] sm:$0xff]
        %v495 = vld [vmem:[%s270 + $0x171] sm:$0xff]
        %v496 = vld [vmem:[%s270 + $0x2] sm:$0xff]
        %v497 = vld [vmem:[%s270 + $0xa] sm:$0xff]
        %v498 = vld [vmem:[%s270 + $0x1a] sm:$0xff]
        %v499 = vld [vmem:[%s270 + $0x22] sm:$0xff]
        %v500 = vld [vmem:[%s270 + $0x32] sm:$0xff]
        %v501 = vld [vmem:[%s270 + $0x3a] sm:$0xff]
        %v502 = vld [vmem:[%s270 + $0x4a] sm:$0xff]
        %v503 = vld [vmem:[%s270 + $0x52] sm:$0xff]
        %v504 = vld [vmem:[%s270 + $0x62] sm:$0xff]
        %v505 = vld [vmem:[%s270 + $0x6a] sm:$0xff]
        %v506 = vld [vmem:[%s270 + $0x7a] sm:$0xff]
        %v507 = vld [vmem:[%s270 + $0x82] sm:$0xff]
        %v508 = vld [vmem:[%s270 + $0x92] sm:$0xff]
        %v509 = vld [vmem:[%s270 + $0x9a] sm:$0xff]
        %v510 = vld [vmem:[%s270 + $0xaa] sm:$0xff]
        %v511 = vld [vmem:[%s270 + $0xb2] sm:$0xff]
        %v512 = vld [vmem:[%s270 + $0xc2] sm:$0xff]
        %v513 = vld [vmem:[%s270 + $0xca] sm:$0xff]
        %v514 = vld [vmem:[%s270 + $0xda] sm:$0xff]
        %v515 = vld [vmem:[%s270 + $0xe2] sm:$0xff]
        %v516 = vld [vmem:[%s270 + $0xf2] sm:$0xff]
        %v517 = vld [vmem:[%s270 + $0xfa] sm:$0xff]
        %v518 = vld [vmem:[%s270 + $0x10a] sm:$0xff]
        %v519 = vld [vmem:[%s270 + $0x112] sm:$0xff]
        %v520 = vld [vmem:[%s270 + $0x122] sm:$0xff]
        %v521 = vld [vmem:[%s270 + $0x12a] sm:$0xff]
        %v522 = vld [vmem:[%s270 + $0x13a] sm:$0xff]
        %v523 = vld [vmem:[%s270 + $0x142] sm:$0xff]
        %v524 = vld [vmem:[%s270 + $0x152] sm:$0xff]
        %v525 = vld [vmem:[%s270 + $0x15a] sm:$0xff]
        %v526 = vld [vmem:[%s270 + $0x16a] sm:$0xff]
        %v527 = vld [vmem:[%s270 + $0x172] sm:$0xff]
        %s528 = scalar_lea.vmem [#allocation2], 48
        %v529 = vld [vmem:[%s528] sm:$0xff]
        %v530 = vld [vmem:[%s528 + $0x8] sm:$0xff]
        %v531 = vld [vmem:[%s528 + $0x18] sm:$0xff]
        %v532 = vld [vmem:[%s528 + $0x20] sm:$0xff]
        %v533 = vld [vmem:[%s528 + $0x30] sm:$0xff]
        %v534 = vld [vmem:[%s528 + $0x38] sm:$0xff]
        %v535 = vld [vmem:[%s528 + $0x48] sm:$0xff]
        %v536 = vld [vmem:[%s528 + $0x50] sm:$0xff]
        %v537 = vld [vmem:[%s528 + $0x60] sm:$0xff]
        %v538 = vld [vmem:[%s528 + $0x68] sm:$0xff]
        %v539 = vld [vmem:[%s528 + $0x78] sm:$0xff]
        %v540 = vld [vmem:[%s528 + $0x80] sm:$0xff]
        %v541 = vld [vmem:[%s528 + $0x90] sm:$0xff]
        %v542 = vld [vmem:[%s528 + $0x98] sm:$0xff]
        %v543 = vld [vmem:[%s528 + $0xa8] sm:$0xff]
        %v544 = vld [vmem:[%s528 + $0xb0] sm:$0xff]
        %v545 = vld [vmem:[%s528 + $0xc0] sm:$0xff]
        %v546 = vld [vmem:[%s528 + $0xc8] sm:$0xff]
        %v547 = vld [vmem:[%s528 + $0xd8] sm:$0xff]
        %v548 = vld [vmem:[%s528 + $0xe0] sm:$0xff]
        %v549 = vld [vmem:[%s528 + $0xf0] sm:$0xff]
        %v550 = vld [vmem:[%s528 + $0xf8] sm:$0xff]
        %v551 = vld [vmem:[%s528 + $0x108] sm:$0xff]
        %v552 = vld [vmem:[%s528 + $0x110] sm:$0xff]
        %v553 = vld [vmem:[%s528 + $0x120] sm:$0xff]
        %v554 = vld [vmem:[%s528 + $0x128] sm:$0xff]
        %v555 = vld [vmem:[%s528 + $0x138] sm:$0xff]
        %v556 = vld [vmem:[%s528 + $0x140] sm:$0xff]
        %v557 = vld [vmem:[%s528 + $0x150] sm:$0xff]
        %v558 = vld [vmem:[%s528 + $0x158] sm:$0xff]
        %v559 = vld [vmem:[%s528 + $0x168] sm:$0xff]
        %v560 = vld [vmem:[%s528 + $0x170] sm:$0xff]
        %v561 = vld [vmem:[%s528 + $0x1] sm:$0xff]
        %v562 = vld [vmem:[%s528 + $0x9] sm:$0xff]
        %v563 = vld [vmem:[%s528 + $0x19] sm:$0xff]
        %v564 = vld [vmem:[%s528 + $0x21] sm:$0xff]
        %v565 = vld [vmem:[%s528 + $0x31] sm:$0xff]
        %v566 = vld [vmem:[%s528 + $0x39] sm:$0xff]
        %v567 = vld [vmem:[%s528 + $0x49] sm:$0xff]
        %v568 = vld [vmem:[%s528 + $0x51] sm:$0xff]
        %v569 = vld [vmem:[%s528 + $0x61] sm:$0xff]
        %v570 = vld [vmem:[%s528 + $0x69] sm:$0xff]
        %v571 = vld [vmem:[%s528 + $0x79] sm:$0xff]
        %v572 = vld [vmem:[%s528 + $0x81] sm:$0xff]
        %v573 = vld [vmem:[%s528 + $0x91] sm:$0xff]
        %v574 = vld [vmem:[%s528 + $0x99] sm:$0xff]
        %v575 = vld [vmem:[%s528 + $0xa9] sm:$0xff]
        %v576 = vld [vmem:[%s528 + $0xb1] sm:$0xff]
        %v577 = vld [vmem:[%s528 + $0xc1] sm:$0xff]
        %v578 = vld [vmem:[%s528 + $0xc9] sm:$0xff]
        %v579 = vld [vmem:[%s528 + $0xd9] sm:$0xff]
        %v580 = vld [vmem:[%s528 + $0xe1] sm:$0xff]
        %v581 = vld [vmem:[%s528 + $0xf1] sm:$0xff]
        %v582 = vld [vmem:[%s528 + $0xf9] sm:$0xff]
        %v583 = vld [vmem:[%s528 + $0x109] sm:$0xff]
        %v584 = vld [vmem:[%s528 + $0x111] sm:$0xff]
        %v585 = vld [vmem:[%s528 + $0x121] sm:$0xff]
        %v586 = vld [vmem:[%s528 + $0x129] sm:$0xff]
        %v587 = vld [vmem:[%s528 + $0x139] sm:$0xff]
        %v588 = vld [vmem:[%s528 + $0x141] sm:$0xff]
        %v589 = vld [vmem:[%s528 + $0x151] sm:$0xff]
        %v590 = vld [vmem:[%s528 + $0x159] sm:$0xff]
        %v591 = vld [vmem:[%s528 + $0x169] sm:$0xff]
        %v592 = vld [vmem:[%s528 + $0x171] sm:$0xff]
        %v593 = vld [vmem:[%s528 + $0x2] sm:$0xff]
        %v594 = vld [vmem:[%s528 + $0xa] sm:$0xff]
        %v595 = vld [vmem:[%s528 + $0x1a] sm:$0xff]
        %v596 = vld [vmem:[%s528 + $0x22] sm:$0xff]
        %v597 = vld [vmem:[%s528 + $0x32] sm:$0xff]
        %v598 = vld [vmem:[%s528 + $0x3a] sm:$0xff]
        %v599 = vld [vmem:[%s528 + $0x4a] sm:$0xff]
        %v600 = vld [vmem:[%s528 + $0x52] sm:$0xff]
        %v601 = vld [vmem:[%s528 + $0x62] sm:$0xff]
        %v602 = vld [vmem:[%s528 + $0x6a] sm:$0xff]
        %v603 = vld [vmem:[%s528 + $0x7a] sm:$0xff]
        %v604 = vld [vmem:[%s528 + $0x82] sm:$0xff]
        %v605 = vld [vmem:[%s528 + $0x92] sm:$0xff]
        %v606 = vld [vmem:[%s528 + $0x9a] sm:$0xff]
        %v607 = vld [vmem:[%s528 + $0xaa] sm:$0xff]
        %v608 = vld [vmem:[%s528 + $0xb2] sm:$0xff]
        %v609 = vld [vmem:[%s528 + $0xc2] sm:$0xff]
        %v610 = vld [vmem:[%s528 + $0xca] sm:$0xff]
        %v611 = vld [vmem:[%s528 + $0xda] sm:$0xff]
        %v612 = vld [vmem:[%s528 + $0xe2] sm:$0xff]
        %v613 = vld [vmem:[%s528 + $0xf2] sm:$0xff]
        %v614 = vld [vmem:[%s528 + $0xfa] sm:$0xff]
        %v615 = vld [vmem:[%s528 + $0x10a] sm:$0xff]
        %v616 = vld [vmem:[%s528 + $0x112] sm:$0xff]
        %v617 = vld [vmem:[%s528 + $0x122] sm:$0xff]
        %v618 = vld [vmem:[%s528 + $0x12a] sm:$0xff]
        %v619 = vld [vmem:[%s528 + $0x13a] sm:$0xff]
        %v620 = vld [vmem:[%s528 + $0x142] sm:$0xff]
        %v621 = vld [vmem:[%s528 + $0x152] sm:$0xff]
        %v622 = vld [vmem:[%s528 + $0x15a] sm:$0xff]
        %v623 = vld [vmem:[%s528 + $0x16a] sm:$0xff]
        %v624 = vld [vmem:[%s528 + $0x172] sm:$0xff]
        %657 = vrot.lane.b32.xlu0 %v368, 4
        %v658 = vpop.permute.xlu0 %657
        %659 = vrot.lane.b32.xlu0 %v369, 4
        %v660 = vpop.permute.xlu0 %659
        %661 = vrot.lane.b32.xlu0 %v370, 4
        %v662 = vpop.permute.xlu0 %661
        %663 = vrot.lane.b32.xlu0 %v371, 4
        %v664 = vpop.permute.xlu0 %663
        %665 = vrot.lane.b32.xlu0 %v372, 4
        %v666 = vpop.permute.xlu0 %665
        %667 = vrot.lane.b32.xlu0 %v373, 4
        %v668 = vpop.permute.xlu0 %667
        %669 = vrot.lane.b32.xlu0 %v374, 4
        %v670 = vpop.permute.xlu0 %669
        %671 = vrot.lane.b32.xlu0 %v375, 4
        %v672 = vpop.permute.xlu0 %671
        %673 = vrot.lane.b32.xlu0 %v376, 4
        %v674 = vpop.permute.xlu0 %673
        %675 = vrot.lane.b32.xlu0 %v377, 4
        %v676 = vpop.permute.xlu0 %675
        %677 = vrot.lane.b32.xlu0 %v378, 4
        %v678 = vpop.permute.xlu0 %677
        %679 = vrot.lane.b32.xlu0 %v379, 4
        %v680 = vpop.permute.xlu0 %679
        %681 = vrot.lane.b32.xlu0 %v380, 4
        %v682 = vpop.permute.xlu0 %681
        %683 = vrot.lane.b32.xlu0 %v381, 4
        %v684 = vpop.permute.xlu0 %683
        %685 = vrot.lane.b32.xlu0 %v382, 4
        %v686 = vpop.permute.xlu0 %685
        %687 = vrot.lane.b32.xlu0 %v383, 4
        %v688 = vpop.permute.xlu0 %687
        %689 = vrot.lane.b32.xlu0 %v384, 4
        %v690 = vpop.permute.xlu0 %689
        %691 = vrot.lane.b32.xlu0 %v385, 4
        %v692 = vpop.permute.xlu0 %691
        %693 = vrot.lane.b32.xlu0 %v386, 4
        %v694 = vpop.permute.xlu0 %693
        %695 = vrot.lane.b32.xlu0 %v387, 4
        %v696 = vpop.permute.xlu0 %695
        %697 = vrot.lane.b32.xlu0 %v388, 4
        %v698 = vpop.permute.xlu0 %697
        %699 = vrot.lane.b32.xlu0 %v389, 4
        %v700 = vpop.permute.xlu0 %699
        %701 = vrot.lane.b32.xlu0 %v390, 4
        %v702 = vpop.permute.xlu0 %701
        %703 = vrot.lane.b32.xlu0 %v391, 4
        %v704 = vpop.permute.xlu0 %703
        %705 = vrot.lane.b32.xlu0 %v392, 4
        %v706 = vpop.permute.xlu0 %705
        %707 = vrot.lane.b32.xlu0 %v393, 4
        %v708 = vpop.permute.xlu0 %707
        %709 = vrot.lane.b32.xlu0 %v394, 4
        %v710 = vpop.permute.xlu0 %709
        %711 = vrot.lane.b32.xlu0 %v395, 4
        %v712 = vpop.permute.xlu0 %711
        %713 = vrot.lane.b32.xlu0 %v396, 4
        %v714 = vpop.permute.xlu0 %713
        %715 = vrot.lane.b32.xlu0 %v397, 4
        %v716 = vpop.permute.xlu0 %715
        %717 = vrot.lane.b32.xlu0 %v398, 4
        %v718 = vpop.permute.xlu0 %717
        %719 = vrot.lane.b32.xlu0 %v399, 4
        %v720 = vpop.permute.xlu0 %719
        %785 = vrot.lane.b32.xlu0 %v400, 8
        %v786 = vpop.permute.xlu0 %785
        %787 = vrot.lane.b32.xlu0 %v401, 8
        %v788 = vpop.permute.xlu0 %787
        %789 = vrot.lane.b32.xlu0 %v402, 8
        %v790 = vpop.permute.xlu0 %789
        %791 = vrot.lane.b32.xlu0 %v403, 8
        %v792 = vpop.permute.xlu0 %791
        %793 = vrot.lane.b32.xlu0 %v404, 8
        %v794 = vpop.permute.xlu0 %793
        %795 = vrot.lane.b32.xlu0 %v405, 8
        %v796 = vpop.permute.xlu0 %795
        %797 = vrot.lane.b32.xlu0 %v406, 8
        %v798 = vpop.permute.xlu0 %797
        %799 = vrot.lane.b32.xlu0 %v407, 8
        %v800 = vpop.permute.xlu0 %799
        %801 = vrot.lane.b32.xlu0 %v408, 8
        %v802 = vpop.permute.xlu0 %801
        %803 = vrot.lane.b32.xlu0 %v409, 8
        %v804 = vpop.permute.xlu0 %803
        %805 = vrot.lane.b32.xlu0 %v410, 8
        %v806 = vpop.permute.xlu0 %805
        %807 = vrot.lane.b32.xlu0 %v411, 8
        %v808 = vpop.permute.xlu0 %807
        %809 = vrot.lane.b32.xlu0 %v412, 8
        %v810 = vpop.permute.xlu0 %809
        %811 = vrot.lane.b32.xlu0 %v413, 8
        %v812 = vpop.permute.xlu0 %811
        %813 = vrot.lane.b32.xlu0 %v414, 8
        %v814 = vpop.permute.xlu0 %813
        %815 = vrot.lane.b32.xlu0 %v415, 8
        %v816 = vpop.permute.xlu0 %815
        %817 = vrot.lane.b32.xlu0 %v416, 8
        %v818 = vpop.permute.xlu0 %817
        %819 = vrot.lane.b32.xlu0 %v417, 8
        %v820 = vpop.permute.xlu0 %819
        %821 = vrot.lane.b32.xlu0 %v418, 8
        %v822 = vpop.permute.xlu0 %821
        %823 = vrot.lane.b32.xlu0 %v419, 8
        %v824 = vpop.permute.xlu0 %823
        %825 = vrot.lane.b32.xlu0 %v420, 8
        %v826 = vpop.permute.xlu0 %825
        %827 = vrot.lane.b32.xlu0 %v421, 8
        %v828 = vpop.permute.xlu0 %827
        %829 = vrot.lane.b32.xlu0 %v422, 8
        %v830 = vpop.permute.xlu0 %829
        %831 = vrot.lane.b32.xlu0 %v423, 8
        %v832 = vpop.permute.xlu0 %831
        %833 = vrot.lane.b32.xlu0 %v424, 8
        %v834 = vpop.permute.xlu0 %833
        %835 = vrot.lane.b32.xlu0 %v425, 8
        %v836 = vpop.permute.xlu0 %835
        %837 = vrot.lane.b32.xlu0 %v426, 8
        %v838 = vpop.permute.xlu0 %837
        %839 = vrot.lane.b32.xlu0 %v427, 8
        %v840 = vpop.permute.xlu0 %839
        %841 = vrot.lane.b32.xlu0 %v428, 8
        %v842 = vpop.permute.xlu0 %841
        %843 = vrot.lane.b32.xlu0 %v429, 8
        %v844 = vpop.permute.xlu0 %843
        %845 = vrot.lane.b32.xlu0 %v430, 8
        %v846 = vpop.permute.xlu0 %845
        %847 = vrot.lane.b32.xlu0 %v431, 8
        %v848 = vpop.permute.xlu0 %847
        %913 = vrot.lane.b32.xlu0 %v432, 12
        %v914 = vpop.permute.xlu0 %913
        %915 = vrot.lane.b32.xlu0 %v433, 12
        %v916 = vpop.permute.xlu0 %915
        %917 = vrot.lane.b32.xlu0 %v434, 12
        %v918 = vpop.permute.xlu0 %917
        %919 = vrot.lane.b32.xlu0 %v435, 12
        %v920 = vpop.permute.xlu0 %919
        %921 = vrot.lane.b32.xlu0 %v436, 12
        %v922 = vpop.permute.xlu0 %921
        %923 = vrot.lane.b32.xlu0 %v437, 12
        %v924 = vpop.permute.xlu0 %923
        %925 = vrot.lane.b32.xlu0 %v438, 12
        %v926 = vpop.permute.xlu0 %925
        %927 = vrot.lane.b32.xlu0 %v439, 12
        %v928 = vpop.permute.xlu0 %927
        %929 = vrot.lane.b32.xlu0 %v440, 12
        %v930 = vpop.permute.xlu0 %929
        %931 = vrot.lane.b32.xlu0 %v441, 12
        %v932 = vpop.permute.xlu0 %931
        %933 = vrot.lane.b32.xlu0 %v442, 12
        %v934 = vpop.permute.xlu0 %933
        %935 = vrot.lane.b32.xlu0 %v443, 12
        %v936 = vpop.permute.xlu0 %935
        %937 = vrot.lane.b32.xlu0 %v444, 12
        %v938 = vpop.permute.xlu0 %937
        %939 = vrot.lane.b32.xlu0 %v445, 12
        %v940 = vpop.permute.xlu0 %939
        %941 = vrot.lane.b32.xlu0 %v446, 12
        %v942 = vpop.permute.xlu0 %941
        %943 = vrot.lane.b32.xlu0 %v447, 12
        %v944 = vpop.permute.xlu0 %943
        %945 = vrot.lane.b32.xlu0 %v448, 12
        %v946 = vpop.permute.xlu0 %945
        %947 = vrot.lane.b32.xlu0 %v449, 12
        %v948 = vpop.permute.xlu0 %947
        %949 = vrot.lane.b32.xlu0 %v450, 12
        %v950 = vpop.permute.xlu0 %949
        %951 = vrot.lane.b32.xlu0 %v451, 12
        %v952 = vpop.permute.xlu0 %951
        %953 = vrot.lane.b32.xlu0 %v452, 12
        %v954 = vpop.permute.xlu0 %953
        %955 = vrot.lane.b32.xlu0 %v453, 12
        %v956 = vpop.permute.xlu0 %955
        %957 = vrot.lane.b32.xlu0 %v454, 12
        %v958 = vpop.permute.xlu0 %957
        %959 = vrot.lane.b32.xlu0 %v455, 12
        %v960 = vpop.permute.xlu0 %959
        %961 = vrot.lane.b32.xlu0 %v456, 12
        %v962 = vpop.permute.xlu0 %961
        %963 = vrot.lane.b32.xlu0 %v457, 12
        %v964 = vpop.permute.xlu0 %963
        %965 = vrot.lane.b32.xlu0 %v458, 12
        %v966 = vpop.permute.xlu0 %965
        %967 = vrot.lane.b32.xlu0 %v459, 12
        %v968 = vpop.permute.xlu0 %967
        %969 = vrot.lane.b32.xlu0 %v460, 12
        %v970 = vpop.permute.xlu0 %969
        %971 = vrot.lane.b32.xlu0 %v461, 12
        %v972 = vpop.permute.xlu0 %971
        %973 = vrot.lane.b32.xlu0 %v462, 12
        %v974 = vpop.permute.xlu0 %973
        %975 = vrot.lane.b32.xlu0 %v463, 12
        %v976 = vpop.permute.xlu0 %975
        %1041 = vrot.lane.b32.xlu0 %v464, 16
        %v1042 = vpop.permute.xlu0 %1041
        %1043 = vrot.lane.b32.xlu0 %v465, 16
        %v1044 = vpop.permute.xlu0 %1043
        %1045 = vrot.lane.b32.xlu0 %v466, 16
        %v1046 = vpop.permute.xlu0 %1045
        %1047 = vrot.lane.b32.xlu0 %v467, 16
        %v1048 = vpop.permute.xlu0 %1047
        %1049 = vrot.lane.b32.xlu0 %v468, 16
        %v1050 = vpop.permute.xlu0 %1049
        %1051 = vrot.lane.b32.xlu0 %v469, 16
        %v1052 = vpop.permute.xlu0 %1051
        %1053 = vrot.lane.b32.xlu0 %v470, 16
        %v1054 = vpop.permute.xlu0 %1053
        %1055 = vrot.lane.b32.xlu0 %v471, 16
        %v1056 = vpop.permute.xlu0 %1055
        %1057 = vrot.lane.b32.xlu0 %v472, 16
        %v1058 = vpop.permute.xlu0 %1057
        %1059 = vrot.lane.b32.xlu0 %v473, 16
        %v1060 = vpop.permute.xlu0 %1059
        %1061 = vrot.lane.b32.xlu0 %v474, 16
        %v1062 = vpop.permute.xlu0 %1061
        %1063 = vrot.lane.b32.xlu0 %v475, 16
        %v1064 = vpop.permute.xlu0 %1063
        %1065 = vrot.lane.b32.xlu0 %v476, 16
        %v1066 = vpop.permute.xlu0 %1065
        %1067 = vrot.lane.b32.xlu0 %v477, 16
        %v1068 = vpop.permute.xlu0 %1067
        %1069 = vrot.lane.b32.xlu0 %v478, 16
        %v1070 = vpop.permute.xlu0 %1069
        %1071 = vrot.lane.b32.xlu0 %v479, 16
        %v1072 = vpop.permute.xlu0 %1071
        %1073 = vrot.lane.b32.xlu0 %v480, 16
        %v1074 = vpop.permute.xlu0 %1073
        %1075 = vrot.lane.b32.xlu0 %v481, 16
        %v1076 = vpop.permute.xlu0 %1075
        %1077 = vrot.lane.b32.xlu0 %v482, 16
        %v1078 = vpop.permute.xlu0 %1077
        %1079 = vrot.lane.b32.xlu0 %v483, 16
        %v1080 = vpop.permute.xlu0 %1079
        %1081 = vrot.lane.b32.xlu0 %v484, 16
        %v1082 = vpop.permute.xlu0 %1081
        %1083 = vrot.lane.b32.xlu0 %v485, 16
        %v1084 = vpop.permute.xlu0 %1083
        %1085 = vrot.lane.b32.xlu0 %v486, 16
        %v1086 = vpop.permute.xlu0 %1085
        %1087 = vrot.lane.b32.xlu0 %v487, 16
        %v1088 = vpop.permute.xlu0 %1087
        %1089 = vrot.lane.b32.xlu0 %v488, 16
        %v1090 = vpop.permute.xlu0 %1089
        %1091 = vrot.lane.b32.xlu0 %v489, 16
        %v1092 = vpop.permute.xlu0 %1091
        %1093 = vrot.lane.b32.xlu0 %v490, 16
        %v1094 = vpop.permute.xlu0 %1093
        %1095 = vrot.lane.b32.xlu0 %v491, 16
        %v1096 = vpop.permute.xlu0 %1095
        %1097 = vrot.lane.b32.xlu0 %v492, 16
        %v1098 = vpop.permute.xlu0 %1097
        %1099 = vrot.lane.b32.xlu0 %v493, 16
        %v1100 = vpop.permute.xlu0 %1099
        %1101 = vrot.lane.b32.xlu0 %v494, 16
        %v1102 = vpop.permute.xlu0 %1101
        %1103 = vrot.lane.b32.xlu0 %v495, 16
        %v1104 = vpop.permute.xlu0 %1103
        %1169 = vrot.lane.b32.xlu0 %v496, 20
        %v1170 = vpop.permute.xlu0 %1169
        %1171 = vrot.lane.b32.xlu0 %v497, 20
        %v1172 = vpop.permute.xlu0 %1171
        %1173 = vrot.lane.b32.xlu0 %v498, 20
        %v1174 = vpop.permute.xlu0 %1173
        %1175 = vrot.lane.b32.xlu0 %v499, 20
        %v1176 = vpop.permute.xlu0 %1175
        %1177 = vrot.lane.b32.xlu0 %v500, 20
        %v1178 = vpop.permute.xlu0 %1177
        %1179 = vrot.lane.b32.xlu0 %v501, 20
        %v1180 = vpop.permute.xlu0 %1179
        %1181 = vrot.lane.b32.xlu0 %v502, 20
        %v1182 = vpop.permute.xlu0 %1181
        %1183 = vrot.lane.b32.xlu0 %v503, 20
        %v1184 = vpop.permute.xlu0 %1183
        %1185 = vrot.lane.b32.xlu0 %v504, 20
        %v1186 = vpop.permute.xlu0 %1185
        %1187 = vrot.lane.b32.xlu0 %v505, 20
        %v1188 = vpop.permute.xlu0 %1187
        %1189 = vrot.lane.b32.xlu0 %v506, 20
        %v1190 = vpop.permute.xlu0 %1189
        %1191 = vrot.lane.b32.xlu0 %v507, 20
        %v1192 = vpop.permute.xlu0 %1191
        %1193 = vrot.lane.b32.xlu0 %v508, 20
        %v1194 = vpop.permute.xlu0 %1193
        %1195 = vrot.lane.b32.xlu0 %v509, 20
        %v1196 = vpop.permute.xlu0 %1195
        %1197 = vrot.lane.b32.xlu0 %v510, 20
        %v1198 = vpop.permute.xlu0 %1197
        %1199 = vrot.lane.b32.xlu0 %v511, 20
        %v1200 = vpop.permute.xlu0 %1199
        %1201 = vrot.lane.b32.xlu0 %v512, 20
        %v1202 = vpop.permute.xlu0 %1201
        %1203 = vrot.lane.b32.xlu0 %v513, 20
        %v1204 = vpop.permute.xlu0 %1203
        %1205 = vrot.lane.b32.xlu0 %v514, 20
        %v1206 = vpop.permute.xlu0 %1205
        %1207 = vrot.lane.b32.xlu0 %v515, 20
        %v1208 = vpop.permute.xlu0 %1207
        %1209 = vrot.lane.b32.xlu0 %v516, 20
        %v1210 = vpop.permute.xlu0 %1209
        %1211 = vrot.lane.b32.xlu0 %v517, 20
        %v1212 = vpop.permute.xlu0 %1211
        %1213 = vrot.lane.b32.xlu0 %v518, 20
        %v1214 = vpop.permute.xlu0 %1213
        %1215 = vrot.lane.b32.xlu0 %v519, 20
        %v1216 = vpop.permute.xlu0 %1215
        %1217 = vrot.lane.b32.xlu0 %v520, 20
        %v1218 = vpop.permute.xlu0 %1217
        %1219 = vrot.lane.b32.xlu0 %v521, 20
        %v1220 = vpop.permute.xlu0 %1219
        %1221 = vrot.lane.b32.xlu0 %v522, 20
        %v1222 = vpop.permute.xlu0 %1221
        %1223 = vrot.lane.b32.xlu0 %v523, 20
        %v1224 = vpop.permute.xlu0 %1223
        %1225 = vrot.lane.b32.xlu0 %v524, 20
        %v1226 = vpop.permute.xlu0 %1225
        %1227 = vrot.lane.b32.xlu0 %v525, 20
        %v1228 = vpop.permute.xlu0 %1227
        %1229 = vrot.lane.b32.xlu0 %v526, 20
        %v1230 = vpop.permute.xlu0 %1229
        %1231 = vrot.lane.b32.xlu0 %v527, 20
        %v1232 = vpop.permute.xlu0 %1231
        %1297 = vrot.lane.b32.xlu0 %v529, 24
        %v1298 = vpop.permute.xlu0 %1297
        %1299 = vrot.lane.b32.xlu0 %v530, 24
        %v1300 = vpop.permute.xlu0 %1299
        %1301 = vrot.lane.b32.xlu0 %v531, 24
        %v1302 = vpop.permute.xlu0 %1301
        %1303 = vrot.lane.b32.xlu0 %v532, 24
        %v1304 = vpop.permute.xlu0 %1303
        %1305 = vrot.lane.b32.xlu0 %v533, 24
        %v1306 = vpop.permute.xlu0 %1305
        %1307 = vrot.lane.b32.xlu0 %v534, 24
        %v1308 = vpop.permute.xlu0 %1307
        %1309 = vrot.lane.b32.xlu0 %v535, 24
        %v1310 = vpop.permute.xlu0 %1309
        %1311 = vrot.lane.b32.xlu0 %v536, 24
        %v1312 = vpop.permute.xlu0 %1311
        %1313 = vrot.lane.b32.xlu0 %v537, 24
        %v1314 = vpop.permute.xlu0 %1313
        %1315 = vrot.lane.b32.xlu0 %v538, 24
        %v1316 = vpop.permute.xlu0 %1315
        %1317 = vrot.lane.b32.xlu0 %v539, 24
        %v1318 = vpop.permute.xlu0 %1317
        %1319 = vrot.lane.b32.xlu0 %v540, 24
        %v1320 = vpop.permute.xlu0 %1319
        %1321 = vrot.lane.b32.xlu0 %v541, 24
        %v1322 = vpop.permute.xlu0 %1321
        %1323 = vrot.lane.b32.xlu0 %v542, 24
        %v1324 = vpop.permute.xlu0 %1323
        %1325 = vrot.lane.b32.xlu0 %v543, 24
        %v1326 = vpop.permute.xlu0 %1325
        %1327 = vrot.lane.b32.xlu0 %v544, 24
        %v1328 = vpop.permute.xlu0 %1327
        %1329 = vrot.lane.b32.xlu0 %v545, 24
        %v1330 = vpop.permute.xlu0 %1329
        %1331 = vrot.lane.b32.xlu0 %v546, 24
        %v1332 = vpop.permute.xlu0 %1331
        %1333 = vrot.lane.b32.xlu0 %v547, 24
        %v1334 = vpop.permute.xlu0 %1333
        %1335 = vrot.lane.b32.xlu0 %v548, 24
        %v1336 = vpop.permute.xlu0 %1335
        %1337 = vrot.lane.b32.xlu0 %v549, 24
        %v1338 = vpop.permute.xlu0 %1337
        %1339 = vrot.lane.b32.xlu0 %v550, 24
        %v1340 = vpop.permute.xlu0 %1339
        %1341 = vrot.lane.b32.xlu0 %v551, 24
        %v1342 = vpop.permute.xlu0 %1341
        %1343 = vrot.lane.b32.xlu0 %v552, 24
        %v1344 = vpop.permute.xlu0 %1343
        %1345 = vrot.lane.b32.xlu0 %v553, 24
        %v1346 = vpop.permute.xlu0 %1345
        %1347 = vrot.lane.b32.xlu0 %v554, 24
        %v1348 = vpop.permute.xlu0 %1347
        %1349 = vrot.lane.b32.xlu0 %v555, 24
        %v1350 = vpop.permute.xlu0 %1349
        %1351 = vrot.lane.b32.xlu0 %v556, 24
        %v1352 = vpop.permute.xlu0 %1351
        %1353 = vrot.lane.b32.xlu0 %v557, 24
        %v1354 = vpop.permute.xlu0 %1353
        %1355 = vrot.lane.b32.xlu0 %v558, 24
        %v1356 = vpop.permute.xlu0 %1355
        %1357 = vrot.lane.b32.xlu0 %v559, 24
        %v1358 = vpop.permute.xlu0 %1357
        %1359 = vrot.lane.b32.xlu0 %v560, 24
        %v1360 = vpop.permute.xlu0 %1359
        %1425 = vrot.lane.b32.xlu0 %v561, 28
        %v1426 = vpop.permute.xlu0 %1425
        %1427 = vrot.lane.b32.xlu0 %v562, 28
        %v1428 = vpop.permute.xlu0 %1427
        %1429 = vrot.lane.b32.xlu0 %v563, 28
        %v1430 = vpop.permute.xlu0 %1429
        %1431 = vrot.lane.b32.xlu0 %v564, 28
        %v1432 = vpop.permute.xlu0 %1431
        %1433 = vrot.lane.b32.xlu0 %v565, 28
        %v1434 = vpop.permute.xlu0 %1433
        %1435 = vrot.lane.b32.xlu0 %v566, 28
        %v1436 = vpop.permute.xlu0 %1435
        %1437 = vrot.lane.b32.xlu0 %v567, 28
        %v1438 = vpop.permute.xlu0 %1437
        %1439 = vrot.lane.b32.xlu0 %v568, 28
        %v1440 = vpop.permute.xlu0 %1439
        %1441 = vrot.lane.b32.xlu0 %v569, 28
        %v1442 = vpop.permute.xlu0 %1441
        %1443 = vrot.lane.b32.xlu0 %v570, 28
        %v1444 = vpop.permute.xlu0 %1443
        %1445 = vrot.lane.b32.xlu0 %v571, 28
        %v1446 = vpop.permute.xlu0 %1445
        %1447 = vrot.lane.b32.xlu0 %v572, 28
        %v1448 = vpop.permute.xlu0 %1447
        %1449 = vrot.lane.b32.xlu0 %v573, 28
        %v1450 = vpop.permute.xlu0 %1449
        %1451 = vrot.lane.b32.xlu0 %v574, 28
        %v1452 = vpop.permute.xlu0 %1451
        %1453 = vrot.lane.b32.xlu0 %v575, 28
        %v1454 = vpop.permute.xlu0 %1453
        %1455 = vrot.lane.b32.xlu0 %v576, 28
        %v1456 = vpop.permute.xlu0 %1455
        %1457 = vrot.lane.b32.xlu0 %v577, 28
        %v1458 = vpop.permute.xlu0 %1457
        %1459 = vrot.lane.b32.xlu0 %v578, 28
        %v1460 = vpop.permute.xlu0 %1459
        %1461 = vrot.lane.b32.xlu0 %v579, 28
        %v1462 = vpop.permute.xlu0 %1461
        %1463 = vrot.lane.b32.xlu0 %v580, 28
        %v1464 = vpop.permute.xlu0 %1463
        %1465 = vrot.lane.b32.xlu0 %v581, 28
        %v1466 = vpop.permute.xlu0 %1465
        %1467 = vrot.lane.b32.xlu0 %v582, 28
        %v1468 = vpop.permute.xlu0 %1467
        %1469 = vrot.lane.b32.xlu0 %v583, 28
        %v1470 = vpop.permute.xlu0 %1469
        %1471 = vrot.lane.b32.xlu0 %v584, 28
        %v1472 = vpop.permute.xlu0 %1471
        %1473 = vrot.lane.b32.xlu0 %v585, 28
        %v1474 = vpop.permute.xlu0 %1473
        %1475 = vrot.lane.b32.xlu0 %v586, 28
        %v1476 = vpop.permute.xlu0 %1475
        %1477 = vrot.lane.b32.xlu0 %v587, 28
        %v1478 = vpop.permute.xlu0 %1477
        %1479 = vrot.lane.b32.xlu0 %v588, 28
        %v1480 = vpop.permute.xlu0 %1479
        %1481 = vrot.lane.b32.xlu0 %v589, 28
        %v1482 = vpop.permute.xlu0 %1481
        %1483 = vrot.lane.b32.xlu0 %v590, 28
        %v1484 = vpop.permute.xlu0 %1483
        %1485 = vrot.lane.b32.xlu0 %v591, 28
        %v1486 = vpop.permute.xlu0 %1485
        %1487 = vrot.lane.b32.xlu0 %v592, 28
        %v1488 = vpop.permute.xlu0 %1487
        %1553 = vrot.lane.b32.xlu0 %v593, 32
        %v1554 = vpop.permute.xlu0 %1553
        %1555 = vrot.lane.b32.xlu0 %v594, 32
        %v1556 = vpop.permute.xlu0 %1555
        %1557 = vrot.lane.b32.xlu0 %v595, 32
        %v1558 = vpop.permute.xlu0 %1557
        %1559 = vrot.lane.b32.xlu0 %v596, 32
        %v1560 = vpop.permute.xlu0 %1559
        %1561 = vrot.lane.b32.xlu0 %v597, 32
        %v1562 = vpop.permute.xlu0 %1561
        %1563 = vrot.lane.b32.xlu0 %v598, 32
        %v1564 = vpop.permute.xlu0 %1563
        %1565 = vrot.lane.b32.xlu0 %v599, 32
        %v1566 = vpop.permute.xlu0 %1565
        %1567 = vrot.lane.b32.xlu0 %v600, 32
        %v1568 = vpop.permute.xlu0 %1567
        %1569 = vrot.lane.b32.xlu0 %v601, 32
        %v1570 = vpop.permute.xlu0 %1569
        %1571 = vrot.lane.b32.xlu0 %v602, 32
        %v1572 = vpop.permute.xlu0 %1571
        %1573 = vrot.lane.b32.xlu0 %v603, 32
        %v1574 = vpop.permute.xlu0 %1573
        %1575 = vrot.lane.b32.xlu0 %v604, 32
        %v1576 = vpop.permute.xlu0 %1575
        %1577 = vrot.lane.b32.xlu0 %v605, 32
        %v1578 = vpop.permute.xlu0 %1577
        %1579 = vrot.lane.b32.xlu0 %v606, 32
        %v1580 = vpop.permute.xlu0 %1579
        %1581 = vrot.lane.b32.xlu0 %v607, 32
        %v1582 = vpop.permute.xlu0 %1581
        %1583 = vrot.lane.b32.xlu0 %v608, 32
        %v1584 = vpop.permute.xlu0 %1583
        %1585 = vrot.lane.b32.xlu0 %v609, 32
        %v1586 = vpop.permute.xlu0 %1585
        %1587 = vrot.lane.b32.xlu0 %v610, 32
        %v1588 = vpop.permute.xlu0 %1587
        %1589 = vrot.lane.b32.xlu0 %v611, 32
        %v1590 = vpop.permute.xlu0 %1589
        %1591 = vrot.lane.b32.xlu0 %v612, 32
        %v1592 = vpop.permute.xlu0 %1591
        %1593 = vrot.lane.b32.xlu0 %v613, 32
        %v1594 = vpop.permute.xlu0 %1593
        %1595 = vrot.lane.b32.xlu0 %v614, 32
        %v1596 = vpop.permute.xlu0 %1595
        %1597 = vrot.lane.b32.xlu0 %v615, 32
        %v1598 = vpop.permute.xlu0 %1597
        %1599 = vrot.lane.b32.xlu0 %v616, 32
        %v1600 = vpop.permute.xlu0 %1599
        %1601 = vrot.lane.b32.xlu0 %v617, 32
        %v1602 = vpop.permute.xlu0 %1601
        %1603 = vrot.lane.b32.xlu0 %v618, 32
        %v1604 = vpop.permute.xlu0 %1603
        %1605 = vrot.lane.b32.xlu0 %v619, 32
        %v1606 = vpop.permute.xlu0 %1605
        %1607 = vrot.lane.b32.xlu0 %v620, 32
        %v1608 = vpop.permute.xlu0 %1607
        %1609 = vrot.lane.b32.xlu0 %v621, 32
        %v1610 = vpop.permute.xlu0 %1609
        %1611 = vrot.lane.b32.xlu0 %v622, 32
        %v1612 = vpop.permute.xlu0 %1611
        %1613 = vrot.lane.b32.xlu0 %v623, 32
        %v1614 = vpop.permute.xlu0 %1613
        %1615 = vrot.lane.b32.xlu0 %v624, 32
        %v1616 = vpop.permute.xlu0 %1615
        %v1649 = vsel %vm261, %v336, %v658
        %v1650 = vsel %vm261, %v337, %v660
        %v1651 = vsel %vm261, %v338, %v662
        %v1652 = vsel %vm261, %v339, %v664
        %v1653 = vsel %vm261, %v340, %v666
        %v1654 = vsel %vm261, %v341, %v668
        %v1655 = vsel %vm261, %v342, %v670
        %v1656 = vsel %vm261, %v343, %v672
        %v1657 = vsel %vm261, %v344, %v674
        %v1658 = vsel %vm261, %v345, %v676
        %v1659 = vsel %vm261, %v346, %v678
        %v1660 = vsel %vm261, %v347, %v680
        %v1661 = vsel %vm261, %v348, %v682
        %v1662 = vsel %vm261, %v349, %v684
        %v1663 = vsel %vm261, %v350, %v686
        %v1664 = vsel %vm261, %v351, %v688
        %v1665 = vsel %vm261, %v352, %v690
        %v1666 = vsel %vm261, %v353, %v692
        %v1667 = vsel %vm261, %v354, %v694
        %v1668 = vsel %vm261, %v355, %v696
        %v1669 = vsel %vm261, %v356, %v698
        %v1670 = vsel %vm261, %v357, %v700
        %v1671 = vsel %vm261, %v358, %v702
        %v1672 = vsel %vm261, %v359, %v704
        %v1673 = vsel %vm261, %v360, %v706
        %v1674 = vsel %vm261, %v361, %v708
        %v1675 = vsel %vm261, %v362, %v710
        %v1676 = vsel %vm261, %v363, %v712
        %v1677 = vsel %vm261, %v364, %v714
        %v1678 = vsel %vm261, %v365, %v716
        %v1679 = vsel %vm261, %v366, %v718
        %v1680 = vsel %vm261, %v367, %v720
        %vm1681 = vcmask 64512
        %v1682 = vsel %vm1681, %v1649, %v786
        %v1683 = vsel %vm1681, %v1650, %v788
        %v1684 = vsel %vm1681, %v1651, %v790
        %v1685 = vsel %vm1681, %v1652, %v792
        %v1686 = vsel %vm1681, %v1653, %v794
        %v1687 = vsel %vm1681, %v1654, %v796
        %v1688 = vsel %vm1681, %v1655, %v798
        %v1689 = vsel %vm1681, %v1656, %v800
        %v1690 = vsel %vm1681, %v1657, %v802
        %v1691 = vsel %vm1681, %v1658, %v804
        %v1692 = vsel %vm1681, %v1659, %v806
        %v1693 = vsel %vm1681, %v1660, %v808
        %v1694 = vsel %vm1681, %v1661, %v810
        %v1695 = vsel %vm1681, %v1662, %v812
        %v1696 = vsel %vm1681, %v1663, %v814
        %v1697 = vsel %vm1681, %v1664, %v816
        %v1698 = vsel %vm1681, %v1665, %v818
        %v1699 = vsel %vm1681, %v1666, %v820
        %v1700 = vsel %vm1681, %v1667, %v822
        %v1701 = vsel %vm1681, %v1668, %v824
        %v1702 = vsel %vm1681, %v1669, %v826
        %v1703 = vsel %vm1681, %v1670, %v828
        %v1704 = vsel %vm1681, %v1671, %v830
        %v1705 = vsel %vm1681, %v1672, %v832
        %v1706 = vsel %vm1681, %v1673, %v834
        %v1707 = vsel %vm1681, %v1674, %v836
        %v1708 = vsel %vm1681, %v1675, %v838
        %v1709 = vsel %vm1681, %v1676, %v840
        %v1710 = vsel %vm1681, %v1677, %v842
        %v1711 = vsel %vm1681, %v1678, %v844
        %v1712 = vsel %vm1681, %v1679, %v846
        %v1713 = vsel %vm1681, %v1680, %v848
        %vm1714 = vcmask 97280
        %v1715 = vsel %vm1714, %v1682, %v914
        %v1716 = vsel %vm1714, %v1683, %v916
        %v1717 = vsel %vm1714, %v1684, %v918
        %v1718 = vsel %vm1714, %v1685, %v920
        %v1719 = vsel %vm1714, %v1686, %v922
        %v1720 = vsel %vm1714, %v1687, %v924
        %v1721 = vsel %vm1714, %v1688, %v926
        %v1722 = vsel %vm1714, %v1689, %v928
        %v1723 = vsel %vm1714, %v1690, %v930
        %v1724 = vsel %vm1714, %v1691, %v932
        %v1725 = vsel %vm1714, %v1692, %v934
        %v1726 = vsel %vm1714, %v1693, %v936
        %v1727 = vsel %vm1714, %v1694, %v938
        %v1728 = vsel %vm1714, %v1695, %v940
        %v1729 = vsel %vm1714, %v1696, %v942
        %v1730 = vsel %vm1714, %v1697, %v944
        %v1731 = vsel %vm1714, %v1698, %v946
        %v1732 = vsel %vm1714, %v1699, %v948
        %v1733 = vsel %vm1714, %v1700, %v950
        %v1734 = vsel %vm1714, %v1701, %v952
        %v1735 = vsel %vm1714, %v1702, %v954
        %v1736 = vsel %vm1714, %v1703, %v956
        %v1737 = vsel %vm1714, %v1704, %v958
        %v1738 = vsel %vm1714, %v1705, %v960
        %v1739 = vsel %vm1714, %v1706, %v962
        %v1740 = vsel %vm1714, %v1707, %v964
        %v1741 = vsel %vm1714, %v1708, %v966
        %v1742 = vsel %vm1714, %v1709, %v968
        %v1743 = vsel %vm1714, %v1710, %v970
        %v1744 = vsel %vm1714, %v1711, %v972
        %v1745 = vsel %vm1714, %v1712, %v974
        %v1746 = vsel %vm1714, %v1713, %v976
        %vm1747 = vcmask 130048
        %v1748 = vsel %vm1747, %v1715, %v1042
        %v1749 = vsel %vm1747, %v1716, %v1044
        %v1750 = vsel %vm1747, %v1717, %v1046
        %v1751 = vsel %vm1747, %v1718, %v1048
        %v1752 = vsel %vm1747, %v1719, %v1050
        %v1753 = vsel %vm1747, %v1720, %v1052
        %v1754 = vsel %vm1747, %v1721, %v1054
        %v1755 = vsel %vm1747, %v1722, %v1056
        %v1756 = vsel %vm1747, %v1723, %v1058
        %v1757 = vsel %vm1747, %v1724, %v1060
        %v1758 = vsel %vm1747, %v1725, %v1062
        %v1759 = vsel %vm1747, %v1726, %v1064
        %v1760 = vsel %vm1747, %v1727, %v1066
        %v1761 = vsel %vm1747, %v1728, %v1068
        %v1762 = vsel %vm1747, %v1729, %v1070
        %v1763 = vsel %vm1747, %v1730, %v1072
        %v1764 = vsel %vm1747, %v1731, %v1074
        %v1765 = vsel %vm1747, %v1732, %v1076
        %v1766 = vsel %vm1747, %v1733, %v1078
        %v1767 = vsel %vm1747, %v1734, %v1080
        %v1768 = vsel %vm1747, %v1735, %v1082
        %v1769 = vsel %vm1747, %v1736, %v1084
        %v1770 = vsel %vm1747, %v1737, %v1086
        %v1771 = vsel %vm1747, %v1738, %v1088
        %v1772 = vsel %vm1747, %v1739, %v1090
        %v1773 = vsel %vm1747, %v1740, %v1092
        %v1774 = vsel %vm1747, %v1741, %v1094
        %v1775 = vsel %vm1747, %v1742, %v1096
        %v1776 = vsel %vm1747, %v1743, %v1098
        %v1777 = vsel %vm1747, %v1744, %v1100
        %v1778 = vsel %vm1747, %v1745, %v1102
        %v1779 = vsel %vm1747, %v1746, %v1104
        %vm1780 = vcmask 162816
        %v1781 = vsel %vm1780, %v1748, %v1170
        %v1782 = vsel %vm1780, %v1749, %v1172
        %v1783 = vsel %vm1780, %v1750, %v1174
        %v1784 = vsel %vm1780, %v1751, %v1176
        %v1785 = vsel %vm1780, %v1752, %v1178
        %v1786 = vsel %vm1780, %v1753, %v1180
        %v1787 = vsel %vm1780, %v1754, %v1182
        %v1788 = vsel %vm1780, %v1755, %v1184
        %v1789 = vsel %vm1780, %v1756, %v1186
        %v1790 = vsel %vm1780, %v1757, %v1188
        %v1791 = vsel %vm1780, %v1758, %v1190
        %v1792 = vsel %vm1780, %v1759, %v1192
        %v1793 = vsel %vm1780, %v1760, %v1194
        %v1794 = vsel %vm1780, %v1761, %v1196
        %v1795 = vsel %vm1780, %v1762, %v1198
        %v1796 = vsel %vm1780, %v1763, %v1200
        %v1797 = vsel %vm1780, %v1764, %v1202
        %v1798 = vsel %vm1780, %v1765, %v1204
        %v1799 = vsel %vm1780, %v1766, %v1206
        %v1800 = vsel %vm1780, %v1767, %v1208
        %v1801 = vsel %vm1780, %v1768, %v1210
        %v1802 = vsel %vm1780, %v1769, %v1212
        %v1803 = vsel %vm1780, %v1770, %v1214
        %v1804 = vsel %vm1780, %v1771, %v1216
        %v1805 = vsel %vm1780, %v1772, %v1218
        %v1806 = vsel %vm1780, %v1773, %v1220
        %v1807 = vsel %vm1780, %v1774, %v1222
        %v1808 = vsel %vm1780, %v1775, %v1224
        %v1809 = vsel %vm1780, %v1776, %v1226
        %v1810 = vsel %vm1780, %v1777, %v1228
        %v1811 = vsel %vm1780, %v1778, %v1230
        %v1812 = vsel %vm1780, %v1779, %v1232
        %vm1813 = vcmask 195584
        %v1814 = vsel %vm1813, %v1781, %v1298
        %v1815 = vsel %vm1813, %v1782, %v1300
        %v1816 = vsel %vm1813, %v1783, %v1302
        %v1817 = vsel %vm1813, %v1784, %v1304
        %v1818 = vsel %vm1813, %v1785, %v1306
        %v1819 = vsel %vm1813, %v1786, %v1308
        %v1820 = vsel %vm1813, %v1787, %v1310
        %v1821 = vsel %vm1813, %v1788, %v1312
        %v1822 = vsel %vm1813, %v1789, %v1314
        %v1823 = vsel %vm1813, %v1790, %v1316
        %v1824 = vsel %vm1813, %v1791, %v1318
        %v1825 = vsel %vm1813, %v1792, %v1320
        %v1826 = vsel %vm1813, %v1793, %v1322
        %v1827 = vsel %vm1813, %v1794, %v1324
        %v1828 = vsel %vm1813, %v1795, %v1326
        %v1829 = vsel %vm1813, %v1796, %v1328
        %v1830 = vsel %vm1813, %v1797, %v1330
        %v1831 = vsel %vm1813, %v1798, %v1332
        %v1832 = vsel %vm1813, %v1799, %v1334
        %v1833 = vsel %vm1813, %v1800, %v1336
        %v1834 = vsel %vm1813, %v1801, %v1338
        %v1835 = vsel %vm1813, %v1802, %v1340
        %v1836 = vsel %vm1813, %v1803, %v1342
        %v1837 = vsel %vm1813, %v1804, %v1344
        %v1838 = vsel %vm1813, %v1805, %v1346
        %v1839 = vsel %vm1813, %v1806, %v1348
        %v1840 = vsel %vm1813, %v1807, %v1350
        %v1841 = vsel %vm1813, %v1808, %v1352
        %v1842 = vsel %vm1813, %v1809, %v1354
        %v1843 = vsel %vm1813, %v1810, %v1356
        %v1844 = vsel %vm1813, %v1811, %v1358
        %v1845 = vsel %vm1813, %v1812, %v1360
        %vm1846 = vcmask 228352
        %v1847 = vsel %vm1846, %v1814, %v1426
        %v1848 = vsel %vm1846, %v1815, %v1428
        %v1849 = vsel %vm1846, %v1816, %v1430
        %v1850 = vsel %vm1846, %v1817, %v1432
        %v1851 = vsel %vm1846, %v1818, %v1434
        %v1852 = vsel %vm1846, %v1819, %v1436
        %v1853 = vsel %vm1846, %v1820, %v1438
        %v1854 = vsel %vm1846, %v1821, %v1440
        %v1855 = vsel %vm1846, %v1822, %v1442
        %v1856 = vsel %vm1846, %v1823, %v1444
        %v1857 = vsel %vm1846, %v1824, %v1446
        %v1858 = vsel %vm1846, %v1825, %v1448
        %v1859 = vsel %vm1846, %v1826, %v1450
        %v1860 = vsel %vm1846, %v1827, %v1452
        %v1861 = vsel %vm1846, %v1828, %v1454
        %v1862 = vsel %vm1846, %v1829, %v1456
        %v1863 = vsel %vm1846, %v1830, %v1458
        %v1864 = vsel %vm1846, %v1831, %v1460
        %v1865 = vsel %vm1846, %v1832, %v1462
        %v1866 = vsel %vm1846, %v1833, %v1464
        %v1867 = vsel %vm1846, %v1834, %v1466
        %v1868 = vsel %vm1846, %v1835, %v1468
        %v1869 = vsel %vm1846, %v1836, %v1470
        %v1870 = vsel %vm1846, %v1837, %v1472
        %v1871 = vsel %vm1846, %v1838, %v1474
        %v1872 = vsel %vm1846, %v1839, %v1476
        %v1873 = vsel %vm1846, %v1840, %v1478
        %v1874 = vsel %vm1846, %v1841, %v1480
        %v1875 = vsel %vm1846, %v1842, %v1482
        %v1876 = vsel %vm1846, %v1843, %v1484
        %v1877 = vsel %vm1846, %v1844, %v1486
        %v1878 = vsel %vm1846, %v1845, %v1488
        %vm1879 = vcmask 261120
        %v1880 = vsel %vm1879, %v1847, %v1554
        %v1881 = vsel %vm1879, %v1848, %v1556
        %v1882 = vsel %vm1879, %v1849, %v1558
        %v1883 = vsel %vm1879, %v1850, %v1560
        %v1884 = vsel %vm1879, %v1851, %v1562
        %v1885 = vsel %vm1879, %v1852, %v1564
        %v1886 = vsel %vm1879, %v1853, %v1566
        %v1887 = vsel %vm1879, %v1854, %v1568
        %v1888 = vsel %vm1879, %v1855, %v1570
        %v1889 = vsel %vm1879, %v1856, %v1572
        %v1890 = vsel %vm1879, %v1857, %v1574
        %v1891 = vsel %vm1879, %v1858, %v1576
        %v1892 = vsel %vm1879, %v1859, %v1578
        %v1893 = vsel %vm1879, %v1860, %v1580
        %v1894 = vsel %vm1879, %v1861, %v1582
        %v1895 = vsel %vm1879, %v1862, %v1584
        %v1896 = vsel %vm1879, %v1863, %v1586
        %v1897 = vsel %vm1879, %v1864, %v1588
        %v1898 = vsel %vm1879, %v1865, %v1590
        %v1899 = vsel %vm1879, %v1866, %v1592
        %v1900 = vsel %vm1879, %v1867, %v1594
        %v1901 = vsel %vm1879, %v1868, %v1596
        %v1902 = vsel %vm1879, %v1869, %v1598
        %v1903 = vsel %vm1879, %v1870, %v1600
        %v1904 = vsel %vm1879, %v1871, %v1602
        %v1905 = vsel %vm1879, %v1872, %v1604
        %v1906 = vsel %vm1879, %v1873, %v1606
        %v1907 = vsel %vm1879, %v1874, %v1608
        %v1908 = vsel %vm1879, %v1875, %v1610
        %v1909 = vsel %vm1879, %v1876, %v1612
        %v1910 = vsel %vm1879, %v1877, %v1614
        %v1911 = vsel %vm1879, %v1878, %v1616
        %v1912 = vpack.c.bf16 %v1881, %v1880
        %v1913 = vpack.c.bf16 %v1883, %v1882
        %v1914 = vpack.c.bf16 %v1885, %v1884
        %v1915 = vpack.c.bf16 %v1887, %v1886
        %v1916 = vpack.c.bf16 %v1889, %v1888
        %v1917 = vpack.c.bf16 %v1891, %v1890
        %v1918 = vpack.c.bf16 %v1893, %v1892
        %v1919 = vpack.c.bf16 %v1895, %v1894
        %v1920 = vpack.c.bf16 %v1897, %v1896
        %v1921 = vpack.c.bf16 %v1899, %v1898
        %v1922 = vpack.c.bf16 %v1901, %v1900
        %v1923 = vpack.c.bf16 %v1903, %v1902
        %v1924 = vpack.c.bf16 %v1905, %v1904
        %v1925 = vpack.c.bf16 %v1907, %v1906
        %v1926 = vpack.c.bf16 %v1909, %v1908
        %v1927 = vpack.c.bf16 %v1911, %v1910
        %v1928 = vld [vmem:[%s1] sm:$0xf]
        %v1929 = vld [vmem:[%s1 + $0x4] sm:$0xf]
        %v1930 = vld [vmem:[%s1 + $0x8] sm:$0xf]
        %v1931 = vld [vmem:[%s1 + $0xc] sm:$0xf]
        %v1932 = vld [vmem:[%s1 + $0x10] sm:$0x3]
        %v1938 = vunpack.c.l.b16 %v1928
        %v1939 = vunpack.c.l.b16 %v1929
        %v1940 = vunpack.c.l.b16 %v1930
        %v1941 = vunpack.c.l.b16 %v1931
        %v1942 = vunpack.c.l.b16 %v1932
        %v1943 = vpack.c.b16 %v1939, %v1938
        %v1944 = vpack.c.b16 %v1941, %v1940
        %v1945 = vpack.c.b16 %v1942, %v1942
        %vm1948 = vcmask 293888
        %v1950 = vsel %vm1948, %v1912, 0
        %v1953 = vsel %vm1948, %v1913, 0
        %v1956 = vsel %vm1948, %v1914, 0
        %v1959 = vsel %vm1948, %v1915, 0
        %v1962 = vsel %vm1948, %v1916, 0
        %v1965 = vsel %vm1948, %v1917, 0
        %v1968 = vsel %vm1948, %v1918, 0
        %v1971 = vsel %vm1948, %v1919, 0
        %v1974 = vsel %vm1948, %v1920, 0
        %v1977 = vsel %vm1948, %v1921, 0
        %v1980 = vsel %vm1948, %v1922, 0
        %v1983 = vsel %vm1948, %v1923, 0
        %v1986 = vsel %vm1948, %v1924, 0
        %v1989 = vsel %vm1948, %v1925, 0
        %v1992 = vsel %vm1948, %v1926, 0
        %v1995 = vsel %vm1948, %v1927, 0
        %vm1997 = vcmask 1041408
        %v1999 = vsel %vm1997, %v1945, 0
        %2001 = vmatprep.subr.bf16.mxu0 0
        %2002 = vmatpush1.bf16.msra.mxu0 0
        %2003 = vmatprep.subr.bf16.mxu0 0
        %2004 = vmatpush1.bf16.msra.mxu0 0
        %2005 = vmatprep.subr.bf16.mxu0 0
        %2006 = vmatpush1.bf16.msra.mxu0 0
        %2007 = vmatprep.subr.bf16.mxu0 0
        %2008 = vmatpush1.bf16.msra.mxu0 0
        %2009 = vmatprep.subr.bf16.mxu0 0
        %2010 = vmatpush1.bf16.msra.mxu0 0
        %2011 = vmatprep.subr.bf16.mxu0 0
        %2012 = vmatpush1.bf16.msra.mxu0 %v1999
        %2013 = vmatprep.subr.bf16.mxu0 0
        %2014 = vmatpush1.bf16.msra.mxu0 %v1944
        %2015 = vmatprep.subr.bf16.mxu0 0
        %2016 = vmatpush1.bf16.msra.mxu0 %v1943
        %2017 = vmatprep.subr.bf16.mxu0 0
        %2018 = vmatpush2.bf16.msra.mxu0 0
        %2019 = vmatprep.subr.bf16.mxu0 0
        %2020 = vmatpush2.bf16.msra.mxu0 0
        %2021 = vmatprep.subr.bf16.mxu0 0
        %2022 = vmatpush2.bf16.msra.mxu0 0
        %2023 = vmatprep.subr.bf16.mxu0 0
        %2024 = vmatpush2.bf16.msra.mxu0 0
        %2025 = vmatprep.subr.bf16.mxu0 0
        %2026 = vmatpush2.bf16.msra.mxu0 0
        %2027 = vmatprep.subr.bf16.mxu0 0
        %2028 = vmatpush2.bf16.msra.mxu0 0
        %2029 = vmatprep.subr.bf16.mxu0 0
        %2030 = vmatpush2.bf16.msra.mxu0 0
        %2031 = vmatprep.subr.bf16.mxu0 0
        %2032 = vmatpush2.bf16.msra.mxu0 0
        %2033 = vmatprep.mubr.bf16.mxu0 0
        %2034 = vmatmul.mubr.bf16.gmra.mxu0 %v1950
        %v2035 = vpop.f32.mrf.mxu0
        %v2036 = vadd.f32 0.0, %v2035
        %v2037 = vpop.f32.mrf.mxu0
        %v2038 = vpop.f32.mrf.mxu0
        %v2039 = vadd.f32 0.0, %v2038
        %v2040 = vpop.f32.mrf.mxu0
        %2041 = vmatprep.mubr.bf16.mxu0 0
        %2042 = vmatmul.mubr.bf16.gmra.mxu0 %v1953
        %v2043 = vpop.f32.mrf.mxu0
        %v2044 = vadd.f32 0.0, %v2043
        %v2045 = vpop.f32.mrf.mxu0
        %v2046 = vpop.f32.mrf.mxu0
        %v2047 = vadd.f32 0.0, %v2046
        %v2048 = vpop.f32.mrf.mxu0
        %2049 = vmatprep.mubr.bf16.mxu0 0
        %2050 = vmatmul.mubr.bf16.gmra.mxu0 %v1956
        %v2051 = vpop.f32.mrf.mxu0
        %v2052 = vadd.f32 0.0, %v2051
        %v2053 = vpop.f32.mrf.mxu0
        %v2054 = vpop.f32.mrf.mxu0
        %v2055 = vadd.f32 0.0, %v2054
        %v2056 = vpop.f32.mrf.mxu0
        %2057 = vmatprep.mubr.bf16.mxu0 0
        %2058 = vmatmul.mubr.bf16.gmra.mxu0 %v1959
        %v2059 = vpop.f32.mrf.mxu0
        %v2060 = vadd.f32 0.0, %v2059
        %v2061 = vpop.f32.mrf.mxu0
        %v2062 = vpop.f32.mrf.mxu0
        %v2063 = vadd.f32 0.0, %v2062
        %v2064 = vpop.f32.mrf.mxu0
        %2065 = vmatprep.mubr.bf16.mxu0 0
        %2066 = vmatmul.mubr.bf16.gmra.mxu0 %v1962
        %v2067 = vpop.f32.mrf.mxu0
        %v2068 = vadd.f32 0.0, %v2067
        %v2069 = vpop.f32.mrf.mxu0
        %v2070 = vpop.f32.mrf.mxu0
        %v2071 = vadd.f32 0.0, %v2070
        %v2072 = vpop.f32.mrf.mxu0
        %2073 = vmatprep.mubr.bf16.mxu0 0
        %2074 = vmatmul.mubr.bf16.gmra.mxu0 %v1965
        %v2075 = vpop.f32.mrf.mxu0
        %v2076 = vadd.f32 0.0, %v2075
        %v2077 = vpop.f32.mrf.mxu0
        %v2078 = vpop.f32.mrf.mxu0
        %v2079 = vadd.f32 0.0, %v2078
        %v2080 = vpop.f32.mrf.mxu0
        %2081 = vmatprep.mubr.bf16.mxu0 0
        %2082 = vmatmul.mubr.bf16.gmra.mxu0 %v1968
        %v2083 = vpop.f32.mrf.mxu0
        %v2084 = vadd.f32 0.0, %v2083
        %v2085 = vpop.f32.mrf.mxu0
        %v2086 = vpop.f32.mrf.mxu0
        %v2087 = vadd.f32 0.0, %v2086
        %v2088 = vpop.f32.mrf.mxu0
        %2089 = vmatprep.mubr.bf16.mxu0 0
        %2090 = vmatmul.mubr.bf16.gmra.mxu0 %v1971
        %v2091 = vpop.f32.mrf.mxu0
        %v2092 = vadd.f32 0.0, %v2091
        %v2093 = vpop.f32.mrf.mxu0
        %v2094 = vpop.f32.mrf.mxu0
        %v2095 = vadd.f32 0.0, %v2094
        %v2096 = vpop.f32.mrf.mxu0
        %2097 = vmatprep.mubr.bf16.mxu0 0
        %2098 = vmatmul.mubr.bf16.gmra.mxu0 %v1974
        %v2099 = vpop.f32.mrf.mxu0
        %v2100 = vadd.f32 0.0, %v2099
        %v2101 = vpop.f32.mrf.mxu0
        %v2102 = vpop.f32.mrf.mxu0
        %v2103 = vadd.f32 0.0, %v2102
        %v2104 = vpop.f32.mrf.mxu0
        %2105 = vmatprep.mubr.bf16.mxu0 0
        %2106 = vmatmul.mubr.bf16.gmra.mxu0 %v1977
        %v2107 = vpop.f32.mrf.mxu0
        %v2108 = vadd.f32 0.0, %v2107
        %v2109 = vpop.f32.mrf.mxu0
        %v2110 = vpop.f32.mrf.mxu0
        %v2111 = vadd.f32 0.0, %v2110
        %v2112 = vpop.f32.mrf.mxu0
        %2113 = vmatprep.mubr.bf16.mxu0 0
        %2114 = vmatmul.mubr.bf16.gmra.mxu0 %v1980
        %v2115 = vpop.f32.mrf.mxu0
        %v2116 = vadd.f32 0.0, %v2115
        %v2117 = vpop.f32.mrf.mxu0
        %v2118 = vpop.f32.mrf.mxu0
        %v2119 = vadd.f32 0.0, %v2118
        %v2120 = vpop.f32.mrf.mxu0
        %2121 = vmatprep.mubr.bf16.mxu0 0
        %2122 = vmatmul.mubr.bf16.gmra.mxu0 %v1983
        %v2123 = vpop.f32.mrf.mxu0
        %v2124 = vadd.f32 0.0, %v2123
        %v2125 = vpop.f32.mrf.mxu0
        %v2126 = vpop.f32.mrf.mxu0
        %v2127 = vadd.f32 0.0, %v2126
        %v2128 = vpop.f32.mrf.mxu0
        %2129 = vmatprep.mubr.bf16.mxu0 0
        %2130 = vmatmul.mubr.bf16.gmra.mxu0 %v1986
        %v2131 = vpop.f32.mrf.mxu0
        %v2132 = vadd.f32 0.0, %v2131
        %v2133 = vpop.f32.mrf.mxu0
        %v2134 = vpop.f32.mrf.mxu0
        %v2135 = vadd.f32 0.0, %v2134
        %v2136 = vpop.f32.mrf.mxu0
        %2137 = vmatprep.mubr.bf16.mxu0 0
        %2138 = vmatmul.mubr.bf16.gmra.mxu0 %v1989
        %v2139 = vpop.f32.mrf.mxu0
        %v2140 = vadd.f32 0.0, %v2139
        %v2141 = vpop.f32.mrf.mxu0
        %v2142 = vpop.f32.mrf.mxu0
        %v2143 = vadd.f32 0.0, %v2142
        %v2144 = vpop.f32.mrf.mxu0
        %2145 = vmatprep.mubr.bf16.mxu0 0
        %2146 = vmatmul.mubr.bf16.gmra.mxu0 %v1992
        %v2147 = vpop.f32.mrf.mxu0
        %v2148 = vadd.f32 0.0, %v2147
        %v2149 = vpop.f32.mrf.mxu0
        %v2150 = vpop.f32.mrf.mxu0
        %v2151 = vadd.f32 0.0, %v2150
        %v2152 = vpop.f32.mrf.mxu0
        %2153 = vmatprep.mubr.bf16.mxu0 0
        %2154 = vmatmul.mubr.bf16.gmra.mxu0 %v1995
        %v2155 = vpop.f32.mrf.mxu0
        %v2156 = vadd.f32 0.0, %v2155
        %v2157 = vpop.f32.mrf.mxu0
        %v2158 = vpop.f32.mrf.mxu0
        %v2159 = vadd.f32 0.0, %v2158
        %v2160 = vpop.f32.mrf.mxu0
        %2161 = vdwg.mxu0
        %v2162 = vsel %vm1681, %v2036, 0.0
        %v2163 = vsel %vm1681, %v2039, 0.0
        %v2164 = vadd.f32 %v2162, %v2163
        %v2165 = vsel %vm1681, %v2044, 0.0
        %v2166 = vadd.f32 %v2164, %v2165
        %v2167 = vsel %vm1681, %v2047, 0.0
        %v2168 = vadd.f32 %v2166, %v2167
        %v2169 = vsel %vm1681, %v2052, 0.0
        %v2170 = vadd.f32 %v2168, %v2169
        %v2171 = vsel %vm1681, %v2055, 0.0
        %v2172 = vadd.f32 %v2170, %v2171
        %v2173 = vsel %vm1681, %v2060, 0.0
        %v2174 = vadd.f32 %v2172, %v2173
        %v2175 = vsel %vm1681, %v2063, 0.0
        %v2176 = vadd.f32 %v2174, %v2175
        %v2177 = vsel %vm1681, %v2068, 0.0
        %v2178 = vadd.f32 %v2176, %v2177
        %v2179 = vsel %vm1681, %v2071, 0.0
        %v2180 = vadd.f32 %v2178, %v2179
        %v2181 = vsel %vm1681, %v2076, 0.0
        %v2182 = vadd.f32 %v2180, %v2181
        %v2183 = vsel %vm1681, %v2079, 0.0
        %v2184 = vadd.f32 %v2182, %v2183
        %v2185 = vsel %vm1681, %v2084, 0.0
        %v2186 = vadd.f32 %v2184, %v2185
        %v2187 = vsel %vm1681, %v2087, 0.0
        %v2188 = vadd.f32 %v2186, %v2187
        %v2189 = vsel %vm1681, %v2092, 0.0
        %v2190 = vadd.f32 %v2188, %v2189
        %v2191 = vsel %vm1681, %v2095, 0.0
        %v2192 = vadd.f32 %v2190, %v2191
        %v2193 = vsel %vm1681, %v2100, 0.0
        %v2194 = vadd.f32 %v2192, %v2193
        %v2195 = vsel %vm1681, %v2103, 0.0
        %v2196 = vadd.f32 %v2194, %v2195
        %v2197 = vsel %vm1681, %v2108, 0.0
        %v2198 = vadd.f32 %v2196, %v2197
        %v2199 = vsel %vm1681, %v2111, 0.0
        %v2200 = vadd.f32 %v2198, %v2199
        %v2201 = vsel %vm1681, %v2116, 0.0
        %v2202 = vadd.f32 %v2200, %v2201
        %v2203 = vsel %vm1681, %v2119, 0.0
        %v2204 = vadd.f32 %v2202, %v2203
        %v2205 = vsel %vm1681, %v2124, 0.0
        %v2206 = vadd.f32 %v2204, %v2205
        %v2207 = vsel %vm1681, %v2127, 0.0
        %v2208 = vadd.f32 %v2206, %v2207
        %v2209 = vsel %vm1681, %v2132, 0.0
        %v2210 = vadd.f32 %v2208, %v2209
        %v2211 = vsel %vm1681, %v2135, 0.0
        %v2212 = vadd.f32 %v2210, %v2211
        %v2213 = vsel %vm1681, %v2140, 0.0
        %v2214 = vadd.f32 %v2212, %v2213
        %v2215 = vsel %vm1681, %v2143, 0.0
        %v2216 = vadd.f32 %v2214, %v2215
        %v2217 = vsel %vm1681, %v2148, 0.0
        %v2218 = vadd.f32 %v2216, %v2217
        %v2219 = vsel %vm1681, %v2151, 0.0
        %v2220 = vadd.f32 %v2218, %v2219
        %v2221 = vsel %vm1681, %v2156, 0.0
        %v2222 = vadd.f32 %v2220, %v2221
        %v2223 = vsel %vm1681, %v2159, 0.0
        %v2224 = vadd.f32 %v2222, %v2223
        %v2225 = vrot.slane %v2224, 4
        %v2226 = vadd.f32 %v2224, %v2225
        %v2227 = vrot.slane %v2226, 2
        %v2228 = vadd.f32 %v2226, %v2227
        %v2229 = vrot.slane %v2228, 1
        %v2230 = vadd.f32 %v2228, %v2229
        %v2231 = vmul.f32 %v2036, %v2036
        %v2232 = vmul.f32 %v2039, %v2039
        %v2233 = vmul.f32 %v2044, %v2044
        %v2234 = vmul.f32 %v2047, %v2047
        %v2235 = vmul.f32 %v2052, %v2052
        %v2236 = vmul.f32 %v2055, %v2055
        %v2237 = vmul.f32 %v2060, %v2060
        %v2238 = vmul.f32 %v2063, %v2063
        %v2239 = vmul.f32 %v2068, %v2068
        %v2240 = vmul.f32 %v2071, %v2071
        %v2241 = vmul.f32 %v2076, %v2076
        %v2242 = vmul.f32 %v2079, %v2079
        %v2243 = vmul.f32 %v2084, %v2084
        %v2244 = vmul.f32 %v2087, %v2087
        %v2245 = vmul.f32 %v2092, %v2092
        %v2246 = vmul.f32 %v2095, %v2095
        %v2247 = vmul.f32 %v2100, %v2100
        %v2248 = vmul.f32 %v2103, %v2103
        %v2249 = vmul.f32 %v2108, %v2108
        %v2250 = vmul.f32 %v2111, %v2111
        %v2251 = vmul.f32 %v2116, %v2116
        %v2252 = vmul.f32 %v2119, %v2119
        %v2253 = vmul.f32 %v2124, %v2124
        %v2254 = vmul.f32 %v2127, %v2127
        %v2255 = vmul.f32 %v2132, %v2132
        %v2256 = vmul.f32 %v2135, %v2135
        %v2257 = vmul.f32 %v2140, %v2140
        %v2258 = vmul.f32 %v2143, %v2143
        %v2259 = vmul.f32 %v2148, %v2148
        %v2260 = vmul.f32 %v2151, %v2151
        %v2261 = vmul.f32 %v2156, %v2156
        %v2262 = vmul.f32 %v2159, %v2159
        %v2263 = vsel %vm1681, %v2231, 0.0
        %v2264 = vsel %vm1681, %v2232, 0.0
        %v2265 = vadd.f32 %v2263, %v2264
        %v2266 = vsel %vm1681, %v2233, 0.0
        %v2267 = vadd.f32 %v2265, %v2266
        %v2268 = vsel %vm1681, %v2234, 0.0
        %v2269 = vadd.f32 %v2267, %v2268
        %v2270 = vsel %vm1681, %v2235, 0.0
        %v2271 = vadd.f32 %v2269, %v2270
        %v2272 = vsel %vm1681, %v2236, 0.0
        %v2273 = vadd.f32 %v2271, %v2272
        %v2274 = vsel %vm1681, %v2237, 0.0
        %v2275 = vadd.f32 %v2273, %v2274
        %v2276 = vsel %vm1681, %v2238, 0.0
        %v2277 = vadd.f32 %v2275, %v2276
        %v2278 = vsel %vm1681, %v2239, 0.0
        %v2279 = vadd.f32 %v2277, %v2278
        %v2280 = vsel %vm1681, %v2240, 0.0
        %v2281 = vadd.f32 %v2279, %v2280
        %v2282 = vsel %vm1681, %v2241, 0.0
        %v2283 = vadd.f32 %v2281, %v2282
        %v2284 = vsel %vm1681, %v2242, 0.0
        %v2285 = vadd.f32 %v2283, %v2284
        %v2286 = vsel %vm1681, %v2243, 0.0
        %v2287 = vadd.f32 %v2285, %v2286
        %v2288 = vsel %vm1681, %v2244, 0.0
        %v2289 = vadd.f32 %v2287, %v2288
        %v2290 = vsel %vm1681, %v2245, 0.0
        %v2291 = vadd.f32 %v2289, %v2290
        %v2292 = vsel %vm1681, %v2246, 0.0
        %v2293 = vadd.f32 %v2291, %v2292
        %v2294 = vsel %vm1681, %v2247, 0.0
        %v2295 = vadd.f32 %v2293, %v2294
        %v2296 = vsel %vm1681, %v2248, 0.0
        %v2297 = vadd.f32 %v2295, %v2296
        %v2298 = vsel %vm1681, %v2249, 0.0
        %v2299 = vadd.f32 %v2297, %v2298
        %v2300 = vsel %vm1681, %v2250, 0.0
        %v2301 = vadd.f32 %v2299, %v2300
        %v2302 = vsel %vm1681, %v2251, 0.0
        %v2303 = vadd.f32 %v2301, %v2302
        %v2304 = vsel %vm1681, %v2252, 0.0
        %v2305 = vadd.f32 %v2303, %v2304
        %v2306 = vsel %vm1681, %v2253, 0.0
        %v2307 = vadd.f32 %v2305, %v2306
        %v2308 = vsel %vm1681, %v2254, 0.0
        %v2309 = vadd.f32 %v2307, %v2308
        %v2310 = vsel %vm1681, %v2255, 0.0
        %v2311 = vadd.f32 %v2309, %v2310
        %v2312 = vsel %vm1681, %v2256, 0.0
        %v2313 = vadd.f32 %v2311, %v2312
        %v2314 = vsel %vm1681, %v2257, 0.0
        %v2315 = vadd.f32 %v2313, %v2314
        %v2316 = vsel %vm1681, %v2258, 0.0
        %v2317 = vadd.f32 %v2315, %v2316
        %v2318 = vsel %vm1681, %v2259, 0.0
        %v2319 = vadd.f32 %v2317, %v2318
        %v2320 = vsel %vm1681, %v2260, 0.0
        %v2321 = vadd.f32 %v2319, %v2320
        %v2322 = vsel %vm1681, %v2261, 0.0
        %v2323 = vadd.f32 %v2321, %v2322
        %v2324 = vsel %vm1681, %v2262, 0.0
        %v2325 = vadd.f32 %v2323, %v2324
        %v2326 = vrot.slane %v2325, 4
        %v2327 = vadd.f32 %v2325, %v2326
        %v2328 = vrot.slane %v2327, 2
        %v2329 = vadd.f32 %v2327, %v2328
        %v2330 = vrot.slane %v2329, 1
        %v2331 = vadd.f32 %v2329, %v2330
        %v2332 = vmul.f32 %v2230, 0.00390625
        %v2333 = vmul.f32 %v2331, 0.00390625
        %v2334 = vmul.f32 %v2332, %v2332
        %v2335 = vsub.f32 %v2333, %v2334
        %v2336 = vsub.f32 %v2036, %v2332
        %v2337 = vsub.f32 %v2039, %v2332
        %v2338 = vsub.f32 %v2044, %v2332
        %v2339 = vsub.f32 %v2047, %v2332
        %v2340 = vsub.f32 %v2052, %v2332
        %v2341 = vsub.f32 %v2055, %v2332
        %v2342 = vsub.f32 %v2060, %v2332
        %v2343 = vsub.f32 %v2063, %v2332
        %v2344 = vsub.f32 %v2068, %v2332
        %v2345 = vsub.f32 %v2071, %v2332
        %v2346 = vsub.f32 %v2076, %v2332
        %v2347 = vsub.f32 %v2079, %v2332
        %v2348 = vsub.f32 %v2084, %v2332
        %v2349 = vsub.f32 %v2087, %v2332
        %v2350 = vsub.f32 %v2092, %v2332
        %v2351 = vsub.f32 %v2095, %v2332
        %v2352 = vsub.f32 %v2100, %v2332
        %v2353 = vsub.f32 %v2103, %v2332
        %v2354 = vsub.f32 %v2108, %v2332
        %v2355 = vsub.f32 %v2111, %v2332
        %v2356 = vsub.f32 %v2116, %v2332
        %v2357 = vsub.f32 %v2119, %v2332
        %v2358 = vsub.f32 %v2124, %v2332
        %v2359 = vsub.f32 %v2127, %v2332
        %v2360 = vsub.f32 %v2132, %v2332
        %v2361 = vsub.f32 %v2135, %v2332
        %v2362 = vsub.f32 %v2140, %v2332
        %v2363 = vsub.f32 %v2143, %v2332
        %v2364 = vsub.f32 %v2148, %v2332
        %v2365 = vsub.f32 %v2151, %v2332
        %v2366 = vsub.f32 %v2156, %v2332
        %v2367 = vsub.f32 %v2159, %v2332
        %v2368 = vadd.f32 %v2335, 1e-05
        %v2369 = vrsqrt.pop %v2368
        %v2370 = vmul.f32 %v2336, %v2369
        %v2371 = vmul.f32 %v2337, %v2369
        %v2372 = vmul.f32 %v2338, %v2369
        %v2373 = vmul.f32 %v2339, %v2369
        %v2374 = vmul.f32 %v2340, %v2369
        %v2375 = vmul.f32 %v2341, %v2369
        %v2376 = vmul.f32 %v2342, %v2369
        %v2377 = vmul.f32 %v2343, %v2369
        %v2378 = vmul.f32 %v2344, %v2369
        %v2379 = vmul.f32 %v2345, %v2369
        %v2380 = vmul.f32 %v2346, %v2369
        %v2381 = vmul.f32 %v2347, %v2369
        %v2382 = vmul.f32 %v2348, %v2369
        %v2383 = vmul.f32 %v2349, %v2369
        %v2384 = vmul.f32 %v2350, %v2369
        %v2385 = vmul.f32 %v2351, %v2369
        %v2386 = vmul.f32 %v2352, %v2369
        %v2387 = vmul.f32 %v2353, %v2369
        %v2388 = vmul.f32 %v2354, %v2369
        %v2389 = vmul.f32 %v2355, %v2369
        %v2390 = vmul.f32 %v2356, %v2369
        %v2391 = vmul.f32 %v2357, %v2369
        %v2392 = vmul.f32 %v2358, %v2369
        %v2393 = vmul.f32 %v2359, %v2369
        %v2394 = vmul.f32 %v2360, %v2369
        %v2395 = vmul.f32 %v2361, %v2369
        %v2396 = vmul.f32 %v2362, %v2369
        %v2397 = vmul.f32 %v2363, %v2369
        %v2398 = vmul.f32 %v2364, %v2369
        %v2399 = vmul.f32 %v2365, %v2369
        %v2400 = vmul.f32 %v2366, %v2369
        %v2401 = vmul.f32 %v2367, %v2369
        %v2402 = vmax.f32 %v2370, 0.0
        %v2403 = vmax.f32 %v2371, 0.0
        %v2404 = vmax.f32 %v2372, 0.0
        %v2405 = vmax.f32 %v2373, 0.0
        %v2406 = vmax.f32 %v2374, 0.0
        %v2407 = vmax.f32 %v2375, 0.0
        %v2408 = vmax.f32 %v2376, 0.0
        %v2409 = vmax.f32 %v2377, 0.0
        %v2410 = vmax.f32 %v2378, 0.0
        %v2411 = vmax.f32 %v2379, 0.0
        %v2412 = vmax.f32 %v2380, 0.0
        %v2413 = vmax.f32 %v2381, 0.0
        %v2414 = vmax.f32 %v2382, 0.0
        %v2415 = vmax.f32 %v2383, 0.0
        %v2416 = vmax.f32 %v2384, 0.0
        %v2417 = vmax.f32 %v2385, 0.0
        %v2418 = vmax.f32 %v2386, 0.0
        %v2419 = vmax.f32 %v2387, 0.0
        %v2420 = vmax.f32 %v2388, 0.0
        %v2421 = vmax.f32 %v2389, 0.0
        %v2422 = vmax.f32 %v2390, 0.0
        %v2423 = vmax.f32 %v2391, 0.0
        %v2424 = vmax.f32 %v2392, 0.0
        %v2425 = vmax.f32 %v2393, 0.0
        %v2426 = vmax.f32 %v2394, 0.0
        %v2427 = vmax.f32 %v2395, 0.0
        %v2428 = vmax.f32 %v2396, 0.0
        %v2429 = vmax.f32 %v2397, 0.0
        %v2430 = vmax.f32 %v2398, 0.0
        %v2431 = vmax.f32 %v2399, 0.0
        %v2432 = vmax.f32 %v2400, 0.0
        %v2433 = vmax.f32 %v2401, 0.0
        %2434 = vst.msk [vmem:[#allocation3] sm:$0xff] %vm1681, 0.0
        %2435 = vst.msk [vmem:[#allocation3 + $0x8] sm:$0xff] %vm1681, 0.0
        %vm2436 = vcmask 58368
        %2437 = vst.msk [vmem:[#allocation3 + $0x10] sm:$0x3] %vm2436, 0.0
        %s2438 = scalar_lea.vmem [#allocation3], 408
        %2439 = vst.msk [vmem:[%s2438] sm:$0xff] %vm1681, 0.0
        %2440 = vst.msk [vmem:[%s2438 + $0x8] sm:$0xff] %vm1681, 0.0
        %2441 = vst.msk [vmem:[%s2438 + $0x10] sm:$0x3] %vm2436, 0.0
        %s2442 = scalar_lea.vmem [#allocation3], 24
        %vm2443 = vcmask 57344
        %2444 = vst.msk [vmem:[%s2442] sm:$0x1] %vm2443, 0.0
        %2445 = vst.msk [vmem:[%s2442 + $0x18] sm:$0x1] %vm2443, 0.0
        %2446 = vst.msk [vmem:[%s2442 + $0x30] sm:$0x1] %vm2443, 0.0
        %2447 = vst.msk [vmem:[%s2442 + $0x48] sm:$0x1] %vm2443, 0.0
        %2448 = vst.msk [vmem:[%s2442 + $0x60] sm:$0x1] %vm2443, 0.0
        %2449 = vst.msk [vmem:[%s2442 + $0x78] sm:$0x1] %vm2443, 0.0
        %2450 = vst.msk [vmem:[%s2442 + $0x90] sm:$0x1] %vm2443, 0.0
        %2451 = vst.msk [vmem:[%s2442 + $0xa8] sm:$0x1] %vm2443, 0.0
        %2452 = vst.msk [vmem:[%s2442 + $0xc0] sm:$0x1] %vm2443, 0.0
        %2453 = vst.msk [vmem:[%s2442 + $0xd8] sm:$0x1] %vm2443, 0.0
        %2454 = vst.msk [vmem:[%s2442 + $0xf0] sm:$0x1] %vm2443, 0.0
        %2455 = vst.msk [vmem:[%s2442 + $0x108] sm:$0x1] %vm2443, 0.0
        %2456 = vst.msk [vmem:[%s2442 + $0x120] sm:$0x1] %vm2443, 0.0
        %2457 = vst.msk [vmem:[%s2442 + $0x138] sm:$0x1] %vm2443, 0.0
        %2458 = vst.msk [vmem:[%s2442 + $0x150] sm:$0x1] %vm2443, 0.0
        %2459 = vst.msk [vmem:[%s2442 + $0x168] sm:$0x1] %vm2443, 0.0
        %2460 = vst.msk [vmem:[%s2442 + $0x11] sm:$0x1] %vm2443, 0.0
        %2461 = vst.msk [vmem:[%s2442 + $0x29] sm:$0x1] %vm2443, 0.0
        %2462 = vst.msk [vmem:[%s2442 + $0x41] sm:$0x1] %vm2443, 0.0
        %2463 = vst.msk [vmem:[%s2442 + $0x59] sm:$0x1] %vm2443, 0.0
        %2464 = vst.msk [vmem:[%s2442 + $0x71] sm:$0x1] %vm2443, 0.0
        %2465 = vst.msk [vmem:[%s2442 + $0x89] sm:$0x1] %vm2443, 0.0
        %2466 = vst.msk [vmem:[%s2442 + $0xa1] sm:$0x1] %vm2443, 0.0
        %2467 = vst.msk [vmem:[%s2442 + $0xb9] sm:$0x1] %vm2443, 0.0
        %2468 = vst.msk [vmem:[%s2442 + $0xd1] sm:$0x1] %vm2443, 0.0
        %2469 = vst.msk [vmem:[%s2442 + $0xe9] sm:$0x1] %vm2443, 0.0
        %2470 = vst.msk [vmem:[%s2442 + $0x101] sm:$0x1] %vm2443, 0.0
        %2471 = vst.msk [vmem:[%s2442 + $0x119] sm:$0x1] %vm2443, 0.0
        %2472 = vst.msk [vmem:[%s2442 + $0x131] sm:$0x1] %vm2443, 0.0
        %2473 = vst.msk [vmem:[%s2442 + $0x149] sm:$0x1] %vm2443, 0.0
        %2474 = vst.msk [vmem:[%s2442 + $0x161] sm:$0x1] %vm2443, 0.0
        %2475 = vst.msk [vmem:[%s2442 + $0x179] sm:$0x1] %vm2443, 0.0
        %2476 = vst.msk [vmem:[%s2442 + $0x1] sm:$0xff] %vm1681, %v2402
        %2477 = vst.msk [vmem:[%s2442 + $0x9] sm:$0xff] %vm1681, %v2403
        %2478 = vst.msk [vmem:[%s2442 + $0x19] sm:$0xff] %vm1681, %v2404
        %2479 = vst.msk [vmem:[%s2442 + $0x21] sm:$0xff] %vm1681, %v2405
        %2480 = vst.msk [vmem:[%s2442 + $0x31] sm:$0xff] %vm1681, %v2406
        %2481 = vst.msk [vmem:[%s2442 + $0x39] sm:$0xff] %vm1681, %v2407
        %2482 = vst.msk [vmem:[%s2442 + $0x49] sm:$0xff] %vm1681, %v2408
        %2483 = vst.msk [vmem:[%s2442 + $0x51] sm:$0xff] %vm1681, %v2409
        %2484 = vst.msk [vmem:[%s2442 + $0x61] sm:$0xff] %vm1681, %v2410
        %2485 = vst.msk [vmem:[%s2442 + $0x69] sm:$0xff] %vm1681, %v2411
        %2486 = vst.msk [vmem:[%s2442 + $0x79] sm:$0xff] %vm1681, %v2412
        %2487 = vst.msk [vmem:[%s2442 + $0x81] sm:$0xff] %vm1681, %v2413
        %2488 = vst.msk [vmem:[%s2442 + $0x91] sm:$0xff] %vm1681, %v2414
        %2489 = vst.msk [vmem:[%s2442 + $0x99] sm:$0xff] %vm1681, %v2415
        %2490 = vst.msk [vmem:[%s2442 + $0xa9] sm:$0xff] %vm1681, %v2416
        %2491 = vst.msk [vmem:[%s2442 + $0xb1] sm:$0xff] %vm1681, %v2417
        %2492 = vst.msk [vmem:[%s2442 + $0xc1] sm:$0xff] %vm1681, %v2418
        %2493 = vst.msk [vmem:[%s2442 + $0xc9] sm:$0xff] %vm1681, %v2419
        %2494 = vst.msk [vmem:[%s2442 + $0xd9] sm:$0xff] %vm1681, %v2420
        %2495 = vst.msk [vmem:[%s2442 + $0xe1] sm:$0xff] %vm1681, %v2421
        %2496 = vst.msk [vmem:[%s2442 + $0xf1] sm:$0xff] %vm1681, %v2422
        %2497 = vst.msk [vmem:[%s2442 + $0xf9] sm:$0xff] %vm1681, %v2423
        %2498 = vst.msk [vmem:[%s2442 + $0x109] sm:$0xff] %vm1681, %v2424
        %2499 = vst.msk [vmem:[%s2442 + $0x111] sm:$0xff] %vm1681, %v2425
        %2500 = vst.msk [vmem:[%s2442 + $0x121] sm:$0xff] %vm1681, %v2426
        %2501 = vst.msk [vmem:[%s2442 + $0x129] sm:$0xff] %vm1681, %v2427
        %2502 = vst.msk [vmem:[%s2442 + $0x139] sm:$0xff] %vm1681, %v2428
        %2503 = vst.msk [vmem:[%s2442 + $0x141] sm:$0xff] %vm1681, %v2429
        %2504 = vst.msk [vmem:[%s2442 + $0x151] sm:$0xff] %vm1681, %v2430
        %2505 = vst.msk [vmem:[%s2442 + $0x159] sm:$0xff] %vm1681, %v2431
        %2506 = vst.msk [vmem:[%s2442 + $0x169] sm:$0xff] %vm1681, %v2432
        %2507 = vst.msk [vmem:[%s2442 + $0x171] sm:$0xff] %vm1681, %v2433
        %v2508 = vld [vmem:[#allocation3] sm:$0xff]
        %v2509 = vld [vmem:[#allocation3 + $0x8] sm:$0xff]
        %v2510 = vld [vmem:[#allocation3 + $0x18] sm:$0xff]
        %v2511 = vld [vmem:[#allocation3 + $0x20] sm:$0xff]
        %v2512 = vld [vmem:[#allocation3 + $0x30] sm:$0xff]
        %v2513 = vld [vmem:[#allocation3 + $0x38] sm:$0xff]
        %v2514 = vld [vmem:[#allocation3 + $0x48] sm:$0xff]
        %v2515 = vld [vmem:[#allocation3 + $0x50] sm:$0xff]
        %v2516 = vld [vmem:[#allocation3 + $0x60] sm:$0xff]
        %v2517 = vld [vmem:[#allocation3 + $0x68] sm:$0xff]
        %v2518 = vld [vmem:[#allocation3 + $0x78] sm:$0xff]
        %v2519 = vld [vmem:[#allocation3 + $0x80] sm:$0xff]
        %v2520 = vld [vmem:[#allocation3 + $0x90] sm:$0xff]
        %v2521 = vld [vmem:[#allocation3 + $0x98] sm:$0xff]
        %v2522 = vld [vmem:[#allocation3 + $0xa8] sm:$0xff]
        %v2523 = vld [vmem:[#allocation3 + $0xb0] sm:$0xff]
        %v2524 = vld [vmem:[#allocation3 + $0xc0] sm:$0xff]
        %v2525 = vld [vmem:[#allocation3 + $0xc8] sm:$0xff]
        %v2526 = vld [vmem:[#allocation3 + $0xd8] sm:$0xff]
        %v2527 = vld [vmem:[#allocation3 + $0xe0] sm:$0xff]
        %v2528 = vld [vmem:[#allocation3 + $0xf0] sm:$0xff]
        %v2529 = vld [vmem:[#allocation3 + $0xf8] sm:$0xff]
        %v2530 = vld [vmem:[#allocation3 + $0x108] sm:$0xff]
        %v2531 = vld [vmem:[#allocation3 + $0x110] sm:$0xff]
        %v2532 = vld [vmem:[#allocation3 + $0x120] sm:$0xff]
        %v2533 = vld [vmem:[#allocation3 + $0x128] sm:$0xff]
        %v2534 = vld [vmem:[#allocation3 + $0x138] sm:$0xff]
        %v2535 = vld [vmem:[#allocation3 + $0x140] sm:$0xff]
        %v2536 = vld [vmem:[#allocation3 + $0x150] sm:$0xff]
        %v2537 = vld [vmem:[#allocation3 + $0x158] sm:$0xff]
        %v2538 = vld [vmem:[#allocation3 + $0x168] sm:$0xff]
        %v2539 = vld [vmem:[#allocation3 + $0x170] sm:$0xff]
        %v2540 = vld [vmem:[#allocation3 + $0x1] sm:$0xff]
        %v2541 = vld [vmem:[#allocation3 + $0x9] sm:$0xff]
        %v2542 = vld [vmem:[#allocation3 + $0x19] sm:$0xff]
        %v2543 = vld [vmem:[#allocation3 + $0x21] sm:$0xff]
        %v2544 = vld [vmem:[#allocation3 + $0x31] sm:$0xff]
        %v2545 = vld [vmem:[#allocation3 + $0x39] sm:$0xff]
        %v2546 = vld [vmem:[#allocation3 + $0x49] sm:$0xff]
        %v2547 = vld [vmem:[#allocation3 + $0x51] sm:$0xff]
        %v2548 = vld [vmem:[#allocation3 + $0x61] sm:$0xff]
        %v2549 = vld [vmem:[#allocation3 + $0x69] sm:$0xff]
        %v2550 = vld [vmem:[#allocation3 + $0x79] sm:$0xff]
        %v2551 = vld [vmem:[#allocation3 + $0x81] sm:$0xff]
        %v2552 = vld [vmem:[#allocation3 + $0x91] sm:$0xff]
        %v2553 = vld [vmem:[#allocation3 + $0x99] sm:$0xff]
        %v2554 = vld [vmem:[#allocation3 + $0xa9] sm:$0xff]
        %v2555 = vld [vmem:[#allocation3 + $0xb1] sm:$0xff]
        %v2556 = vld [vmem:[#allocation3 + $0xc1] sm:$0xff]
        %v2557 = vld [vmem:[#allocation3 + $0xc9] sm:$0xff]
        %v2558 = vld [vmem:[#allocation3 + $0xd9] sm:$0xff]
        %v2559 = vld [vmem:[#allocation3 + $0xe1] sm:$0xff]
        %v2560 = vld [vmem:[#allocation3 + $0xf1] sm:$0xff]
        %v2561 = vld [vmem:[#allocation3 + $0xf9] sm:$0xff]
        %v2562 = vld [vmem:[#allocation3 + $0x109] sm:$0xff]
        %v2563 = vld [vmem:[#allocation3 + $0x111] sm:$0xff]
        %v2564 = vld [vmem:[#allocation3 + $0x121] sm:$0xff]
        %v2565 = vld [vmem:[#allocation3 + $0x129] sm:$0xff]
        %v2566 = vld [vmem:[#allocation3 + $0x139] sm:$0xff]
        %v2567 = vld [vmem:[#allocation3 + $0x141] sm:$0xff]
        %v2568 = vld [vmem:[#allocation3 + $0x151] sm:$0xff]
        %v2569 = vld [vmem:[#allocation3 + $0x159] sm:$0xff]
        %v2570 = vld [vmem:[#allocation3 + $0x169] sm:$0xff]
        %v2571 = vld [vmem:[#allocation3 + $0x171] sm:$0xff]
        %v2572 = vld [vmem:[#allocation3 + $0x2] sm:$0xff]
        %v2573 = vld [vmem:[#allocation3 + $0xa] sm:$0xff]
        %v2574 = vld [vmem:[#allocation3 + $0x1a] sm:$0xff]
        %v2575 = vld [vmem:[#allocation3 + $0x22] sm:$0xff]
        %v2576 = vld [vmem:[#allocation3 + $0x32] sm:$0xff]
        %v2577 = vld [vmem:[#allocation3 + $0x3a] sm:$0xff]
        %v2578 = vld [vmem:[#allocation3 + $0x4a] sm:$0xff]
        %v2579 = vld [vmem:[#allocation3 + $0x52] sm:$0xff]
        %v2580 = vld [vmem:[#allocation3 + $0x62] sm:$0xff]
        %v2581 = vld [vmem:[#allocation3 + $0x6a] sm:$0xff]
        %v2582 = vld [vmem:[#allocation3 + $0x7a] sm:$0xff]
        %v2583 = vld [vmem:[#allocation3 + $0x82] sm:$0xff]
        %v2584 = vld [vmem:[#allocation3 + $0x92] sm:$0xff]
        %v2585 = vld [vmem:[#allocation3 + $0x9a] sm:$0xff]
        %v2586 = vld [vmem:[#allocation3 + $0xaa] sm:$0xff]
        %v2587 = vld [vmem:[#allocation3 + $0xb2] sm:$0xff]
        %v2588 = vld [vmem:[#allocation3 + $0xc2] sm:$0xff]
        %v2589 = vld [vmem:[#allocation3 + $0xca] sm:$0xff]
        %v2590 = vld [vmem:[#allocation3 + $0xda] sm:$0xff]
        %v2591 = vld [vmem:[#allocation3 + $0xe2] sm:$0xff]
        %v2592 = vld [vmem:[#allocation3 + $0xf2] sm:$0xff]
        %v2593 = vld [vmem:[#allocation3 + $0xfa] sm:$0xff]
        %v2594 = vld [vmem:[#allocation3 + $0x10a] sm:$0xff]
        %v2595 = vld [vmem:[#allocation3 + $0x112] sm:$0xff]
        %v2596 = vld [vmem:[#allocation3 + $0x122] sm:$0xff]
        %v2597 = vld [vmem:[#allocation3 + $0x12a] sm:$0xff]
        %v2598 = vld [vmem:[#allocation3 + $0x13a] sm:$0xff]
        %v2599 = vld [vmem:[#allocation3 + $0x142] sm:$0xff]
        %v2600 = vld [vmem:[#allocation3 + $0x152] sm:$0xff]
        %v2601 = vld [vmem:[#allocation3 + $0x15a] sm:$0xff]
        %v2602 = vld [vmem:[#allocation3 + $0x16a] sm:$0xff]
        %v2603 = vld [vmem:[#allocation3 + $0x172] sm:$0xff]
        %v2604 = vld [vmem:[%s2442] sm:$0xff]
        %v2605 = vld [vmem:[%s2442 + $0x8] sm:$0xff]
        %v2606 = vld [vmem:[%s2442 + $0x18] sm:$0xff]
        %v2607 = vld [vmem:[%s2442 + $0x20] sm:$0xff]
        %v2608 = vld [vmem:[%s2442 + $0x30] sm:$0xff]
        %v2609 = vld [vmem:[%s2442 + $0x38] sm:$0xff]
        %v2610 = vld [vmem:[%s2442 + $0x48] sm:$0xff]
        %v2611 = vld [vmem:[%s2442 + $0x50] sm:$0xff]
        %v2612 = vld [vmem:[%s2442 + $0x60] sm:$0xff]
        %v2613 = vld [vmem:[%s2442 + $0x68] sm:$0xff]
        %v2614 = vld [vmem:[%s2442 + $0x78] sm:$0xff]
        %v2615 = vld [vmem:[%s2442 + $0x80] sm:$0xff]
        %v2616 = vld [vmem:[%s2442 + $0x90] sm:$0xff]
        %v2617 = vld [vmem:[%s2442 + $0x98] sm:$0xff]
        %v2618 = vld [vmem:[%s2442 + $0xa8] sm:$0xff]
        %v2619 = vld [vmem:[%s2442 + $0xb0] sm:$0xff]
        %v2620 = vld [vmem:[%s2442 + $0xc0] sm:$0xff]
        %v2621 = vld [vmem:[%s2442 + $0xc8] sm:$0xff]
        %v2622 = vld [vmem:[%s2442 + $0xd8] sm:$0xff]
        %v2623 = vld [vmem:[%s2442 + $0xe0] sm:$0xff]
        %v2624 = vld [vmem:[%s2442 + $0xf0] sm:$0xff]
        %v2625 = vld [vmem:[%s2442 + $0xf8] sm:$0xff]
        %v2626 = vld [vmem:[%s2442 + $0x108] sm:$0xff]
        %v2627 = vld [vmem:[%s2442 + $0x110] sm:$0xff]
        %v2628 = vld [vmem:[%s2442 + $0x120] sm:$0xff]
        %v2629 = vld [vmem:[%s2442 + $0x128] sm:$0xff]
        %v2630 = vld [vmem:[%s2442 + $0x138] sm:$0xff]
        %v2631 = vld [vmem:[%s2442 + $0x140] sm:$0xff]
        %v2632 = vld [vmem:[%s2442 + $0x150] sm:$0xff]
        %v2633 = vld [vmem:[%s2442 + $0x158] sm:$0xff]
        %v2634 = vld [vmem:[%s2442 + $0x168] sm:$0xff]
        %v2635 = vld [vmem:[%s2442 + $0x170] sm:$0xff]
        %v2636 = vld [vmem:[%s2442 + $0x1] sm:$0xff]
        %v2637 = vld [vmem:[%s2442 + $0x9] sm:$0xff]
        %v2638 = vld [vmem:[%s2442 + $0x19] sm:$0xff]
        %v2639 = vld [vmem:[%s2442 + $0x21] sm:$0xff]
        %v2640 = vld [vmem:[%s2442 + $0x31] sm:$0xff]
        %v2641 = vld [vmem:[%s2442 + $0x39] sm:$0xff]
        %v2642 = vld [vmem:[%s2442 + $0x49] sm:$0xff]
        %v2643 = vld [vmem:[%s2442 + $0x51] sm:$0xff]
        %v2644 = vld [vmem:[%s2442 + $0x61] sm:$0xff]
        %v2645 = vld [vmem:[%s2442 + $0x69] sm:$0xff]
        %v2646 = vld [vmem:[%s2442 + $0x79] sm:$0xff]
        %v2647 = vld [vmem:[%s2442 + $0x81] sm:$0xff]
        %v2648 = vld [vmem:[%s2442 + $0x91] sm:$0xff]
        %v2649 = vld [vmem:[%s2442 + $0x99] sm:$0xff]
        %v2650 = vld [vmem:[%s2442 + $0xa9] sm:$0xff]
        %v2651 = vld [vmem:[%s2442 + $0xb1] sm:$0xff]
        %v2652 = vld [vmem:[%s2442 + $0xc1] sm:$0xff]
        %v2653 = vld [vmem:[%s2442 + $0xc9] sm:$0xff]
        %v2654 = vld [vmem:[%s2442 + $0xd9] sm:$0xff]
        %v2655 = vld [vmem:[%s2442 + $0xe1] sm:$0xff]
        %v2656 = vld [vmem:[%s2442 + $0xf1] sm:$0xff]
        %v2657 = vld [vmem:[%s2442 + $0xf9] sm:$0xff]
        %v2658 = vld [vmem:[%s2442 + $0x109] sm:$0xff]
        %v2659 = vld [vmem:[%s2442 + $0x111] sm:$0xff]
        %v2660 = vld [vmem:[%s2442 + $0x121] sm:$0xff]
        %v2661 = vld [vmem:[%s2442 + $0x129] sm:$0xff]
        %v2662 = vld [vmem:[%s2442 + $0x139] sm:$0xff]
        %v2663 = vld [vmem:[%s2442 + $0x141] sm:$0xff]
        %v2664 = vld [vmem:[%s2442 + $0x151] sm:$0xff]
        %v2665 = vld [vmem:[%s2442 + $0x159] sm:$0xff]
        %v2666 = vld [vmem:[%s2442 + $0x169] sm:$0xff]
        %v2667 = vld [vmem:[%s2442 + $0x171] sm:$0xff]
        %v2668 = vld [vmem:[%s2442 + $0x2] sm:$0xff]
        %v2669 = vld [vmem:[%s2442 + $0xa] sm:$0xff]
        %v2670 = vld [vmem:[%s2442 + $0x1a] sm:$0xff]
        %v2671 = vld [vmem:[%s2442 + $0x22] sm:$0xff]
        %v2672 = vld [vmem:[%s2442 + $0x32] sm:$0xff]
        %v2673 = vld [vmem:[%s2442 + $0x3a] sm:$0xff]
        %v2674 = vld [vmem:[%s2442 + $0x4a] sm:$0xff]
        %v2675 = vld [vmem:[%s2442 + $0x52] sm:$0xff]
        %v2676 = vld [vmem:[%s2442 + $0x62] sm:$0xff]
        %v2677 = vld [vmem:[%s2442 + $0x6a] sm:$0xff]
        %v2678 = vld [vmem:[%s2442 + $0x7a] sm:$0xff]
        %v2679 = vld [vmem:[%s2442 + $0x82] sm:$0xff]
        %v2680 = vld [vmem:[%s2442 + $0x92] sm:$0xff]
        %v2681 = vld [vmem:[%s2442 + $0x9a] sm:$0xff]
        %v2682 = vld [vmem:[%s2442 + $0xaa] sm:$0xff]
        %v2683 = vld [vmem:[%s2442 + $0xb2] sm:$0xff]
        %v2684 = vld [vmem:[%s2442 + $0xc2] sm:$0xff]
        %v2685 = vld [vmem:[%s2442 + $0xca] sm:$0xff]
        %v2686 = vld [vmem:[%s2442 + $0xda] sm:$0xff]
        %v2687 = vld [vmem:[%s2442 + $0xe2] sm:$0xff]
        %v2688 = vld [vmem:[%s2442 + $0xf2] sm:$0xff]
        %v2689 = vld [vmem:[%s2442 + $0xfa] sm:$0xff]
        %v2690 = vld [vmem:[%s2442 + $0x10a] sm:$0xff]
        %v2691 = vld [vmem:[%s2442 + $0x112] sm:$0xff]
        %v2692 = vld [vmem:[%s2442 + $0x122] sm:$0xff]
        %v2693 = vld [vmem:[%s2442 + $0x12a] sm:$0xff]
        %v2694 = vld [vmem:[%s2442 + $0x13a] sm:$0xff]
        %v2695 = vld [vmem:[%s2442 + $0x142] sm:$0xff]
        %v2696 = vld [vmem:[%s2442 + $0x152] sm:$0xff]
        %v2697 = vld [vmem:[%s2442 + $0x15a] sm:$0xff]
        %v2698 = vld [vmem:[%s2442 + $0x16a] sm:$0xff]
        %v2699 = vld [vmem:[%s2442 + $0x172] sm:$0xff]
        %s2700 = scalar_lea.vmem [#allocation3], 48
        %v2701 = vld [vmem:[%s2700] sm:$0xff]
        %v2702 = vld [vmem:[%s2700 + $0x8] sm:$0xff]
        %v2703 = vld [vmem:[%s2700 + $0x18] sm:$0xff]
        %v2704 = vld [vmem:[%s2700 + $0x20] sm:$0xff]
        %v2705 = vld [vmem:[%s2700 + $0x30] sm:$0xff]
        %v2706 = vld [vmem:[%s2700 + $0x38] sm:$0xff]
        %v2707 = vld [vmem:[%s2700 + $0x48] sm:$0xff]
        %v2708 = vld [vmem:[%s2700 + $0x50] sm:$0xff]
        %v2709 = vld [vmem:[%s2700 + $0x60] sm:$0xff]
        %v2710 = vld [vmem:[%s2700 + $0x68] sm:$0xff]
        %v2711 = vld [vmem:[%s2700 + $0x78] sm:$0xff]
        %v2712 = vld [vmem:[%s2700 + $0x80] sm:$0xff]
        %v2713 = vld [vmem:[%s2700 + $0x90] sm:$0xff]
        %v2714 = vld [vmem:[%s2700 + $0x98] sm:$0xff]
        %v2715 = vld [vmem:[%s2700 + $0xa8] sm:$0xff]
        %v2716 = vld [vmem:[%s2700 + $0xb0] sm:$0xff]
        %v2717 = vld [vmem:[%s2700 + $0xc0] sm:$0xff]
        %v2718 = vld [vmem:[%s2700 + $0xc8] sm:$0xff]
        %v2719 = vld [vmem:[%s2700 + $0xd8] sm:$0xff]
        %v2720 = vld [vmem:[%s2700 + $0xe0] sm:$0xff]
        %v2721 = vld [vmem:[%s2700 + $0xf0] sm:$0xff]
        %v2722 = vld [vmem:[%s2700 + $0xf8] sm:$0xff]
        %v2723 = vld [vmem:[%s2700 + $0x108] sm:$0xff]
        %v2724 = vld [vmem:[%s2700 + $0x110] sm:$0xff]
        %v2725 = vld [vmem:[%s2700 + $0x120] sm:$0xff]
        %v2726 = vld [vmem:[%s2700 + $0x128] sm:$0xff]
        %v2727 = vld [vmem:[%s2700 + $0x138] sm:$0xff]
        %v2728 = vld [vmem:[%s2700 + $0x140] sm:$0xff]
        %v2729 = vld [vmem:[%s2700 + $0x150] sm:$0xff]
        %v2730 = vld [vmem:[%s2700 + $0x158] sm:$0xff]
        %v2731 = vld [vmem:[%s2700 + $0x168] sm:$0xff]
        %v2732 = vld [vmem:[%s2700 + $0x170] sm:$0xff]
        %v2733 = vld [vmem:[%s2700 + $0x1] sm:$0xff]
        %v2734 = vld [vmem:[%s2700 + $0x9] sm:$0xff]
        %v2735 = vld [vmem:[%s2700 + $0x19] sm:$0xff]
        %v2736 = vld [vmem:[%s2700 + $0x21] sm:$0xff]
        %v2737 = vld [vmem:[%s2700 + $0x31] sm:$0xff]
        %v2738 = vld [vmem:[%s2700 + $0x39] sm:$0xff]
        %v2739 = vld [vmem:[%s2700 + $0x49] sm:$0xff]
        %v2740 = vld [vmem:[%s2700 + $0x51] sm:$0xff]
        %v2741 = vld [vmem:[%s2700 + $0x61] sm:$0xff]
        %v2742 = vld [vmem:[%s2700 + $0x69] sm:$0xff]
        %v2743 = vld [vmem:[%s2700 + $0x79] sm:$0xff]
        %v2744 = vld [vmem:[%s2700 + $0x81] sm:$0xff]
        %v2745 = vld [vmem:[%s2700 + $0x91] sm:$0xff]
        %v2746 = vld [vmem:[%s2700 + $0x99] sm:$0xff]
        %v2747 = vld [vmem:[%s2700 + $0xa9] sm:$0xff]
        %v2748 = vld [vmem:[%s2700 + $0xb1] sm:$0xff]
        %v2749 = vld [vmem:[%s2700 + $0xc1] sm:$0xff]
        %v2750 = vld [vmem:[%s2700 + $0xc9] sm:$0xff]
        %v2751 = vld [vmem:[%s2700 + $0xd9] sm:$0xff]
        %v2752 = vld [vmem:[%s2700 + $0xe1] sm:$0xff]
        %v2753 = vld [vmem:[%s2700 + $0xf1] sm:$0xff]
        %v2754 = vld [vmem:[%s2700 + $0xf9] sm:$0xff]
        %v2755 = vld [vmem:[%s2700 + $0x109] sm:$0xff]
        %v2756 = vld [vmem:[%s2700 + $0x111] sm:$0xff]
        %v2757 = vld [vmem:[%s2700 + $0x121] sm:$0xff]
        %v2758 = vld [vmem:[%s2700 + $0x129] sm:$0xff]
        %v2759 = vld [vmem:[%s2700 + $0x139] sm:$0xff]
        %v2760 = vld [vmem:[%s2700 + $0x141] sm:$0xff]
        %v2761 = vld [vmem:[%s2700 + $0x151] sm:$0xff]
        %v2762 = vld [vmem:[%s2700 + $0x159] sm:$0xff]
        %v2763 = vld [vmem:[%s2700 + $0x169] sm:$0xff]
        %v2764 = vld [vmem:[%s2700 + $0x171] sm:$0xff]
        %v2765 = vld [vmem:[%s2700 + $0x2] sm:$0xff]
        %v2766 = vld [vmem:[%s2700 + $0xa] sm:$0xff]
        %v2767 = vld [vmem:[%s2700 + $0x1a] sm:$0xff]
        %v2768 = vld [vmem:[%s2700 + $0x22] sm:$0xff]
        %v2769 = vld [vmem:[%s2700 + $0x32] sm:$0xff]
        %v2770 = vld [vmem:[%s2700 + $0x3a] sm:$0xff]
        %v2771 = vld [vmem:[%s2700 + $0x4a] sm:$0xff]
        %v2772 = vld [vmem:[%s2700 + $0x52] sm:$0xff]
        %v2773 = vld [vmem:[%s2700 + $0x62] sm:$0xff]
        %v2774 = vld [vmem:[%s2700 + $0x6a] sm:$0xff]
        %v2775 = vld [vmem:[%s2700 + $0x7a] sm:$0xff]
        %v2776 = vld [vmem:[%s2700 + $0x82] sm:$0xff]
        %v2777 = vld [vmem:[%s2700 + $0x92] sm:$0xff]
        %v2778 = vld [vmem:[%s2700 + $0x9a] sm:$0xff]
        %v2779 = vld [vmem:[%s2700 + $0xaa] sm:$0xff]
        %v2780 = vld [vmem:[%s2700 + $0xb2] sm:$0xff]
        %v2781 = vld [vmem:[%s2700 + $0xc2] sm:$0xff]
        %v2782 = vld [vmem:[%s2700 + $0xca] sm:$0xff]
        %v2783 = vld [vmem:[%s2700 + $0xda] sm:$0xff]
        %v2784 = vld [vmem:[%s2700 + $0xe2] sm:$0xff]
        %v2785 = vld [vmem:[%s2700 + $0xf2] sm:$0xff]
        %v2786 = vld [vmem:[%s2700 + $0xfa] sm:$0xff]
        %v2787 = vld [vmem:[%s2700 + $0x10a] sm:$0xff]
        %v2788 = vld [vmem:[%s2700 + $0x112] sm:$0xff]
        %v2789 = vld [vmem:[%s2700 + $0x122] sm:$0xff]
        %v2790 = vld [vmem:[%s2700 + $0x12a] sm:$0xff]
        %v2791 = vld [vmem:[%s2700 + $0x13a] sm:$0xff]
        %v2792 = vld [vmem:[%s2700 + $0x142] sm:$0xff]
        %v2793 = vld [vmem:[%s2700 + $0x152] sm:$0xff]
        %v2794 = vld [vmem:[%s2700 + $0x15a] sm:$0xff]
        %v2795 = vld [vmem:[%s2700 + $0x16a] sm:$0xff]
        %v2796 = vld [vmem:[%s2700 + $0x172] sm:$0xff]
        %2829 = vrot.lane.b32.xlu0 %v2540, 8
        %v2830 = vpop.permute.xlu0 %2829
        %2831 = vrot.lane.b32.xlu0 %v2541, 8
        %v2832 = vpop.permute.xlu0 %2831
        %2833 = vrot.lane.b32.xlu0 %v2542, 8
        %v2834 = vpop.permute.xlu0 %2833
        %2835 = vrot.lane.b32.xlu0 %v2543, 8
        %v2836 = vpop.permute.xlu0 %2835
        %2837 = vrot.lane.b32.xlu0 %v2544, 8
        %v2838 = vpop.permute.xlu0 %2837
        %2839 = vrot.lane.b32.xlu0 %v2545, 8
        %v2840 = vpop.permute.xlu0 %2839
        %2841 = vrot.lane.b32.xlu0 %v2546, 8
        %v2842 = vpop.permute.xlu0 %2841
        %2843 = vrot.lane.b32.xlu0 %v2547, 8
        %v2844 = vpop.permute.xlu0 %2843
        %2845 = vrot.lane.b32.xlu0 %v2548, 8
        %v2846 = vpop.permute.xlu0 %2845
        %2847 = vrot.lane.b32.xlu0 %v2549, 8
        %v2848 = vpop.permute.xlu0 %2847
        %2849 = vrot.lane.b32.xlu0 %v2550, 8
        %v2850 = vpop.permute.xlu0 %2849
        %2851 = vrot.lane.b32.xlu0 %v2551, 8
        %v2852 = vpop.permute.xlu0 %2851
        %2853 = vrot.lane.b32.xlu0 %v2552, 8
        %v2854 = vpop.permute.xlu0 %2853
        %2855 = vrot.lane.b32.xlu0 %v2553, 8
        %v2856 = vpop.permute.xlu0 %2855
        %2857 = vrot.lane.b32.xlu0 %v2554, 8
        %v2858 = vpop.permute.xlu0 %2857
        %2859 = vrot.lane.b32.xlu0 %v2555, 8
        %v2860 = vpop.permute.xlu0 %2859
        %2861 = vrot.lane.b32.xlu0 %v2556, 8
        %v2862 = vpop.permute.xlu0 %2861
        %2863 = vrot.lane.b32.xlu0 %v2557, 8
        %v2864 = vpop.permute.xlu0 %2863
        %2865 = vrot.lane.b32.xlu0 %v2558, 8
        %v2866 = vpop.permute.xlu0 %2865
        %2867 = vrot.lane.b32.xlu0 %v2559, 8
        %v2868 = vpop.permute.xlu0 %2867
        %2869 = vrot.lane.b32.xlu0 %v2560, 8
        %v2870 = vpop.permute.xlu0 %2869
        %2871 = vrot.lane.b32.xlu0 %v2561, 8
        %v2872 = vpop.permute.xlu0 %2871
        %2873 = vrot.lane.b32.xlu0 %v2562, 8
        %v2874 = vpop.permute.xlu0 %2873
        %2875 = vrot.lane.b32.xlu0 %v2563, 8
        %v2876 = vpop.permute.xlu0 %2875
        %2877 = vrot.lane.b32.xlu0 %v2564, 8
        %v2878 = vpop.permute.xlu0 %2877
        %2879 = vrot.lane.b32.xlu0 %v2565, 8
        %v2880 = vpop.permute.xlu0 %2879
        %2881 = vrot.lane.b32.xlu0 %v2566, 8
        %v2882 = vpop.permute.xlu0 %2881
        %2883 = vrot.lane.b32.xlu0 %v2567, 8
        %v2884 = vpop.permute.xlu0 %2883
        %2885 = vrot.lane.b32.xlu0 %v2568, 8
        %v2886 = vpop.permute.xlu0 %2885
        %2887 = vrot.lane.b32.xlu0 %v2569, 8
        %v2888 = vpop.permute.xlu0 %2887
        %2889 = vrot.lane.b32.xlu0 %v2570, 8
        %v2890 = vpop.permute.xlu0 %2889
        %2891 = vrot.lane.b32.xlu0 %v2571, 8
        %v2892 = vpop.permute.xlu0 %2891
        %2957 = vrot.lane.b32.xlu0 %v2572, 16
        %v2958 = vpop.permute.xlu0 %2957
        %2959 = vrot.lane.b32.xlu0 %v2573, 16
        %v2960 = vpop.permute.xlu0 %2959
        %2961 = vrot.lane.b32.xlu0 %v2574, 16
        %v2962 = vpop.permute.xlu0 %2961
        %2963 = vrot.lane.b32.xlu0 %v2575, 16
        %v2964 = vpop.permute.xlu0 %2963
        %2965 = vrot.lane.b32.xlu0 %v2576, 16
        %v2966 = vpop.permute.xlu0 %2965
        %2967 = vrot.lane.b32.xlu0 %v2577, 16
        %v2968 = vpop.permute.xlu0 %2967
        %2969 = vrot.lane.b32.xlu0 %v2578, 16
        %v2970 = vpop.permute.xlu0 %2969
        %2971 = vrot.lane.b32.xlu0 %v2579, 16
        %v2972 = vpop.permute.xlu0 %2971
        %2973 = vrot.lane.b32.xlu0 %v2580, 16
        %v2974 = vpop.permute.xlu0 %2973
        %2975 = vrot.lane.b32.xlu0 %v2581, 16
        %v2976 = vpop.permute.xlu0 %2975
        %2977 = vrot.lane.b32.xlu0 %v2582, 16
        %v2978 = vpop.permute.xlu0 %2977
        %2979 = vrot.lane.b32.xlu0 %v2583, 16
        %v2980 = vpop.permute.xlu0 %2979
        %2981 = vrot.lane.b32.xlu0 %v2584, 16
        %v2982 = vpop.permute.xlu0 %2981
        %2983 = vrot.lane.b32.xlu0 %v2585, 16
        %v2984 = vpop.permute.xlu0 %2983
        %2985 = vrot.lane.b32.xlu0 %v2586, 16
        %v2986 = vpop.permute.xlu0 %2985
        %2987 = vrot.lane.b32.xlu0 %v2587, 16
        %v2988 = vpop.permute.xlu0 %2987
        %2989 = vrot.lane.b32.xlu0 %v2588, 16
        %v2990 = vpop.permute.xlu0 %2989
        %2991 = vrot.lane.b32.xlu0 %v2589, 16
        %v2992 = vpop.permute.xlu0 %2991
        %2993 = vrot.lane.b32.xlu0 %v2590, 16
        %v2994 = vpop.permute.xlu0 %2993
        %2995 = vrot.lane.b32.xlu0 %v2591, 16
        %v2996 = vpop.permute.xlu0 %2995
        %2997 = vrot.lane.b32.xlu0 %v2592, 16
        %v2998 = vpop.permute.xlu0 %2997
        %2999 = vrot.lane.b32.xlu0 %v2593, 16
        %v3000 = vpop.permute.xlu0 %2999
        %3001 = vrot.lane.b32.xlu0 %v2594, 16
        %v3002 = vpop.permute.xlu0 %3001
        %3003 = vrot.lane.b32.xlu0 %v2595, 16
        %v3004 = vpop.permute.xlu0 %3003
        %3005 = vrot.lane.b32.xlu0 %v2596, 16
        %v3006 = vpop.permute.xlu0 %3005
        %3007 = vrot.lane.b32.xlu0 %v2597, 16
        %v3008 = vpop.permute.xlu0 %3007
        %3009 = vrot.lane.b32.xlu0 %v2598, 16
        %v3010 = vpop.permute.xlu0 %3009
        %3011 = vrot.lane.b32.xlu0 %v2599, 16
        %v3012 = vpop.permute.xlu0 %3011
        %3013 = vrot.lane.b32.xlu0 %v2600, 16
        %v3014 = vpop.permute.xlu0 %3013
        %3015 = vrot.lane.b32.xlu0 %v2601, 16
        %v3016 = vpop.permute.xlu0 %3015
        %3017 = vrot.lane.b32.xlu0 %v2602, 16
        %v3018 = vpop.permute.xlu0 %3017
        %3019 = vrot.lane.b32.xlu0 %v2603, 16
        %v3020 = vpop.permute.xlu0 %3019
        %3085 = vrot.lane.b32.xlu0 %v2604, 24
        %v3086 = vpop.permute.xlu0 %3085
        %3087 = vrot.lane.b32.xlu0 %v2605, 24
        %v3088 = vpop.permute.xlu0 %3087
        %3089 = vrot.lane.b32.xlu0 %v2606, 24
        %v3090 = vpop.permute.xlu0 %3089
        %3091 = vrot.lane.b32.xlu0 %v2607, 24
        %v3092 = vpop.permute.xlu0 %3091
        %3093 = vrot.lane.b32.xlu0 %v2608, 24
        %v3094 = vpop.permute.xlu0 %3093
        %3095 = vrot.lane.b32.xlu0 %v2609, 24
        %v3096 = vpop.permute.xlu0 %3095
        %3097 = vrot.lane.b32.xlu0 %v2610, 24
        %v3098 = vpop.permute.xlu0 %3097
        %3099 = vrot.lane.b32.xlu0 %v2611, 24
        %v3100 = vpop.permute.xlu0 %3099
        %3101 = vrot.lane.b32.xlu0 %v2612, 24
        %v3102 = vpop.permute.xlu0 %3101
        %3103 = vrot.lane.b32.xlu0 %v2613, 24
        %v3104 = vpop.permute.xlu0 %3103
        %3105 = vrot.lane.b32.xlu0 %v2614, 24
        %v3106 = vpop.permute.xlu0 %3105
        %3107 = vrot.lane.b32.xlu0 %v2615, 24
        %v3108 = vpop.permute.xlu0 %3107
        %3109 = vrot.lane.b32.xlu0 %v2616, 24
        %v3110 = vpop.permute.xlu0 %3109
        %3111 = vrot.lane.b32.xlu0 %v2617, 24
        %v3112 = vpop.permute.xlu0 %3111
        %3113 = vrot.lane.b32.xlu0 %v2618, 24
        %v3114 = vpop.permute.xlu0 %3113
        %3115 = vrot.lane.b32.xlu0 %v2619, 24
        %v3116 = vpop.permute.xlu0 %3115
        %3117 = vrot.lane.b32.xlu0 %v2620, 24
        %v3118 = vpop.permute.xlu0 %3117
        %3119 = vrot.lane.b32.xlu0 %v2621, 24
        %v3120 = vpop.permute.xlu0 %3119
        %3121 = vrot.lane.b32.xlu0 %v2622, 24
        %v3122 = vpop.permute.xlu0 %3121
        %3123 = vrot.lane.b32.xlu0 %v2623, 24
        %v3124 = vpop.permute.xlu0 %3123
        %3125 = vrot.lane.b32.xlu0 %v2624, 24
        %v3126 = vpop.permute.xlu0 %3125
        %3127 = vrot.lane.b32.xlu0 %v2625, 24
        %v3128 = vpop.permute.xlu0 %3127
        %3129 = vrot.lane.b32.xlu0 %v2626, 24
        %v3130 = vpop.permute.xlu0 %3129
        %3131 = vrot.lane.b32.xlu0 %v2627, 24
        %v3132 = vpop.permute.xlu0 %3131
        %3133 = vrot.lane.b32.xlu0 %v2628, 24
        %v3134 = vpop.permute.xlu0 %3133
        %3135 = vrot.lane.b32.xlu0 %v2629, 24
        %v3136 = vpop.permute.xlu0 %3135
        %3137 = vrot.lane.b32.xlu0 %v2630, 24
        %v3138 = vpop.permute.xlu0 %3137
        %3139 = vrot.lane.b32.xlu0 %v2631, 24
        %v3140 = vpop.permute.xlu0 %3139
        %3141 = vrot.lane.b32.xlu0 %v2632, 24
        %v3142 = vpop.permute.xlu0 %3141
        %3143 = vrot.lane.b32.xlu0 %v2633, 24
        %v3144 = vpop.permute.xlu0 %3143
        %3145 = vrot.lane.b32.xlu0 %v2634, 24
        %v3146 = vpop.permute.xlu0 %3145
        %3147 = vrot.lane.b32.xlu0 %v2635, 24
        %v3148 = vpop.permute.xlu0 %3147
        %3213 = vrot.lane.b32.xlu0 %v2636, 32
        %v3214 = vpop.permute.xlu0 %3213
        %3215 = vrot.lane.b32.xlu0 %v2637, 32
        %v3216 = vpop.permute.xlu0 %3215
        %3217 = vrot.lane.b32.xlu0 %v2638, 32
        %v3218 = vpop.permute.xlu0 %3217
        %3219 = vrot.lane.b32.xlu0 %v2639, 32
        %v3220 = vpop.permute.xlu0 %3219
        %3221 = vrot.lane.b32.xlu0 %v2640, 32
        %v3222 = vpop.permute.xlu0 %3221
        %3223 = vrot.lane.b32.xlu0 %v2641, 32
        %v3224 = vpop.permute.xlu0 %3223
        %3225 = vrot.lane.b32.xlu0 %v2642, 32
        %v3226 = vpop.permute.xlu0 %3225
        %3227 = vrot.lane.b32.xlu0 %v2643, 32
        %v3228 = vpop.permute.xlu0 %3227
        %3229 = vrot.lane.b32.xlu0 %v2644, 32
        %v3230 = vpop.permute.xlu0 %3229
        %3231 = vrot.lane.b32.xlu0 %v2645, 32
        %v3232 = vpop.permute.xlu0 %3231
        %3233 = vrot.lane.b32.xlu0 %v2646, 32
        %v3234 = vpop.permute.xlu0 %3233
        %3235 = vrot.lane.b32.xlu0 %v2647, 32
        %v3236 = vpop.permute.xlu0 %3235
        %3237 = vrot.lane.b32.xlu0 %v2648, 32
        %v3238 = vpop.permute.xlu0 %3237
        %3239 = vrot.lane.b32.xlu0 %v2649, 32
        %v3240 = vpop.permute.xlu0 %3239
        %3241 = vrot.lane.b32.xlu0 %v2650, 32
        %v3242 = vpop.permute.xlu0 %3241
        %3243 = vrot.lane.b32.xlu0 %v2651, 32
        %v3244 = vpop.permute.xlu0 %3243
        %3245 = vrot.lane.b32.xlu0 %v2652, 32
        %v3246 = vpop.permute.xlu0 %3245
        %3247 = vrot.lane.b32.xlu0 %v2653, 32
        %v3248 = vpop.permute.xlu0 %3247
        %3249 = vrot.lane.b32.xlu0 %v2654, 32
        %v3250 = vpop.permute.xlu0 %3249
        %3251 = vrot.lane.b32.xlu0 %v2655, 32
        %v3252 = vpop.permute.xlu0 %3251
        %3253 = vrot.lane.b32.xlu0 %v2656, 32
        %v3254 = vpop.permute.xlu0 %3253
        %3255 = vrot.lane.b32.xlu0 %v2657, 32
        %v3256 = vpop.permute.xlu0 %3255
        %3257 = vrot.lane.b32.xlu0 %v2658, 32
        %v3258 = vpop.permute.xlu0 %3257
        %3259 = vrot.lane.b32.xlu0 %v2659, 32
        %v3260 = vpop.permute.xlu0 %3259
        %3261 = vrot.lane.b32.xlu0 %v2660, 32
        %v3262 = vpop.permute.xlu0 %3261
        %3263 = vrot.lane.b32.xlu0 %v2661, 32
        %v3264 = vpop.permute.xlu0 %3263
        %3265 = vrot.lane.b32.xlu0 %v2662, 32
        %v3266 = vpop.permute.xlu0 %3265
        %3267 = vrot.lane.b32.xlu0 %v2663, 32
        %v3268 = vpop.permute.xlu0 %3267
        %3269 = vrot.lane.b32.xlu0 %v2664, 32
        %v3270 = vpop.permute.xlu0 %3269
        %3271 = vrot.lane.b32.xlu0 %v2665, 32
        %v3272 = vpop.permute.xlu0 %3271
        %3273 = vrot.lane.b32.xlu0 %v2666, 32
        %v3274 = vpop.permute.xlu0 %3273
        %3275 = vrot.lane.b32.xlu0 %v2667, 32
        %v3276 = vpop.permute.xlu0 %3275
        %3341 = vrot.lane.b32.xlu0 %v2668, 40
        %v3342 = vpop.permute.xlu0 %3341
        %3343 = vrot.lane.b32.xlu0 %v2669, 40
        %v3344 = vpop.permute.xlu0 %3343
        %3345 = vrot.lane.b32.xlu0 %v2670, 40
        %v3346 = vpop.permute.xlu0 %3345
        %3347 = vrot.lane.b32.xlu0 %v2671, 40
        %v3348 = vpop.permute.xlu0 %3347
        %3349 = vrot.lane.b32.xlu0 %v2672, 40
        %v3350 = vpop.permute.xlu0 %3349
        %3351 = vrot.lane.b32.xlu0 %v2673, 40
        %v3352 = vpop.permute.xlu0 %3351
        %3353 = vrot.lane.b32.xlu0 %v2674, 40
        %v3354 = vpop.permute.xlu0 %3353
        %3355 = vrot.lane.b32.xlu0 %v2675, 40
        %v3356 = vpop.permute.xlu0 %3355
        %3357 = vrot.lane.b32.xlu0 %v2676, 40
        %v3358 = vpop.permute.xlu0 %3357
        %3359 = vrot.lane.b32.xlu0 %v2677, 40
        %v3360 = vpop.permute.xlu0 %3359
        %3361 = vrot.lane.b32.xlu0 %v2678, 40
        %v3362 = vpop.permute.xlu0 %3361
        %3363 = vrot.lane.b32.xlu0 %v2679, 40
        %v3364 = vpop.permute.xlu0 %3363
        %3365 = vrot.lane.b32.xlu0 %v2680, 40
        %v3366 = vpop.permute.xlu0 %3365
        %3367 = vrot.lane.b32.xlu0 %v2681, 40
        %v3368 = vpop.permute.xlu0 %3367
        %3369 = vrot.lane.b32.xlu0 %v2682, 40
        %v3370 = vpop.permute.xlu0 %3369
        %3371 = vrot.lane.b32.xlu0 %v2683, 40
        %v3372 = vpop.permute.xlu0 %3371
        %3373 = vrot.lane.b32.xlu0 %v2684, 40
        %v3374 = vpop.permute.xlu0 %3373
        %3375 = vrot.lane.b32.xlu0 %v2685, 40
        %v3376 = vpop.permute.xlu0 %3375
        %3377 = vrot.lane.b32.xlu0 %v2686, 40
        %v3378 = vpop.permute.xlu0 %3377
        %3379 = vrot.lane.b32.xlu0 %v2687, 40
        %v3380 = vpop.permute.xlu0 %3379
        %3381 = vrot.lane.b32.xlu0 %v2688, 40
        %v3382 = vpop.permute.xlu0 %3381
        %3383 = vrot.lane.b32.xlu0 %v2689, 40
        %v3384 = vpop.permute.xlu0 %3383
        %3385 = vrot.lane.b32.xlu0 %v2690, 40
        %v3386 = vpop.permute.xlu0 %3385
        %3387 = vrot.lane.b32.xlu0 %v2691, 40
        %v3388 = vpop.permute.xlu0 %3387
        %3389 = vrot.lane.b32.xlu0 %v2692, 40
        %v3390 = vpop.permute.xlu0 %3389
        %3391 = vrot.lane.b32.xlu0 %v2693, 40
        %v3392 = vpop.permute.xlu0 %3391
        %3393 = vrot.lane.b32.xlu0 %v2694, 40
        %v3394 = vpop.permute.xlu0 %3393
        %3395 = vrot.lane.b32.xlu0 %v2695, 40
        %v3396 = vpop.permute.xlu0 %3395
        %3397 = vrot.lane.b32.xlu0 %v2696, 40
        %v3398 = vpop.permute.xlu0 %3397
        %3399 = vrot.lane.b32.xlu0 %v2697, 40
        %v3400 = vpop.permute.xlu0 %3399
        %3401 = vrot.lane.b32.xlu0 %v2698, 40
        %v3402 = vpop.permute.xlu0 %3401
        %3403 = vrot.lane.b32.xlu0 %v2699, 40
        %v3404 = vpop.permute.xlu0 %3403
        %3469 = vrot.lane.b32.xlu0 %v2701, 48
        %v3470 = vpop.permute.xlu0 %3469
        %3471 = vrot.lane.b32.xlu0 %v2702, 48
        %v3472 = vpop.permute.xlu0 %3471
        %3473 = vrot.lane.b32.xlu0 %v2703, 48
        %v3474 = vpop.permute.xlu0 %3473
        %3475 = vrot.lane.b32.xlu0 %v2704, 48
        %v3476 = vpop.permute.xlu0 %3475
        %3477 = vrot.lane.b32.xlu0 %v2705, 48
        %v3478 = vpop.permute.xlu0 %3477
        %3479 = vrot.lane.b32.xlu0 %v2706, 48
        %v3480 = vpop.permute.xlu0 %3479
        %3481 = vrot.lane.b32.xlu0 %v2707, 48
        %v3482 = vpop.permute.xlu0 %3481
        %3483 = vrot.lane.b32.xlu0 %v2708, 48
        %v3484 = vpop.permute.xlu0 %3483
        %3485 = vrot.lane.b32.xlu0 %v2709, 48
        %v3486 = vpop.permute.xlu0 %3485
        %3487 = vrot.lane.b32.xlu0 %v2710, 48
        %v3488 = vpop.permute.xlu0 %3487
        %3489 = vrot.lane.b32.xlu0 %v2711, 48
        %v3490 = vpop.permute.xlu0 %3489
        %3491 = vrot.lane.b32.xlu0 %v2712, 48
        %v3492 = vpop.permute.xlu0 %3491
        %3493 = vrot.lane.b32.xlu0 %v2713, 48
        %v3494 = vpop.permute.xlu0 %3493
        %3495 = vrot.lane.b32.xlu0 %v2714, 48
        %v3496 = vpop.permute.xlu0 %3495
        %3497 = vrot.lane.b32.xlu0 %v2715, 48
        %v3498 = vpop.permute.xlu0 %3497
        %3499 = vrot.lane.b32.xlu0 %v2716, 48
        %v3500 = vpop.permute.xlu0 %3499
        %3501 = vrot.lane.b32.xlu0 %v2717, 48
        %v3502 = vpop.permute.xlu0 %3501
        %3503 = vrot.lane.b32.xlu0 %v2718, 48
        %v3504 = vpop.permute.xlu0 %3503
        %3505 = vrot.lane.b32.xlu0 %v2719, 48
        %v3506 = vpop.permute.xlu0 %3505
        %3507 = vrot.lane.b32.xlu0 %v2720, 48
        %v3508 = vpop.permute.xlu0 %3507
        %3509 = vrot.lane.b32.xlu0 %v2721, 48
        %v3510 = vpop.permute.xlu0 %3509
        %3511 = vrot.lane.b32.xlu0 %v2722, 48
        %v3512 = vpop.permute.xlu0 %3511
        %3513 = vrot.lane.b32.xlu0 %v2723, 48
        %v3514 = vpop.permute.xlu0 %3513
        %3515 = vrot.lane.b32.xlu0 %v2724, 48
        %v3516 = vpop.permute.xlu0 %3515
        %3517 = vrot.lane.b32.xlu0 %v2725, 48
        %v3518 = vpop.permute.xlu0 %3517
        %3519 = vrot.lane.b32.xlu0 %v2726, 48
        %v3520 = vpop.permute.xlu0 %3519
        %3521 = vrot.lane.b32.xlu0 %v2727, 48
        %v3522 = vpop.permute.xlu0 %3521
        %3523 = vrot.lane.b32.xlu0 %v2728, 48
        %v3524 = vpop.permute.xlu0 %3523
        %3525 = vrot.lane.b32.xlu0 %v2729, 48
        %v3526 = vpop.permute.xlu0 %3525
        %3527 = vrot.lane.b32.xlu0 %v2730, 48
        %v3528 = vpop.permute.xlu0 %3527
        %3529 = vrot.lane.b32.xlu0 %v2731, 48
        %v3530 = vpop.permute.xlu0 %3529
        %3531 = vrot.lane.b32.xlu0 %v2732, 48
        %v3532 = vpop.permute.xlu0 %3531
        %3597 = vrot.lane.b32.xlu0 %v2733, 56
        %v3598 = vpop.permute.xlu0 %3597
        %3599 = vrot.lane.b32.xlu0 %v2734, 56
        %v3600 = vpop.permute.xlu0 %3599
        %3601 = vrot.lane.b32.xlu0 %v2735, 56
        %v3602 = vpop.permute.xlu0 %3601
        %3603 = vrot.lane.b32.xlu0 %v2736, 56
        %v3604 = vpop.permute.xlu0 %3603
        %3605 = vrot.lane.b32.xlu0 %v2737, 56
        %v3606 = vpop.permute.xlu0 %3605
        %3607 = vrot.lane.b32.xlu0 %v2738, 56
        %v3608 = vpop.permute.xlu0 %3607
        %3609 = vrot.lane.b32.xlu0 %v2739, 56
        %v3610 = vpop.permute.xlu0 %3609
        %3611 = vrot.lane.b32.xlu0 %v2740, 56
        %v3612 = vpop.permute.xlu0 %3611
        %3613 = vrot.lane.b32.xlu0 %v2741, 56
        %v3614 = vpop.permute.xlu0 %3613
        %3615 = vrot.lane.b32.xlu0 %v2742, 56
        %v3616 = vpop.permute.xlu0 %3615
        %3617 = vrot.lane.b32.xlu0 %v2743, 56
        %v3618 = vpop.permute.xlu0 %3617
        %3619 = vrot.lane.b32.xlu0 %v2744, 56
        %v3620 = vpop.permute.xlu0 %3619
        %3621 = vrot.lane.b32.xlu0 %v2745, 56
        %v3622 = vpop.permute.xlu0 %3621
        %3623 = vrot.lane.b32.xlu0 %v2746, 56
        %v3624 = vpop.permute.xlu0 %3623
        %3625 = vrot.lane.b32.xlu0 %v2747, 56
        %v3626 = vpop.permute.xlu0 %3625
        %3627 = vrot.lane.b32.xlu0 %v2748, 56
        %v3628 = vpop.permute.xlu0 %3627
        %3629 = vrot.lane.b32.xlu0 %v2749, 56
        %v3630 = vpop.permute.xlu0 %3629
        %3631 = vrot.lane.b32.xlu0 %v2750, 56
        %v3632 = vpop.permute.xlu0 %3631
        %3633 = vrot.lane.b32.xlu0 %v2751, 56
        %v3634 = vpop.permute.xlu0 %3633
        %3635 = vrot.lane.b32.xlu0 %v2752, 56
        %v3636 = vpop.permute.xlu0 %3635
        %3637 = vrot.lane.b32.xlu0 %v2753, 56
        %v3638 = vpop.permute.xlu0 %3637
        %3639 = vrot.lane.b32.xlu0 %v2754, 56
        %v3640 = vpop.permute.xlu0 %3639
        %3641 = vrot.lane.b32.xlu0 %v2755, 56
        %v3642 = vpop.permute.xlu0 %3641
        %3643 = vrot.lane.b32.xlu0 %v2756, 56
        %v3644 = vpop.permute.xlu0 %3643
        %3645 = vrot.lane.b32.xlu0 %v2757, 56
        %v3646 = vpop.permute.xlu0 %3645
        %3647 = vrot.lane.b32.xlu0 %v2758, 56
        %v3648 = vpop.permute.xlu0 %3647
        %3649 = vrot.lane.b32.xlu0 %v2759, 56
        %v3650 = vpop.permute.xlu0 %3649
        %3651 = vrot.lane.b32.xlu0 %v2760, 56
        %v3652 = vpop.permute.xlu0 %3651
        %3653 = vrot.lane.b32.xlu0 %v2761, 56
        %v3654 = vpop.permute.xlu0 %3653
        %3655 = vrot.lane.b32.xlu0 %v2762, 56
        %v3656 = vpop.permute.xlu0 %3655
        %3657 = vrot.lane.b32.xlu0 %v2763, 56
        %v3658 = vpop.permute.xlu0 %3657
        %3659 = vrot.lane.b32.xlu0 %v2764, 56
        %v3660 = vpop.permute.xlu0 %3659
        %3725 = vrot.lane.b32.xlu0 %v2765, 64
        %v3726 = vpop.permute.xlu0 %3725
        %3727 = vrot.lane.b32.xlu0 %v2766, 64
        %v3728 = vpop.permute.xlu0 %3727
        %3729 = vrot.lane.b32.xlu0 %v2767, 64
        %v3730 = vpop.permute.xlu0 %3729
        %3731 = vrot.lane.b32.xlu0 %v2768, 64
        %v3732 = vpop.permute.xlu0 %3731
        %3733 = vrot.lane.b32.xlu0 %v2769, 64
        %v3734 = vpop.permute.xlu0 %3733
        %3735 = vrot.lane.b32.xlu0 %v2770, 64
        %v3736 = vpop.permute.xlu0 %3735
        %3737 = vrot.lane.b32.xlu0 %v2771, 64
        %v3738 = vpop.permute.xlu0 %3737
        %3739 = vrot.lane.b32.xlu0 %v2772, 64
        %v3740 = vpop.permute.xlu0 %3739
        %3741 = vrot.lane.b32.xlu0 %v2773, 64
        %v3742 = vpop.permute.xlu0 %3741
        %3743 = vrot.lane.b32.xlu0 %v2774, 64
        %v3744 = vpop.permute.xlu0 %3743
        %3745 = vrot.lane.b32.xlu0 %v2775, 64
        %v3746 = vpop.permute.xlu0 %3745
        %3747 = vrot.lane.b32.xlu0 %v2776, 64
        %v3748 = vpop.permute.xlu0 %3747
        %3749 = vrot.lane.b32.xlu0 %v2777, 64
        %v3750 = vpop.permute.xlu0 %3749
        %3751 = vrot.lane.b32.xlu0 %v2778, 64
        %v3752 = vpop.permute.xlu0 %3751
        %3753 = vrot.lane.b32.xlu0 %v2779, 64
        %v3754 = vpop.permute.xlu0 %3753
        %3755 = vrot.lane.b32.xlu0 %v2780, 64
        %v3756 = vpop.permute.xlu0 %3755
        %3757 = vrot.lane.b32.xlu0 %v2781, 64
        %v3758 = vpop.permute.xlu0 %3757
        %3759 = vrot.lane.b32.xlu0 %v2782, 64
        %v3760 = vpop.permute.xlu0 %3759
        %3761 = vrot.lane.b32.xlu0 %v2783, 64
        %v3762 = vpop.permute.xlu0 %3761
        %3763 = vrot.lane.b32.xlu0 %v2784, 64
        %v3764 = vpop.permute.xlu0 %3763
        %3765 = vrot.lane.b32.xlu0 %v2785, 64
        %v3766 = vpop.permute.xlu0 %3765
        %3767 = vrot.lane.b32.xlu0 %v2786, 64
        %v3768 = vpop.permute.xlu0 %3767
        %3769 = vrot.lane.b32.xlu0 %v2787, 64
        %v3770 = vpop.permute.xlu0 %3769
        %3771 = vrot.lane.b32.xlu0 %v2788, 64
        %v3772 = vpop.permute.xlu0 %3771
        %3773 = vrot.lane.b32.xlu0 %v2789, 64
        %v3774 = vpop.permute.xlu0 %3773
        %3775 = vrot.lane.b32.xlu0 %v2790, 64
        %v3776 = vpop.permute.xlu0 %3775
        %3777 = vrot.lane.b32.xlu0 %v2791, 64
        %v3778 = vpop.permute.xlu0 %3777
        %3779 = vrot.lane.b32.xlu0 %v2792, 64
        %v3780 = vpop.permute.xlu0 %3779
        %3781 = vrot.lane.b32.xlu0 %v2793, 64
        %v3782 = vpop.permute.xlu0 %3781
        %3783 = vrot.lane.b32.xlu0 %v2794, 64
        %v3784 = vpop.permute.xlu0 %3783
        %3785 = vrot.lane.b32.xlu0 %v2795, 64
        %v3786 = vpop.permute.xlu0 %3785
        %3787 = vrot.lane.b32.xlu0 %v2796, 64
        %v3788 = vpop.permute.xlu0 %3787
        %v3821 = vsel %vm1681, %v2508, %v2830
        %v3822 = vsel %vm1681, %v2509, %v2832
        %v3823 = vsel %vm1681, %v2510, %v2834
        %v3824 = vsel %vm1681, %v2511, %v2836
        %v3825 = vsel %vm1681, %v2512, %v2838
        %v3826 = vsel %vm1681, %v2513, %v2840
        %v3827 = vsel %vm1681, %v2514, %v2842
        %v3828 = vsel %vm1681, %v2515, %v2844
        %v3829 = vsel %vm1681, %v2516, %v2846
        %v3830 = vsel %vm1681, %v2517, %v2848
        %v3831 = vsel %vm1681, %v2518, %v2850
        %v3832 = vsel %vm1681, %v2519, %v2852
        %v3833 = vsel %vm1681, %v2520, %v2854
        %v3834 = vsel %vm1681, %v2521, %v2856
        %v3835 = vsel %vm1681, %v2522, %v2858
        %v3836 = vsel %vm1681, %v2523, %v2860
        %v3837 = vsel %vm1681, %v2524, %v2862
        %v3838 = vsel %vm1681, %v2525, %v2864
        %v3839 = vsel %vm1681, %v2526, %v2866
        %v3840 = vsel %vm1681, %v2527, %v2868
        %v3841 = vsel %vm1681, %v2528, %v2870
        %v3842 = vsel %vm1681, %v2529, %v2872
        %v3843 = vsel %vm1681, %v2530, %v2874
        %v3844 = vsel %vm1681, %v2531, %v2876
        %v3845 = vsel %vm1681, %v2532, %v2878
        %v3846 = vsel %vm1681, %v2533, %v2880
        %v3847 = vsel %vm1681, %v2534, %v2882
        %v3848 = vsel %vm1681, %v2535, %v2884
        %v3849 = vsel %vm1681, %v2536, %v2886
        %v3850 = vsel %vm1681, %v2537, %v2888
        %v3851 = vsel %vm1681, %v2538, %v2890
        %v3852 = vsel %vm1681, %v2539, %v2892
        %v3853 = vsel %vm1747, %v3821, %v2958
        %v3854 = vsel %vm1747, %v3822, %v2960
        %v3855 = vsel %vm1747, %v3823, %v2962
        %v3856 = vsel %vm1747, %v3824, %v2964
        %v3857 = vsel %vm1747, %v3825, %v2966
        %v3858 = vsel %vm1747, %v3826, %v2968
        %v3859 = vsel %vm1747, %v3827, %v2970
        %v3860 = vsel %vm1747, %v3828, %v2972
        %v3861 = vsel %vm1747, %v3829, %v2974
        %v3862 = vsel %vm1747, %v3830, %v2976
        %v3863 = vsel %vm1747, %v3831, %v2978
        %v3864 = vsel %vm1747, %v3832, %v2980
        %v3865 = vsel %vm1747, %v3833, %v2982
        %v3866 = vsel %vm1747, %v3834, %v2984
        %v3867 = vsel %vm1747, %v3835, %v2986
        %v3868 = vsel %vm1747, %v3836, %v2988
        %v3869 = vsel %vm1747, %v3837, %v2990
        %v3870 = vsel %vm1747, %v3838, %v2992
        %v3871 = vsel %vm1747, %v3839, %v2994
        %v3872 = vsel %vm1747, %v3840, %v2996
        %v3873 = vsel %vm1747, %v3841, %v2998
        %v3874 = vsel %vm1747, %v3842, %v3000
        %v3875 = vsel %vm1747, %v3843, %v3002
        %v3876 = vsel %vm1747, %v3844, %v3004
        %v3877 = vsel %vm1747, %v3845, %v3006
        %v3878 = vsel %vm1747, %v3846, %v3008
        %v3879 = vsel %vm1747, %v3847, %v3010
        %v3880 = vsel %vm1747, %v3848, %v3012
        %v3881 = vsel %vm1747, %v3849, %v3014
        %v3882 = vsel %vm1747, %v3850, %v3016
        %v3883 = vsel %vm1747, %v3851, %v3018
        %v3884 = vsel %vm1747, %v3852, %v3020
        %v3885 = vsel %vm1813, %v3853, %v3086
        %v3886 = vsel %vm1813, %v3854, %v3088
        %v3887 = vsel %vm1813, %v3855, %v3090
        %v3888 = vsel %vm1813, %v3856, %v3092
        %v3889 = vsel %vm1813, %v3857, %v3094
        %v3890 = vsel %vm1813, %v3858, %v3096
        %v3891 = vsel %vm1813, %v3859, %v3098
        %v3892 = vsel %vm1813, %v3860, %v3100
        %v3893 = vsel %vm1813, %v3861, %v3102
        %v3894 = vsel %vm1813, %v3862, %v3104
        %v3895 = vsel %vm1813, %v3863, %v3106
        %v3896 = vsel %vm1813, %v3864, %v3108
        %v3897 = vsel %vm1813, %v3865, %v3110
        %v3898 = vsel %vm1813, %v3866, %v3112
        %v3899 = vsel %vm1813, %v3867, %v3114
        %v3900 = vsel %vm1813, %v3868, %v3116
        %v3901 = vsel %vm1813, %v3869, %v3118
        %v3902 = vsel %vm1813, %v3870, %v3120
        %v3903 = vsel %vm1813, %v3871, %v3122
        %v3904 = vsel %vm1813, %v3872, %v3124
        %v3905 = vsel %vm1813, %v3873, %v3126
        %v3906 = vsel %vm1813, %v3874, %v3128
        %v3907 = vsel %vm1813, %v3875, %v3130
        %v3908 = vsel %vm1813, %v3876, %v3132
        %v3909 = vsel %vm1813, %v3877, %v3134
        %v3910 = vsel %vm1813, %v3878, %v3136
        %v3911 = vsel %vm1813, %v3879, %v3138
        %v3912 = vsel %vm1813, %v3880, %v3140
        %v3913 = vsel %vm1813, %v3881, %v3142
        %v3914 = vsel %vm1813, %v3882, %v3144
        %v3915 = vsel %vm1813, %v3883, %v3146
        %v3916 = vsel %vm1813, %v3884, %v3148
        %v3917 = vsel %vm1879, %v3885, %v3214
        %v3918 = vsel %vm1879, %v3886, %v3216
        %v3919 = vsel %vm1879, %v3887, %v3218
        %v3920 = vsel %vm1879, %v3888, %v3220
        %v3921 = vsel %vm1879, %v3889, %v3222
        %v3922 = vsel %vm1879, %v3890, %v3224
        %v3923 = vsel %vm1879, %v3891, %v3226
        %v3924 = vsel %vm1879, %v3892, %v3228
        %v3925 = vsel %vm1879, %v3893, %v3230
        %v3926 = vsel %vm1879, %v3894, %v3232
        %v3927 = vsel %vm1879, %v3895, %v3234
        %v3928 = vsel %vm1879, %v3896, %v3236
        %v3929 = vsel %vm1879, %v3897, %v3238
        %v3930 = vsel %vm1879, %v3898, %v3240
        %v3931 = vsel %vm1879, %v3899, %v3242
        %v3932 = vsel %vm1879, %v3900, %v3244
        %v3933 = vsel %vm1879, %v3901, %v3246
        %v3934 = vsel %vm1879, %v3902, %v3248
        %v3935 = vsel %vm1879, %v3903, %v3250
        %v3936 = vsel %vm1879, %v3904, %v3252
        %v3937 = vsel %vm1879, %v3905, %v3254
        %v3938 = vsel %vm1879, %v3906, %v3256
        %v3939 = vsel %vm1879, %v3907, %v3258
        %v3940 = vsel %vm1879, %v3908, %v3260
        %v3941 = vsel %vm1879, %v3909, %v3262
        %v3942 = vsel %vm1879, %v3910, %v3264
        %v3943 = vsel %vm1879, %v3911, %v3266
        %v3944 = vsel %vm1879, %v3912, %v3268
        %v3945 = vsel %vm1879, %v3913, %v3270
        %v3946 = vsel %vm1879, %v3914, %v3272
        %v3947 = vsel %vm1879, %v3915, %v3274
        %v3948 = vsel %vm1879, %v3916, %v3276
        %vm3949 = vcmask 326656
        %v3950 = vsel %vm3949, %v3917, %v3342
        %v3951 = vsel %vm3949, %v3918, %v3344
        %v3952 = vsel %vm3949, %v3919, %v3346
        %v3953 = vsel %vm3949, %v3920, %v3348
        %v3954 = vsel %vm3949, %v3921, %v3350
        %v3955 = vsel %vm3949, %v3922, %v3352
        %v3956 = vsel %vm3949, %v3923, %v3354
        %v3957 = vsel %vm3949, %v3924, %v3356
        %v3958 = vsel %vm3949, %v3925, %v3358
        %v3959 = vsel %vm3949, %v3926, %v3360
        %v3960 = vsel %vm3949, %v3927, %v3362
        %v3961 = vsel %vm3949, %v3928, %v3364
        %v3962 = vsel %vm3949, %v3929, %v3366
        %v3963 = vsel %vm3949, %v3930, %v3368
        %v3964 = vsel %vm3949, %v3931, %v3370
        %v3965 = vsel %vm3949, %v3932, %v3372
        %v3966 = vsel %vm3949, %v3933, %v3374
        %v3967 = vsel %vm3949, %v3934, %v3376
        %v3968 = vsel %vm3949, %v3935, %v3378
        %v3969 = vsel %vm3949, %v3936, %v3380
        %v3970 = vsel %vm3949, %v3937, %v3382
        %v3971 = vsel %vm3949, %v3938, %v3384
        %v3972 = vsel %vm3949, %v3939, %v3386
        %v3973 = vsel %vm3949, %v3940, %v3388
        %v3974 = vsel %vm3949, %v3941, %v3390
        %v3975 = vsel %vm3949, %v3942, %v3392
        %v3976 = vsel %vm3949, %v3943, %v3394
        %v3977 = vsel %vm3949, %v3944, %v3396
        %v3978 = vsel %vm3949, %v3945, %v3398
        %v3979 = vsel %vm3949, %v3946, %v3400
        %v3980 = vsel %vm3949, %v3947, %v3402
        %v3981 = vsel %vm3949, %v3948, %v3404
        %vm3982 = vcmask 392192
        %v3983 = vsel %vm3982, %v3950, %v3470
        %v3984 = vsel %vm3982, %v3951, %v3472
        %v3985 = vsel %vm3982, %v3952, %v3474
        %v3986 = vsel %vm3982, %v3953, %v3476
        %v3987 = vsel %vm3982, %v3954, %v3478
        %v3988 = vsel %vm3982, %v3955, %v3480
        %v3989 = vsel %vm3982, %v3956, %v3482
        %v3990 = vsel %vm3982, %v3957, %v3484
        %v3991 = vsel %vm3982, %v3958, %v3486
        %v3992 = vsel %vm3982, %v3959, %v3488
        %v3993 = vsel %vm3982, %v3960, %v3490
        %v3994 = vsel %vm3982, %v3961, %v3492
        %v3995 = vsel %vm3982, %v3962, %v3494
        %v3996 = vsel %vm3982, %v3963, %v3496
        %v3997 = vsel %vm3982, %v3964, %v3498
        %v3998 = vsel %vm3982, %v3965, %v3500
        %v3999 = vsel %vm3982, %v3966, %v3502
        %v4000 = vsel %vm3982, %v3967, %v3504
        %v4001 = vsel %vm3982, %v3968, %v3506
        %v4002 = vsel %vm3982, %v3969, %v3508
        %v4003 = vsel %vm3982, %v3970, %v3510
        %v4004 = vsel %vm3982, %v3971, %v3512
        %v4005 = vsel %vm3982, %v3972, %v3514
        %v4006 = vsel %vm3982, %v3973, %v3516
        %v4007 = vsel %vm3982, %v3974, %v3518
        %v4008 = vsel %vm3982, %v3975, %v3520
        %v4009 = vsel %vm3982, %v3976, %v3522
        %v4010 = vsel %vm3982, %v3977, %v3524
        %v4011 = vsel %vm3982, %v3978, %v3526
        %v4012 = vsel %vm3982, %v3979, %v3528
        %v4013 = vsel %vm3982, %v3980, %v3530
        %v4014 = vsel %vm3982, %v3981, %v3532
        %vm4015 = vcmask 457728
        %v4016 = vsel %vm4015, %v3983, %v3598
        %v4017 = vsel %vm4015, %v3984, %v3600
        %v4018 = vsel %vm4015, %v3985, %v3602
        %v4019 = vsel %vm4015, %v3986, %v3604
        %v4020 = vsel %vm4015, %v3987, %v3606
        %v4021 = vsel %vm4015, %v3988, %v3608
        %v4022 = vsel %vm4015, %v3989, %v3610
        %v4023 = vsel %vm4015, %v3990, %v3612
        %v4024 = vsel %vm4015, %v3991, %v3614
        %v4025 = vsel %vm4015, %v3992, %v3616
        %v4026 = vsel %vm4015, %v3993, %v3618
        %v4027 = vsel %vm4015, %v3994, %v3620
        %v4028 = vsel %vm4015, %v3995, %v3622
        %v4029 = vsel %vm4015, %v3996, %v3624
        %v4030 = vsel %vm4015, %v3997, %v3626
        %v4031 = vsel %vm4015, %v3998, %v3628
        %v4032 = vsel %vm4015, %v3999, %v3630
        %v4033 = vsel %vm4015, %v4000, %v3632
        %v4034 = vsel %vm4015, %v4001, %v3634
        %v4035 = vsel %vm4015, %v4002, %v3636
        %v4036 = vsel %vm4015, %v4003, %v3638
        %v4037 = vsel %vm4015, %v4004, %v3640
        %v4038 = vsel %vm4015, %v4005, %v3642
        %v4039 = vsel %vm4015, %v4006, %v3644
        %v4040 = vsel %vm4015, %v4007, %v3646
        %v4041 = vsel %vm4015, %v4008, %v3648
        %v4042 = vsel %vm4015, %v4009, %v3650
        %v4043 = vsel %vm4015, %v4010, %v3652
        %v4044 = vsel %vm4015, %v4011, %v3654
        %v4045 = vsel %vm4015, %v4012, %v3656
        %v4046 = vsel %vm4015, %v4013, %v3658
        %v4047 = vsel %vm4015, %v4014, %v3660
        %vm4048 = vcmask 523264
        %v4049 = vsel %vm4048, %v4016, %v3726
        %v4050 = vsel %vm4048, %v4017, %v3728
        %v4051 = vsel %vm4048, %v4018, %v3730
        %v4052 = vsel %vm4048, %v4019, %v3732
        %v4053 = vsel %vm4048, %v4020, %v3734
        %v4054 = vsel %vm4048, %v4021, %v3736
        %v4055 = vsel %vm4048, %v4022, %v3738
        %v4056 = vsel %vm4048, %v4023, %v3740
        %v4057 = vsel %vm4048, %v4024, %v3742
        %v4058 = vsel %vm4048, %v4025, %v3744
        %v4059 = vsel %vm4048, %v4026, %v3746
        %v4060 = vsel %vm4048, %v4027, %v3748
        %v4061 = vsel %vm4048, %v4028, %v3750
        %v4062 = vsel %vm4048, %v4029, %v3752
        %v4063 = vsel %vm4048, %v4030, %v3754
        %v4064 = vsel %vm4048, %v4031, %v3756
        %v4065 = vsel %vm4048, %v4032, %v3758
        %v4066 = vsel %vm4048, %v4033, %v3760
        %v4067 = vsel %vm4048, %v4034, %v3762
        %v4068 = vsel %vm4048, %v4035, %v3764
        %v4069 = vsel %vm4048, %v4036, %v3766
        %v4070 = vsel %vm4048, %v4037, %v3768
        %v4071 = vsel %vm4048, %v4038, %v3770
        %v4072 = vsel %vm4048, %v4039, %v3772
        %v4073 = vsel %vm4048, %v4040, %v3774
        %v4074 = vsel %vm4048, %v4041, %v3776
        %v4075 = vsel %vm4048, %v4042, %v3778
        %v4076 = vsel %vm4048, %v4043, %v3780
        %v4077 = vsel %vm4048, %v4044, %v3782
        %v4078 = vsel %vm4048, %v4045, %v3784
        %v4079 = vsel %vm4048, %v4046, %v3786
        %v4080 = vsel %vm4048, %v4047, %v3788
        %v4081 = vpack.c.bf16 %v4050, %v4049
        %v4082 = vpack.c.bf16 %v4052, %v4051
        %v4083 = vpack.c.bf16 %v4054, %v4053
        %v4084 = vpack.c.bf16 %v4056, %v4055
        %v4085 = vpack.c.bf16 %v4058, %v4057
        %v4086 = vpack.c.bf16 %v4060, %v4059
        %v4087 = vpack.c.bf16 %v4062, %v4061
        %v4088 = vpack.c.bf16 %v4064, %v4063
        %v4089 = vpack.c.bf16 %v4066, %v4065
        %v4090 = vpack.c.bf16 %v4068, %v4067
        %v4091 = vpack.c.bf16 %v4070, %v4069
        %v4092 = vpack.c.bf16 %v4072, %v4071
        %v4093 = vpack.c.bf16 %v4074, %v4073
        %v4094 = vpack.c.bf16 %v4076, %v4075
        %v4095 = vpack.c.bf16 %v4078, %v4077
        %v4096 = vpack.c.bf16 %v4080, %v4079
        %v4097 = vld [vmem:[%s2] sm:$0xf]
        %v4098 = vld [vmem:[%s2 + $0x4] sm:$0xf]
        %v4099 = vld [vmem:[%s2 + $0x8] sm:$0xf]
        %v4100 = vld [vmem:[%s2 + $0xc] sm:$0xf]
        %v4101 = vld [vmem:[%s2 + $0x10] sm:$0xf]
        %v4102 = vld [vmem:[%s2 + $0x14] sm:$0xf]
        %v4103 = vld [vmem:[%s2 + $0x18] sm:$0xf]
        %v4104 = vld [vmem:[%s2 + $0x1c] sm:$0xf]
        %v4105 = vld [vmem:[%s2 + $0x20] sm:$0xf]
        %v4115 = vunpack.c.l.b16 %v4097
        %v4116 = vunpack.c.l.b16 %v4098
        %v4117 = vunpack.c.l.b16 %v4099
        %v4118 = vunpack.c.l.b16 %v4100
        %v4119 = vunpack.c.l.b16 %v4101
        %v4120 = vunpack.c.l.b16 %v4102
        %v4121 = vunpack.c.l.b16 %v4103
        %v4122 = vunpack.c.l.b16 %v4104
        %v4123 = vunpack.c.l.b16 %v4105
        %v4124 = vpack.c.b16 %v4116, %v4115
        %v4125 = vpack.c.b16 %v4118, %v4117
        %v4126 = vpack.c.b16 %v4120, %v4119
        %v4127 = vpack.c.b16 %v4122, %v4121
        %v4128 = vpack.c.b16 %v4123, %v4123
        %vm4133 = vcmask 588800
        %v4135 = vsel %vm4133, %v4081, 0
        %v4138 = vsel %vm4133, %v4082, 0
        %v4141 = vsel %vm4133, %v4083, 0
        %v4144 = vsel %vm4133, %v4084, 0
        %v4147 = vsel %vm4133, %v4085, 0
        %v4150 = vsel %vm4133, %v4086, 0
        %v4153 = vsel %vm4133, %v4087, 0
        %v4156 = vsel %vm4133, %v4088, 0
        %v4159 = vsel %vm4133, %v4089, 0
        %v4162 = vsel %vm4133, %v4090, 0
        %v4165 = vsel %vm4133, %v4091, 0
        %v4168 = vsel %vm4133, %v4092, 0
        %v4171 = vsel %vm4133, %v4093, 0
        %v4174 = vsel %vm4133, %v4094, 0
        %v4177 = vsel %vm4133, %v4095, 0
        %v4180 = vsel %vm4133, %v4096, 0
        %vm4182 = vcmask 1043456
        %v4184 = vsel %vm4182, %v4128, 0
        %4186 = vmatprep.subr.bf16.mxu0 0
        %4187 = vmatpush1.bf16.msra.mxu0 0
        %4188 = vmatprep.subr.bf16.mxu0 0
        %4189 = vmatpush1.bf16.msra.mxu0 0
        %4190 = vmatprep.subr.bf16.mxu0 0
        %4191 = vmatpush1.bf16.msra.mxu0 0
        %4192 = vmatprep.subr.bf16.mxu0 0
        %4193 = vmatpush1.bf16.msra.mxu0 %v4184
        %4194 = vmatprep.subr.bf16.mxu0 0
        %4195 = vmatpush1.bf16.msra.mxu0 %v4127
        %4196 = vmatprep.subr.bf16.mxu0 0
        %4197 = vmatpush1.bf16.msra.mxu0 %v4126
        %4198 = vmatprep.subr.bf16.mxu0 0
        %4199 = vmatpush1.bf16.msra.mxu0 %v4125
        %4200 = vmatprep.subr.bf16.mxu0 0
        %4201 = vmatpush1.bf16.msra.mxu0 %v4124
        %4202 = vmatprep.subr.bf16.mxu0 0
        %4203 = vmatpush2.bf16.msra.mxu0 0
        %4204 = vmatprep.subr.bf16.mxu0 0
        %4205 = vmatpush2.bf16.msra.mxu0 0
        %4206 = vmatprep.subr.bf16.mxu0 0
        %4207 = vmatpush2.bf16.msra.mxu0 0
        %4208 = vmatprep.subr.bf16.mxu0 0
        %4209 = vmatpush2.bf16.msra.mxu0 0
        %4210 = vmatprep.subr.bf16.mxu0 0
        %4211 = vmatpush2.bf16.msra.mxu0 0
        %4212 = vmatprep.subr.bf16.mxu0 0
        %4213 = vmatpush2.bf16.msra.mxu0 0
        %4214 = vmatprep.subr.bf16.mxu0 0
        %4215 = vmatpush2.bf16.msra.mxu0 0
        %4216 = vmatprep.subr.bf16.mxu0 0
        %4217 = vmatpush2.bf16.msra.mxu0 0
        %4218 = vmatprep.mubr.bf16.mxu0 0
        %4219 = vmatmul.mubr.bf16.gmra.mxu0 %v4135
        %v4220 = vpop.f32.mrf.mxu0
        %v4221 = vadd.f32 0.0, %v4220
        %v4222 = vpop.f32.mrf.mxu0
        %v4223 = vpop.f32.mrf.mxu0
        %v4224 = vadd.f32 0.0, %v4223
        %v4225 = vpop.f32.mrf.mxu0
        %4226 = vmatprep.mubr.bf16.mxu0 0
        %4227 = vmatmul.mubr.bf16.gmra.mxu0 %v4138
        %v4228 = vpop.f32.mrf.mxu0
        %v4229 = vadd.f32 0.0, %v4228
        %v4230 = vpop.f32.mrf.mxu0
        %v4231 = vpop.f32.mrf.mxu0
        %v4232 = vadd.f32 0.0, %v4231
        %v4233 = vpop.f32.mrf.mxu0
        %4234 = vmatprep.mubr.bf16.mxu0 0
        %4235 = vmatmul.mubr.bf16.gmra.mxu0 %v4141
        %v4236 = vpop.f32.mrf.mxu0
        %v4237 = vadd.f32 0.0, %v4236
        %v4238 = vpop.f32.mrf.mxu0
        %v4239 = vpop.f32.mrf.mxu0
        %v4240 = vadd.f32 0.0, %v4239
        %v4241 = vpop.f32.mrf.mxu0
        %4242 = vmatprep.mubr.bf16.mxu0 0
        %4243 = vmatmul.mubr.bf16.gmra.mxu0 %v4144
        %v4244 = vpop.f32.mrf.mxu0
        %v4245 = vadd.f32 0.0, %v4244
        %v4246 = vpop.f32.mrf.mxu0
        %v4247 = vpop.f32.mrf.mxu0
        %v4248 = vadd.f32 0.0, %v4247
        %v4249 = vpop.f32.mrf.mxu0
        %4250 = vmatprep.mubr.bf16.mxu0 0
        %4251 = vmatmul.mubr.bf16.gmra.mxu0 %v4147
        %v4252 = vpop.f32.mrf.mxu0
        %v4253 = vadd.f32 0.0, %v4252
        %v4254 = vpop.f32.mrf.mxu0
        %v4255 = vpop.f32.mrf.mxu0
        %v4256 = vadd.f32 0.0, %v4255
        %v4257 = vpop.f32.mrf.mxu0
        %4258 = vmatprep.mubr.bf16.mxu0 0
        %4259 = vmatmul.mubr.bf16.gmra.mxu0 %v4150
        %v4260 = vpop.f32.mrf.mxu0
        %v4261 = vadd.f32 0.0, %v4260
        %v4262 = vpop.f32.mrf.mxu0
        %v4263 = vpop.f32.mrf.mxu0
        %v4264 = vadd.f32 0.0, %v4263
        %v4265 = vpop.f32.mrf.mxu0
        %4266 = vmatprep.mubr.bf16.mxu0 0
        %4267 = vmatmul.mubr.bf16.gmra.mxu0 %v4153
        %v4268 = vpop.f32.mrf.mxu0
        %v4269 = vadd.f32 0.0, %v4268
        %v4270 = vpop.f32.mrf.mxu0
        %v4271 = vpop.f32.mrf.mxu0
        %v4272 = vadd.f32 0.0, %v4271
        %v4273 = vpop.f32.mrf.mxu0
        %4274 = vmatprep.mubr.bf16.mxu0 0
        %4275 = vmatmul.mubr.bf16.gmra.mxu0 %v4156
        %v4276 = vpop.f32.mrf.mxu0
        %v4277 = vadd.f32 0.0, %v4276
        %v4278 = vpop.f32.mrf.mxu0
        %v4279 = vpop.f32.mrf.mxu0
        %v4280 = vadd.f32 0.0, %v4279
        %v4281 = vpop.f32.mrf.mxu0
        %4282 = vmatprep.mubr.bf16.mxu0 0
        %4283 = vmatmul.mubr.bf16.gmra.mxu0 %v4159
        %v4284 = vpop.f32.mrf.mxu0
        %v4285 = vadd.f32 0.0, %v4284
        %v4286 = vpop.f32.mrf.mxu0
        %v4287 = vpop.f32.mrf.mxu0
        %v4288 = vadd.f32 0.0, %v4287
        %v4289 = vpop.f32.mrf.mxu0
        %4290 = vmatprep.mubr.bf16.mxu0 0
        %4291 = vmatmul.mubr.bf16.gmra.mxu0 %v4162
        %v4292 = vpop.f32.mrf.mxu0
        %v4293 = vadd.f32 0.0, %v4292
        %v4294 = vpop.f32.mrf.mxu0
        %v4295 = vpop.f32.mrf.mxu0
        %v4296 = vadd.f32 0.0, %v4295
        %v4297 = vpop.f32.mrf.mxu0
        %4298 = vmatprep.mubr.bf16.mxu0 0
        %4299 = vmatmul.mubr.bf16.gmra.mxu0 %v4165
        %v4300 = vpop.f32.mrf.mxu0
        %v4301 = vadd.f32 0.0, %v4300
        %v4302 = vpop.f32.mrf.mxu0
        %v4303 = vpop.f32.mrf.mxu0
        %v4304 = vadd.f32 0.0, %v4303
        %v4305 = vpop.f32.mrf.mxu0
        %4306 = vmatprep.mubr.bf16.mxu0 0
        %4307 = vmatmul.mubr.bf16.gmra.mxu0 %v4168
        %v4308 = vpop.f32.mrf.mxu0
        %v4309 = vadd.f32 0.0, %v4308
        %v4310 = vpop.f32.mrf.mxu0
        %v4311 = vpop.f32.mrf.mxu0
        %v4312 = vadd.f32 0.0, %v4311
        %v4313 = vpop.f32.mrf.mxu0
        %4314 = vmatprep.mubr.bf16.mxu0 0
        %4315 = vmatmul.mubr.bf16.gmra.mxu0 %v4171
        %v4316 = vpop.f32.mrf.mxu0
        %v4317 = vadd.f32 0.0, %v4316
        %v4318 = vpop.f32.mrf.mxu0
        %v4319 = vpop.f32.mrf.mxu0
        %v4320 = vadd.f32 0.0, %v4319
        %v4321 = vpop.f32.mrf.mxu0
        %4322 = vmatprep.mubr.bf16.mxu0 0
        %4323 = vmatmul.mubr.bf16.gmra.mxu0 %v4174
        %v4324 = vpop.f32.mrf.mxu0
        %v4325 = vadd.f32 0.0, %v4324
        %v4326 = vpop.f32.mrf.mxu0
        %v4327 = vpop.f32.mrf.mxu0
        %v4328 = vadd.f32 0.0, %v4327
        %v4329 = vpop.f32.mrf.mxu0
        %4330 = vmatprep.mubr.bf16.mxu0 0
        %4331 = vmatmul.mubr.bf16.gmra.mxu0 %v4177
        %v4332 = vpop.f32.mrf.mxu0
        %v4333 = vadd.f32 0.0, %v4332
        %v4334 = vpop.f32.mrf.mxu0
        %v4335 = vpop.f32.mrf.mxu0
        %v4336 = vadd.f32 0.0, %v4335
        %v4337 = vpop.f32.mrf.mxu0
        %4338 = vmatprep.mubr.bf16.mxu0 0
        %4339 = vmatmul.mubr.bf16.gmra.mxu0 %v4180
        %v4340 = vpop.f32.mrf.mxu0
        %v4341 = vadd.f32 0.0, %v4340
        %v4342 = vpop.f32.mrf.mxu0
        %v4343 = vpop.f32.mrf.mxu0
        %v4344 = vadd.f32 0.0, %v4343
        %v4345 = vpop.f32.mrf.mxu0
        %4346 = vdwg.mxu0
        %v4347 = vsel %vm1681, %v4221, 0.0
        %v4348 = vsel %vm1681, %v4224, 0.0
        %v4349 = vadd.f32 %v4347, %v4348
        %v4350 = vsel %vm1681, %v4229, 0.0
        %v4351 = vadd.f32 %v4349, %v4350
        %v4352 = vsel %vm1681, %v4232, 0.0
        %v4353 = vadd.f32 %v4351, %v4352
        %v4354 = vsel %vm1681, %v4237, 0.0
        %v4355 = vadd.f32 %v4353, %v4354
        %v4356 = vsel %vm1681, %v4240, 0.0
        %v4357 = vadd.f32 %v4355, %v4356
        %v4358 = vsel %vm1681, %v4245, 0.0
        %v4359 = vadd.f32 %v4357, %v4358
        %v4360 = vsel %vm1681, %v4248, 0.0
        %v4361 = vadd.f32 %v4359, %v4360
        %v4362 = vsel %vm1681, %v4253, 0.0
        %v4363 = vadd.f32 %v4361, %v4362
        %v4364 = vsel %vm1681, %v4256, 0.0
        %v4365 = vadd.f32 %v4363, %v4364
        %v4366 = vsel %vm1681, %v4261, 0.0
        %v4367 = vadd.f32 %v4365, %v4366
        %v4368 = vsel %vm1681, %v4264, 0.0
        %v4369 = vadd.f32 %v4367, %v4368
        %v4370 = vsel %vm1681, %v4269, 0.0
        %v4371 = vadd.f32 %v4369, %v4370
        %v4372 = vsel %vm1681, %v4272, 0.0
        %v4373 = vadd.f32 %v4371, %v4372
        %v4374 = vsel %vm1681, %v4277, 0.0
        %v4375 = vadd.f32 %v4373, %v4374
        %v4376 = vsel %vm1681, %v4280, 0.0
        %v4377 = vadd.f32 %v4375, %v4376
        %v4378 = vsel %vm1681, %v4285, 0.0
        %v4379 = vadd.f32 %v4377, %v4378
        %v4380 = vsel %vm1681, %v4288, 0.0
        %v4381 = vadd.f32 %v4379, %v4380
        %v4382 = vsel %vm1681, %v4293, 0.0
        %v4383 = vadd.f32 %v4381, %v4382
        %v4384 = vsel %vm1681, %v4296, 0.0
        %v4385 = vadd.f32 %v4383, %v4384
        %v4386 = vsel %vm1681, %v4301, 0.0
        %v4387 = vadd.f32 %v4385, %v4386
        %v4388 = vsel %vm1681, %v4304, 0.0
        %v4389 = vadd.f32 %v4387, %v4388
        %v4390 = vsel %vm1681, %v4309, 0.0
        %v4391 = vadd.f32 %v4389, %v4390
        %v4392 = vsel %vm1681, %v4312, 0.0
        %v4393 = vadd.f32 %v4391, %v4392
        %v4394 = vsel %vm1681, %v4317, 0.0
        %v4395 = vadd.f32 %v4393, %v4394
        %v4396 = vsel %vm1681, %v4320, 0.0
        %v4397 = vadd.f32 %v4395, %v4396
        %v4398 = vsel %vm1681, %v4325, 0.0
        %v4399 = vadd.f32 %v4397, %v4398
        %v4400 = vsel %vm1681, %v4328, 0.0
        %v4401 = vadd.f32 %v4399, %v4400
        %v4402 = vsel %vm1681, %v4333, 0.0
        %v4403 = vadd.f32 %v4401, %v4402
        %v4404 = vsel %vm1681, %v4336, 0.0
        %v4405 = vadd.f32 %v4403, %v4404
        %v4406 = vsel %vm1681, %v4341, 0.0
        %v4407 = vadd.f32 %v4405, %v4406
        %v4408 = vsel %vm1681, %v4344, 0.0
        %v4409 = vadd.f32 %v4407, %v4408
        %v4410 = vrot.slane %v4409, 4
        %v4411 = vadd.f32 %v4409, %v4410
        %v4412 = vrot.slane %v4411, 2
        %v4413 = vadd.f32 %v4411, %v4412
        %v4414 = vrot.slane %v4413, 1
        %v4415 = vadd.f32 %v4413, %v4414
        %v4416 = vmul.f32 %v4221, %v4221
        %v4417 = vmul.f32 %v4224, %v4224
        %v4418 = vmul.f32 %v4229, %v4229
        %v4419 = vmul.f32 %v4232, %v4232
        %v4420 = vmul.f32 %v4237, %v4237
        %v4421 = vmul.f32 %v4240, %v4240
        %v4422 = vmul.f32 %v4245, %v4245
        %v4423 = vmul.f32 %v4248, %v4248
        %v4424 = vmul.f32 %v4253, %v4253
        %v4425 = vmul.f32 %v4256, %v4256
        %v4426 = vmul.f32 %v4261, %v4261
        %v4427 = vmul.f32 %v4264, %v4264
        %v4428 = vmul.f32 %v4269, %v4269
        %v4429 = vmul.f32 %v4272, %v4272
        %v4430 = vmul.f32 %v4277, %v4277
        %v4431 = vmul.f32 %v4280, %v4280
        %v4432 = vmul.f32 %v4285, %v4285
        %v4433 = vmul.f32 %v4288, %v4288
        %v4434 = vmul.f32 %v4293, %v4293
        %v4435 = vmul.f32 %v4296, %v4296
        %v4436 = vmul.f32 %v4301, %v4301
        %v4437 = vmul.f32 %v4304, %v4304
        %v4438 = vmul.f32 %v4309, %v4309
        %v4439 = vmul.f32 %v4312, %v4312
        %v4440 = vmul.f32 %v4317, %v4317
        %v4441 = vmul.f32 %v4320, %v4320
        %v4442 = vmul.f32 %v4325, %v4325
        %v4443 = vmul.f32 %v4328, %v4328
        %v4444 = vmul.f32 %v4333, %v4333
        %v4445 = vmul.f32 %v4336, %v4336
        %v4446 = vmul.f32 %v4341, %v4341
        %v4447 = vmul.f32 %v4344, %v4344
        %v4448 = vsel %vm1681, %v4416, 0.0
        %v4449 = vsel %vm1681, %v4417, 0.0
        %v4450 = vadd.f32 %v4448, %v4449
        %v4451 = vsel %vm1681, %v4418, 0.0
        %v4452 = vadd.f32 %v4450, %v4451
        %v4453 = vsel %vm1681, %v4419, 0.0
        %v4454 = vadd.f32 %v4452, %v4453
        %v4455 = vsel %vm1681, %v4420, 0.0
        %v4456 = vadd.f32 %v4454, %v4455
        %v4457 = vsel %vm1681, %v4421, 0.0
        %v4458 = vadd.f32 %v4456, %v4457
        %v4459 = vsel %vm1681, %v4422, 0.0
        %v4460 = vadd.f32 %v4458, %v4459
        %v4461 = vsel %vm1681, %v4423, 0.0
        %v4462 = vadd.f32 %v4460, %v4461
        %v4463 = vsel %vm1681, %v4424, 0.0
        %v4464 = vadd.f32 %v4462, %v4463
        %v4465 = vsel %vm1681, %v4425, 0.0
        %v4466 = vadd.f32 %v4464, %v4465
        %v4467 = vsel %vm1681, %v4426, 0.0
        %v4468 = vadd.f32 %v4466, %v4467
        %v4469 = vsel %vm1681, %v4427, 0.0
        %v4470 = vadd.f32 %v4468, %v4469
        %v4471 = vsel %vm1681, %v4428, 0.0
        %v4472 = vadd.f32 %v4470, %v4471
        %v4473 = vsel %vm1681, %v4429, 0.0
        %v4474 = vadd.f32 %v4472, %v4473
        %v4475 = vsel %vm1681, %v4430, 0.0
        %v4476 = vadd.f32 %v4474, %v4475
        %v4477 = vsel %vm1681, %v4431, 0.0
        %v4478 = vadd.f32 %v4476, %v4477
        %v4479 = vsel %vm1681, %v4432, 0.0
        %v4480 = vadd.f32 %v4478, %v4479
        %v4481 = vsel %vm1681, %v4433, 0.0
        %v4482 = vadd.f32 %v4480, %v4481
        %v4483 = vsel %vm1681, %v4434, 0.0
        %v4484 = vadd.f32 %v4482, %v4483
        %v4485 = vsel %vm1681, %v4435, 0.0
        %v4486 = vadd.f32 %v4484, %v4485
        %v4487 = vsel %vm1681, %v4436, 0.0
        %v4488 = vadd.f32 %v4486, %v4487
        %v4489 = vsel %vm1681, %v4437, 0.0
        %v4490 = vadd.f32 %v4488, %v4489
        %v4491 = vsel %vm1681, %v4438, 0.0
        %v4492 = vadd.f32 %v4490, %v4491
        %v4493 = vsel %vm1681, %v4439, 0.0
        %v4494 = vadd.f32 %v4492, %v4493
        %v4495 = vsel %vm1681, %v4440, 0.0
        %v4496 = vadd.f32 %v4494, %v4495
        %v4497 = vsel %vm1681, %v4441, 0.0
        %v4498 = vadd.f32 %v4496, %v4497
        %v4499 = vsel %vm1681, %v4442, 0.0
        %v4500 = vadd.f32 %v4498, %v4499
        %v4501 = vsel %vm1681, %v4443, 0.0
        %v4502 = vadd.f32 %v4500, %v4501
        %v4503 = vsel %vm1681, %v4444, 0.0
        %v4504 = vadd.f32 %v4502, %v4503
        %v4505 = vsel %vm1681, %v4445, 0.0
        %v4506 = vadd.f32 %v4504, %v4505
        %v4507 = vsel %vm1681, %v4446, 0.0
        %v4508 = vadd.f32 %v4506, %v4507
        %v4509 = vsel %vm1681, %v4447, 0.0
        %v4510 = vadd.f32 %v4508, %v4509
        %v4511 = vrot.slane %v4510, 4
        %v4512 = vadd.f32 %v4510, %v4511
        %v4513 = vrot.slane %v4512, 2
        %v4514 = vadd.f32 %v4512, %v4513
        %v4515 = vrot.slane %v4514, 1
        %v4516 = vadd.f32 %v4514, %v4515
        %v4517 = vmul.f32 %v4415, 0.00390625
        %v4518 = vmul.f32 %v4516, 0.00390625
        %v4519 = vmul.f32 %v4517, %v4517
        %v4520 = vsub.f32 %v4518, %v4519
        %v4521 = vsub.f32 %v4221, %v4517
        %v4522 = vsub.f32 %v4224, %v4517
        %v4523 = vsub.f32 %v4229, %v4517
        %v4524 = vsub.f32 %v4232, %v4517
        %v4525 = vsub.f32 %v4237, %v4517
        %v4526 = vsub.f32 %v4240, %v4517
        %v4527 = vsub.f32 %v4245, %v4517
        %v4528 = vsub.f32 %v4248, %v4517
        %v4529 = vsub.f32 %v4253, %v4517
        %v4530 = vsub.f32 %v4256, %v4517
        %v4531 = vsub.f32 %v4261, %v4517
        %v4532 = vsub.f32 %v4264, %v4517
        %v4533 = vsub.f32 %v4269, %v4517
        %v4534 = vsub.f32 %v4272, %v4517
        %v4535 = vsub.f32 %v4277, %v4517
        %v4536 = vsub.f32 %v4280, %v4517
        %v4537 = vsub.f32 %v4285, %v4517
        %v4538 = vsub.f32 %v4288, %v4517
        %v4539 = vsub.f32 %v4293, %v4517
        %v4540 = vsub.f32 %v4296, %v4517
        %v4541 = vsub.f32 %v4301, %v4517
        %v4542 = vsub.f32 %v4304, %v4517
        %v4543 = vsub.f32 %v4309, %v4517
        %v4544 = vsub.f32 %v4312, %v4517
        %v4545 = vsub.f32 %v4317, %v4517
        %v4546 = vsub.f32 %v4320, %v4517
        %v4547 = vsub.f32 %v4325, %v4517
        %v4548 = vsub.f32 %v4328, %v4517
        %v4549 = vsub.f32 %v4333, %v4517
        %v4550 = vsub.f32 %v4336, %v4517
        %v4551 = vsub.f32 %v4341, %v4517
        %v4552 = vsub.f32 %v4344, %v4517
        %v4553 = vadd.f32 %v4520, 1e-05
        %v4554 = vrsqrt.pop %v4553
        %v4555 = vmul.f32 %v4521, %v4554
        %v4556 = vmul.f32 %v4522, %v4554
        %v4557 = vmul.f32 %v4523, %v4554
        %v4558 = vmul.f32 %v4524, %v4554
        %v4559 = vmul.f32 %v4525, %v4554
        %v4560 = vmul.f32 %v4526, %v4554
        %v4561 = vmul.f32 %v4527, %v4554
        %v4562 = vmul.f32 %v4528, %v4554
        %v4563 = vmul.f32 %v4529, %v4554
        %v4564 = vmul.f32 %v4530, %v4554
        %v4565 = vmul.f32 %v4531, %v4554
        %v4566 = vmul.f32 %v4532, %v4554
        %v4567 = vmul.f32 %v4533, %v4554
        %v4568 = vmul.f32 %v4534, %v4554
        %v4569 = vmul.f32 %v4535, %v4554
        %v4570 = vmul.f32 %v4536, %v4554
        %v4571 = vmul.f32 %v4537, %v4554
        %v4572 = vmul.f32 %v4538, %v4554
        %v4573 = vmul.f32 %v4539, %v4554
        %v4574 = vmul.f32 %v4540, %v4554
        %v4575 = vmul.f32 %v4541, %v4554
        %v4576 = vmul.f32 %v4542, %v4554
        %v4577 = vmul.f32 %v4543, %v4554
        %v4578 = vmul.f32 %v4544, %v4554
        %v4579 = vmul.f32 %v4545, %v4554
        %v4580 = vmul.f32 %v4546, %v4554
        %v4581 = vmul.f32 %v4547, %v4554
        %v4582 = vmul.f32 %v4548, %v4554
        %v4583 = vmul.f32 %v4549, %v4554
        %v4584 = vmul.f32 %v4550, %v4554
        %v4585 = vmul.f32 %v4551, %v4554
        %v4586 = vmul.f32 %v4552, %v4554
        %v4587 = vld [vmem:[%s3] sm:$0x3]
        %v4620 = vunpack.c.l.b16 %v197
        %v4621 = vunpack.c.l.b16 %v198
        %v4622 = vunpack.c.l.b16 %v199
        %v4623 = vunpack.c.l.b16 %v200
        %v4624 = vunpack.c.l.b16 %v201
        %v4625 = vunpack.c.l.b16 %v202
        %v4626 = vunpack.c.l.b16 %v203
        %v4627 = vunpack.c.l.b16 %v204
        %v4628 = vunpack.c.l.b16 %v205
        %v4629 = vunpack.c.l.b16 %v206
        %v4630 = vunpack.c.l.b16 %v207
        %v4631 = vunpack.c.l.b16 %v208
        %v4632 = vunpack.c.l.b16 %v209
        %v4633 = vunpack.c.l.b16 %v210
        %v4634 = vunpack.c.l.b16 %v211
        %v4635 = vunpack.c.l.b16 %v212
        %v4636 = vunpack.c.l.b16 %v213
        %v4637 = vunpack.c.l.b16 %v214
        %v4638 = vunpack.c.l.b16 %v215
        %v4639 = vunpack.c.l.b16 %v216
        %v4640 = vunpack.c.l.b16 %v217
        %v4641 = vunpack.c.l.b16 %v218
        %v4642 = vunpack.c.l.b16 %v219
        %v4643 = vunpack.c.l.b16 %v220
        %v4644 = vunpack.c.l.b16 %v221
        %v4645 = vunpack.c.l.b16 %v222
        %v4646 = vunpack.c.l.b16 %v223
        %v4647 = vunpack.c.l.b16 %v224
        %v4648 = vunpack.c.l.b16 %v225
        %v4649 = vunpack.c.l.b16 %v226
        %v4650 = vunpack.c.l.b16 %v227
        %v4651 = vunpack.c.l.b16 %v228
        %v4652 = vpack.c.b16 %v4621, %v4620
        %v4653 = vpack.c.b16 %v4623, %v4622
        %v4654 = vpack.c.b16 %v4625, %v4624
        %v4655 = vpack.c.b16 %v4627, %v4626
        %v4656 = vpack.c.b16 %v4629, %v4628
        %v4657 = vpack.c.b16 %v4631, %v4630
        %v4658 = vpack.c.b16 %v4633, %v4632
        %v4659 = vpack.c.b16 %v4635, %v4634
        %v4660 = vpack.c.b16 %v4637, %v4636
        %v4661 = vpack.c.b16 %v4639, %v4638
        %v4662 = vpack.c.b16 %v4641, %v4640
        %v4663 = vpack.c.b16 %v4643, %v4642
        %v4664 = vpack.c.b16 %v4645, %v4644
        %v4665 = vpack.c.b16 %v4647, %v4646
        %v4666 = vpack.c.b16 %v4649, %v4648
        %v4667 = vpack.c.b16 %v4651, %v4650
        %v4669 = vsel %vm261, %v4652, 0
        %v4672 = vsel %vm261, %v4653, 0
        %v4675 = vsel %vm261, %v4654, 0
        %v4678 = vsel %vm261, %v4655, 0
        %v4681 = vsel %vm261, %v4656, 0
        %v4684 = vsel %vm261, %v4657, 0
        %v4687 = vsel %vm261, %v4658, 0
        %v4690 = vsel %vm261, %v4659, 0
        %v4693 = vsel %vm261, %v4660, 0
        %v4696 = vsel %vm261, %v4661, 0
        %v4699 = vsel %vm261, %v4662, 0
        %v4702 = vsel %vm261, %v4663, 0
        %v4705 = vsel %vm261, %v4664, 0
        %v4708 = vsel %vm261, %v4665, 0
        %v4711 = vsel %vm261, %v4666, 0
        %v4714 = vsel %vm261, %v4667, 0
        %v4717 = vsel %vm1997, %v4587, 0
        %4719 = vmatprep.subr.bf16.mxu0 0
        %4720 = vmatpush1.bf16.msra.mxu0 0
        %4721 = vmatprep.subr.bf16.mxu0 0
        %4722 = vmatpush1.bf16.msra.mxu0 0
        %4723 = vmatprep.subr.bf16.mxu0 0
        %4724 = vmatpush1.bf16.msra.mxu0 0
        %4725 = vmatprep.subr.bf16.mxu0 0
        %4726 = vmatpush1.bf16.msra.mxu0 0
        %4727 = vmatprep.subr.bf16.mxu0 0
        %4728 = vmatpush1.bf16.msra.mxu0 0
        %4729 = vmatprep.subr.bf16.mxu0 0
        %4730 = vmatpush1.bf16.msra.mxu0 0
        %4731 = vmatprep.subr.bf16.mxu0 0
        %4732 = vmatpush1.bf16.msra.mxu0 0
        %4733 = vmatprep.subr.bf16.mxu0 0
        %4734 = vmatpush1.bf16.msra.mxu0 %v4717
        %4735 = vmatprep.subr.bf16.mxu0 0
        %4736 = vmatpush2.bf16.msra.mxu0 0
        %4737 = vmatprep.subr.bf16.mxu0 0
        %4738 = vmatpush2.bf16.msra.mxu0 0
        %4739 = vmatprep.subr.bf16.mxu0 0
        %4740 = vmatpush2.bf16.msra.mxu0 0
        %4741 = vmatprep.subr.bf16.mxu0 0
        %4742 = vmatpush2.bf16.msra.mxu0 0
        %4743 = vmatprep.subr.bf16.mxu0 0
        %4744 = vmatpush2.bf16.msra.mxu0 0
        %4745 = vmatprep.subr.bf16.mxu0 0
        %4746 = vmatpush2.bf16.msra.mxu0 0
        %4747 = vmatprep.subr.bf16.mxu0 0
        %4748 = vmatpush2.bf16.msra.mxu0 0
        %4749 = vmatprep.subr.bf16.mxu0 0
        %4750 = vmatpush2.bf16.msra.mxu0 0
        %4751 = vmatprep.mubr.bf16.mxu0 0
        %4752 = vmatmul.mubr.bf16.gmra.mxu0 %v4669
        %v4753 = vpop.f32.mrf.mxu0
        %v4754 = vadd.f32 0.0, %v4753
        %v4755 = vpop.f32.mrf.mxu0
        %v4756 = vpop.f32.mrf.mxu0
        %v4757 = vadd.f32 0.0, %v4756
        %v4758 = vpop.f32.mrf.mxu0
        %4759 = vmatprep.mubr.bf16.mxu0 0
        %4760 = vmatmul.mubr.bf16.gmra.mxu0 %v4672
        %v4761 = vpop.f32.mrf.mxu0
        %v4762 = vadd.f32 0.0, %v4761
        %v4763 = vpop.f32.mrf.mxu0
        %v4764 = vpop.f32.mrf.mxu0
        %v4765 = vadd.f32 0.0, %v4764
        %v4766 = vpop.f32.mrf.mxu0
        %4767 = vmatprep.mubr.bf16.mxu0 0
        %4768 = vmatmul.mubr.bf16.gmra.mxu0 %v4675
        %v4769 = vpop.f32.mrf.mxu0
        %v4770 = vadd.f32 0.0, %v4769
        %v4771 = vpop.f32.mrf.mxu0
        %v4772 = vpop.f32.mrf.mxu0
        %v4773 = vadd.f32 0.0, %v4772
        %v4774 = vpop.f32.mrf.mxu0
        %4775 = vmatprep.mubr.bf16.mxu0 0
        %4776 = vmatmul.mubr.bf16.gmra.mxu0 %v4678
        %v4777 = vpop.f32.mrf.mxu0
        %v4778 = vadd.f32 0.0, %v4777
        %v4779 = vpop.f32.mrf.mxu0
        %v4780 = vpop.f32.mrf.mxu0
        %v4781 = vadd.f32 0.0, %v4780
        %v4782 = vpop.f32.mrf.mxu0
        %4783 = vmatprep.mubr.bf16.mxu0 0
        %4784 = vmatmul.mubr.bf16.gmra.mxu0 %v4681
        %v4785 = vpop.f32.mrf.mxu0
        %v4786 = vadd.f32 0.0, %v4785
        %v4787 = vpop.f32.mrf.mxu0
        %v4788 = vpop.f32.mrf.mxu0
        %v4789 = vadd.f32 0.0, %v4788
        %v4790 = vpop.f32.mrf.mxu0
        %4791 = vmatprep.mubr.bf16.mxu0 0
        %4792 = vmatmul.mubr.bf16.gmra.mxu0 %v4684
        %v4793 = vpop.f32.mrf.mxu0
        %v4794 = vadd.f32 0.0, %v4793
        %v4795 = vpop.f32.mrf.mxu0
        %v4796 = vpop.f32.mrf.mxu0
        %v4797 = vadd.f32 0.0, %v4796
        %v4798 = vpop.f32.mrf.mxu0
        %4799 = vmatprep.mubr.bf16.mxu0 0
        %4800 = vmatmul.mubr.bf16.gmra.mxu0 %v4687
        %v4801 = vpop.f32.mrf.mxu0
        %v4802 = vadd.f32 0.0, %v4801
        %v4803 = vpop.f32.mrf.mxu0
        %v4804 = vpop.f32.mrf.mxu0
        %v4805 = vadd.f32 0.0, %v4804
        %v4806 = vpop.f32.mrf.mxu0
        %4807 = vmatprep.mubr.bf16.mxu0 0
        %4808 = vmatmul.mubr.bf16.gmra.mxu0 %v4690
        %v4809 = vpop.f32.mrf.mxu0
        %v4810 = vadd.f32 0.0, %v4809
        %v4811 = vpop.f32.mrf.mxu0
        %v4812 = vpop.f32.mrf.mxu0
        %v4813 = vadd.f32 0.0, %v4812
        %v4814 = vpop.f32.mrf.mxu0
        %4815 = vmatprep.mubr.bf16.mxu0 0
        %4816 = vmatmul.mubr.bf16.gmra.mxu0 %v4693
        %v4817 = vpop.f32.mrf.mxu0
        %v4818 = vadd.f32 0.0, %v4817
        %v4819 = vpop.f32.mrf.mxu0
        %v4820 = vpop.f32.mrf.mxu0
        %v4821 = vadd.f32 0.0, %v4820
        %v4822 = vpop.f32.mrf.mxu0
        %4823 = vmatprep.mubr.bf16.mxu0 0
        %4824 = vmatmul.mubr.bf16.gmra.mxu0 %v4696
        %v4825 = vpop.f32.mrf.mxu0
        %v4826 = vadd.f32 0.0, %v4825
        %v4827 = vpop.f32.mrf.mxu0
        %v4828 = vpop.f32.mrf.mxu0
        %v4829 = vadd.f32 0.0, %v4828
        %v4830 = vpop.f32.mrf.mxu0
        %4831 = vmatprep.mubr.bf16.mxu0 0
        %4832 = vmatmul.mubr.bf16.gmra.mxu0 %v4699
        %v4833 = vpop.f32.mrf.mxu0
        %v4834 = vadd.f32 0.0, %v4833
        %v4835 = vpop.f32.mrf.mxu0
        %v4836 = vpop.f32.mrf.mxu0
        %v4837 = vadd.f32 0.0, %v4836
        %v4838 = vpop.f32.mrf.mxu0
        %4839 = vmatprep.mubr.bf16.mxu0 0
        %4840 = vmatmul.mubr.bf16.gmra.mxu0 %v4702
        %v4841 = vpop.f32.mrf.mxu0
        %v4842 = vadd.f32 0.0, %v4841
        %v4843 = vpop.f32.mrf.mxu0
        %v4844 = vpop.f32.mrf.mxu0
        %v4845 = vadd.f32 0.0, %v4844
        %v4846 = vpop.f32.mrf.mxu0
        %4847 = vmatprep.mubr.bf16.mxu0 0
        %4848 = vmatmul.mubr.bf16.gmra.mxu0 %v4705
        %v4849 = vpop.f32.mrf.mxu0
        %v4850 = vadd.f32 0.0, %v4849
        %v4851 = vpop.f32.mrf.mxu0
        %v4852 = vpop.f32.mrf.mxu0
        %v4853 = vadd.f32 0.0, %v4852
        %v4854 = vpop.f32.mrf.mxu0
        %4855 = vmatprep.mubr.bf16.mxu0 0
        %4856 = vmatmul.mubr.bf16.gmra.mxu0 %v4708
        %v4857 = vpop.f32.mrf.mxu0
        %v4858 = vadd.f32 0.0, %v4857
        %v4859 = vpop.f32.mrf.mxu0
        %v4860 = vpop.f32.mrf.mxu0
        %v4861 = vadd.f32 0.0, %v4860
        %v4862 = vpop.f32.mrf.mxu0
        %4863 = vmatprep.mubr.bf16.mxu0 0
        %4864 = vmatmul.mubr.bf16.gmra.mxu0 %v4711
        %v4865 = vpop.f32.mrf.mxu0
        %v4866 = vadd.f32 0.0, %v4865
        %v4867 = vpop.f32.mrf.mxu0
        %v4868 = vpop.f32.mrf.mxu0
        %v4869 = vadd.f32 0.0, %v4868
        %v4870 = vpop.f32.mrf.mxu0
        %4871 = vmatprep.mubr.bf16.mxu0 0
        %4872 = vmatmul.mubr.bf16.gmra.mxu0 %v4714
        %v4873 = vpop.f32.mrf.mxu0
        %v4874 = vadd.f32 0.0, %v4873
        %v4875 = vpop.f32.mrf.mxu0
        %v4876 = vpop.f32.mrf.mxu0
        %v4877 = vadd.f32 0.0, %v4876
        %v4878 = vpop.f32.mrf.mxu0
        %4879 = vdwg.mxu0
        %v4880 = vsel %vm1681, %v4754, 0.0
        %v4881 = vsel %vm1681, %v4757, 0.0
        %v4882 = vadd.f32 %v4880, %v4881
        %v4883 = vsel %vm1681, %v4762, 0.0
        %v4884 = vadd.f32 %v4882, %v4883
        %v4885 = vsel %vm1681, %v4765, 0.0
        %v4886 = vadd.f32 %v4884, %v4885
        %v4887 = vsel %vm1681, %v4770, 0.0
        %v4888 = vadd.f32 %v4886, %v4887
        %v4889 = vsel %vm1681, %v4773, 0.0
        %v4890 = vadd.f32 %v4888, %v4889
        %v4891 = vsel %vm1681, %v4778, 0.0
        %v4892 = vadd.f32 %v4890, %v4891
        %v4893 = vsel %vm1681, %v4781, 0.0
        %v4894 = vadd.f32 %v4892, %v4893
        %v4895 = vsel %vm1681, %v4786, 0.0
        %v4896 = vadd.f32 %v4894, %v4895
        %v4897 = vsel %vm1681, %v4789, 0.0
        %v4898 = vadd.f32 %v4896, %v4897
        %v4899 = vsel %vm1681, %v4794, 0.0
        %v4900 = vadd.f32 %v4898, %v4899
        %v4901 = vsel %vm1681, %v4797, 0.0
        %v4902 = vadd.f32 %v4900, %v4901
        %v4903 = vsel %vm1681, %v4802, 0.0
        %v4904 = vadd.f32 %v4902, %v4903
        %v4905 = vsel %vm1681, %v4805, 0.0
        %v4906 = vadd.f32 %v4904, %v4905
        %v4907 = vsel %vm1681, %v4810, 0.0
        %v4908 = vadd.f32 %v4906, %v4907
        %v4909 = vsel %vm1681, %v4813, 0.0
        %v4910 = vadd.f32 %v4908, %v4909
        %v4911 = vsel %vm1681, %v4818, 0.0
        %v4912 = vadd.f32 %v4910, %v4911
        %v4913 = vsel %vm1681, %v4821, 0.0
        %v4914 = vadd.f32 %v4912, %v4913
        %v4915 = vsel %vm1681, %v4826, 0.0
        %v4916 = vadd.f32 %v4914, %v4915
        %v4917 = vsel %vm1681, %v4829, 0.0
        %v4918 = vadd.f32 %v4916, %v4917
        %v4919 = vsel %vm1681, %v4834, 0.0
        %v4920 = vadd.f32 %v4918, %v4919
        %v4921 = vsel %vm1681, %v4837, 0.0
        %v4922 = vadd.f32 %v4920, %v4921
        %v4923 = vsel %vm1681, %v4842, 0.0
        %v4924 = vadd.f32 %v4922, %v4923
        %v4925 = vsel %vm1681, %v4845, 0.0
        %v4926 = vadd.f32 %v4924, %v4925
        %v4927 = vsel %vm1681, %v4850, 0.0
        %v4928 = vadd.f32 %v4926, %v4927
        %v4929 = vsel %vm1681, %v4853, 0.0
        %v4930 = vadd.f32 %v4928, %v4929
        %v4931 = vsel %vm1681, %v4858, 0.0
        %v4932 = vadd.f32 %v4930, %v4931
        %v4933 = vsel %vm1681, %v4861, 0.0
        %v4934 = vadd.f32 %v4932, %v4933
        %v4935 = vsel %vm1681, %v4866, 0.0
        %v4936 = vadd.f32 %v4934, %v4935
        %v4937 = vsel %vm1681, %v4869, 0.0
        %v4938 = vadd.f32 %v4936, %v4937
        %v4939 = vsel %vm1681, %v4874, 0.0
        %v4940 = vadd.f32 %v4938, %v4939
        %v4941 = vsel %vm1681, %v4877, 0.0
        %v4942 = vadd.f32 %v4940, %v4941
        %v4943 = vrot.slane %v4942, 4
        %v4944 = vadd.f32 %v4942, %v4943
        %v4945 = vrot.slane %v4944, 2
        %v4946 = vadd.f32 %v4944, %v4945
        %v4947 = vrot.slane %v4946, 1
        %v4948 = vadd.f32 %v4946, %v4947
        %v4949 = vmul.f32 %v4754, %v4754
        %v4950 = vmul.f32 %v4757, %v4757
        %v4951 = vmul.f32 %v4762, %v4762
        %v4952 = vmul.f32 %v4765, %v4765
        %v4953 = vmul.f32 %v4770, %v4770
        %v4954 = vmul.f32 %v4773, %v4773
        %v4955 = vmul.f32 %v4778, %v4778
        %v4956 = vmul.f32 %v4781, %v4781
        %v4957 = vmul.f32 %v4786, %v4786
        %v4958 = vmul.f32 %v4789, %v4789
        %v4959 = vmul.f32 %v4794, %v4794
        %v4960 = vmul.f32 %v4797, %v4797
        %v4961 = vmul.f32 %v4802, %v4802
        %v4962 = vmul.f32 %v4805, %v4805
        %v4963 = vmul.f32 %v4810, %v4810
        %v4964 = vmul.f32 %v4813, %v4813
        %v4965 = vmul.f32 %v4818, %v4818
        %v4966 = vmul.f32 %v4821, %v4821
        %v4967 = vmul.f32 %v4826, %v4826
        %v4968 = vmul.f32 %v4829, %v4829
        %v4969 = vmul.f32 %v4834, %v4834
        %v4970 = vmul.f32 %v4837, %v4837
        %v4971 = vmul.f32 %v4842, %v4842
        %v4972 = vmul.f32 %v4845, %v4845
        %v4973 = vmul.f32 %v4850, %v4850
        %v4974 = vmul.f32 %v4853, %v4853
        %v4975 = vmul.f32 %v4858, %v4858
        %v4976 = vmul.f32 %v4861, %v4861
        %v4977 = vmul.f32 %v4866, %v4866
        %v4978 = vmul.f32 %v4869, %v4869
        %v4979 = vmul.f32 %v4874, %v4874
        %v4980 = vmul.f32 %v4877, %v4877
        %v4981 = vsel %vm1681, %v4949, 0.0
        %v4982 = vsel %vm1681, %v4950, 0.0
        %v4983 = vadd.f32 %v4981, %v4982
        %v4984 = vsel %vm1681, %v4951, 0.0
        %v4985 = vadd.f32 %v4983, %v4984
        %v4986 = vsel %vm1681, %v4952, 0.0
        %v4987 = vadd.f32 %v4985, %v4986
        %v4988 = vsel %vm1681, %v4953, 0.0
        %v4989 = vadd.f32 %v4987, %v4988
        %v4990 = vsel %vm1681, %v4954, 0.0
        %v4991 = vadd.f32 %v4989, %v4990
        %v4992 = vsel %vm1681, %v4955, 0.0
        %v4993 = vadd.f32 %v4991, %v4992
        %v4994 = vsel %vm1681, %v4956, 0.0
        %v4995 = vadd.f32 %v4993, %v4994
        %v4996 = vsel %vm1681, %v4957, 0.0
        %v4997 = vadd.f32 %v4995, %v4996
        %v4998 = vsel %vm1681, %v4958, 0.0
        %v4999 = vadd.f32 %v4997, %v4998
        %v5000 = vsel %vm1681, %v4959, 0.0
        %v5001 = vadd.f32 %v4999, %v5000
        %v5002 = vsel %vm1681, %v4960, 0.0
        %v5003 = vadd.f32 %v5001, %v5002
        %v5004 = vsel %vm1681, %v4961, 0.0
        %v5005 = vadd.f32 %v5003, %v5004
        %v5006 = vsel %vm1681, %v4962, 0.0
        %v5007 = vadd.f32 %v5005, %v5006
        %v5008 = vsel %vm1681, %v4963, 0.0
        %v5009 = vadd.f32 %v5007, %v5008
        %v5010 = vsel %vm1681, %v4964, 0.0
        %v5011 = vadd.f32 %v5009, %v5010
        %v5012 = vsel %vm1681, %v4965, 0.0
        %v5013 = vadd.f32 %v5011, %v5012
        %v5014 = vsel %vm1681, %v4966, 0.0
        %v5015 = vadd.f32 %v5013, %v5014
        %v5016 = vsel %vm1681, %v4967, 0.0
        %v5017 = vadd.f32 %v5015, %v5016
        %v5018 = vsel %vm1681, %v4968, 0.0
        %v5019 = vadd.f32 %v5017, %v5018
        %v5020 = vsel %vm1681, %v4969, 0.0
        %v5021 = vadd.f32 %v5019, %v5020
        %v5022 = vsel %vm1681, %v4970, 0.0
        %v5023 = vadd.f32 %v5021, %v5022
        %v5024 = vsel %vm1681, %v4971, 0.0
        %v5025 = vadd.f32 %v5023, %v5024
        %v5026 = vsel %vm1681, %v4972, 0.0
        %v5027 = vadd.f32 %v5025, %v5026
        %v5028 = vsel %vm1681, %v4973, 0.0
        %v5029 = vadd.f32 %v5027, %v5028
        %v5030 = vsel %vm1681, %v4974, 0.0
        %v5031 = vadd.f32 %v5029, %v5030
        %v5032 = vsel %vm1681, %v4975, 0.0
        %v5033 = vadd.f32 %v5031, %v5032
        %v5034 = vsel %vm1681, %v4976, 0.0
        %v5035 = vadd.f32 %v5033, %v5034
        %v5036 = vsel %vm1681, %v4977, 0.0
        %v5037 = vadd.f32 %v5035, %v5036
        %v5038 = vsel %vm1681, %v4978, 0.0
        %v5039 = vadd.f32 %v5037, %v5038
        %v5040 = vsel %vm1681, %v4979, 0.0
        %v5041 = vadd.f32 %v5039, %v5040
        %v5042 = vsel %vm1681, %v4980, 0.0
        %v5043 = vadd.f32 %v5041, %v5042
        %v5044 = vrot.slane %v5043, 4
        %v5045 = vadd.f32 %v5043, %v5044
        %v5046 = vrot.slane %v5045, 2
        %v5047 = vadd.f32 %v5045, %v5046
        %v5048 = vrot.slane %v5047, 1
        %v5049 = vadd.f32 %v5047, %v5048
        %v5050 = vmul.f32 %v4948, 0.00390625
        %v5051 = vmul.f32 %v5049, 0.00390625
        %v5052 = vmul.f32 %v5050, %v5050
        %v5053 = vsub.f32 %v5051, %v5052
        %v5054 = vsub.f32 %v4754, %v5050
        %v5055 = vsub.f32 %v4757, %v5050
        %v5056 = vsub.f32 %v4762, %v5050
        %v5057 = vsub.f32 %v4765, %v5050
        %v5058 = vsub.f32 %v4770, %v5050
        %v5059 = vsub.f32 %v4773, %v5050
        %v5060 = vsub.f32 %v4778, %v5050
        %v5061 = vsub.f32 %v4781, %v5050
        %v5062 = vsub.f32 %v4786, %v5050
        %v5063 = vsub.f32 %v4789, %v5050
        %v5064 = vsub.f32 %v4794, %v5050
        %v5065 = vsub.f32 %v4797, %v5050
        %v5066 = vsub.f32 %v4802, %v5050
        %v5067 = vsub.f32 %v4805, %v5050
        %v5068 = vsub.f32 %v4810, %v5050
        %v5069 = vsub.f32 %v4813, %v5050
        %v5070 = vsub.f32 %v4818, %v5050
        %v5071 = vsub.f32 %v4821, %v5050
        %v5072 = vsub.f32 %v4826, %v5050
        %v5073 = vsub.f32 %v4829, %v5050
        %v5074 = vsub.f32 %v4834, %v5050
        %v5075 = vsub.f32 %v4837, %v5050
        %v5076 = vsub.f32 %v4842, %v5050
        %v5077 = vsub.f32 %v4845, %v5050
        %v5078 = vsub.f32 %v4850, %v5050
        %v5079 = vsub.f32 %v4853, %v5050
        %v5080 = vsub.f32 %v4858, %v5050
        %v5081 = vsub.f32 %v4861, %v5050
        %v5082 = vsub.f32 %v4866, %v5050
        %v5083 = vsub.f32 %v4869, %v5050
        %v5084 = vsub.f32 %v4874, %v5050
        %v5085 = vsub.f32 %v4877, %v5050
        %v5086 = vadd.f32 %v5053, 1e-05
        %v5087 = vrsqrt.pop %v5086
        %v5088 = vmul.f32 %v5054, %v5087
        %v5089 = vmul.f32 %v5055, %v5087
        %v5090 = vmul.f32 %v5056, %v5087
        %v5091 = vmul.f32 %v5057, %v5087
        %v5092 = vmul.f32 %v5058, %v5087
        %v5093 = vmul.f32 %v5059, %v5087
        %v5094 = vmul.f32 %v5060, %v5087
        %v5095 = vmul.f32 %v5061, %v5087
        %v5096 = vmul.f32 %v5062, %v5087
        %v5097 = vmul.f32 %v5063, %v5087
        %v5098 = vmul.f32 %v5064, %v5087
        %v5099 = vmul.f32 %v5065, %v5087
        %v5100 = vmul.f32 %v5066, %v5087
        %v5101 = vmul.f32 %v5067, %v5087
        %v5102 = vmul.f32 %v5068, %v5087
        %v5103 = vmul.f32 %v5069, %v5087
        %v5104 = vmul.f32 %v5070, %v5087
        %v5105 = vmul.f32 %v5071, %v5087
        %v5106 = vmul.f32 %v5072, %v5087
        %v5107 = vmul.f32 %v5073, %v5087
        %v5108 = vmul.f32 %v5074, %v5087
        %v5109 = vmul.f32 %v5075, %v5087
        %v5110 = vmul.f32 %v5076, %v5087
        %v5111 = vmul.f32 %v5077, %v5087
        %v5112 = vmul.f32 %v5078, %v5087
        %v5113 = vmul.f32 %v5079, %v5087
        %v5114 = vmul.f32 %v5080, %v5087
        %v5115 = vmul.f32 %v5081, %v5087
        %v5116 = vmul.f32 %v5082, %v5087
        %v5117 = vmul.f32 %v5083, %v5087
        %v5118 = vmul.f32 %v5084, %v5087
        %v5119 = vmul.f32 %v5085, %v5087
        %v5120 = vadd.f32 %v4555, %v5088
        %v5121 = vadd.f32 %v4556, %v5089
        %v5122 = vadd.f32 %v4557, %v5090
        %v5123 = vadd.f32 %v4558, %v5091
        %v5124 = vadd.f32 %v4559, %v5092
        %v5125 = vadd.f32 %v4560, %v5093
        %v5126 = vadd.f32 %v4561, %v5094
        %v5127 = vadd.f32 %v4562, %v5095
        %v5128 = vadd.f32 %v4563, %v5096
        %v5129 = vadd.f32 %v4564, %v5097
        %v5130 = vadd.f32 %v4565, %v5098
        %v5131 = vadd.f32 %v4566, %v5099
        %v5132 = vadd.f32 %v4567, %v5100
        %v5133 = vadd.f32 %v4568, %v5101
        %v5134 = vadd.f32 %v4569, %v5102
        %v5135 = vadd.f32 %v4570, %v5103
        %v5136 = vadd.f32 %v4571, %v5104
        %v5137 = vadd.f32 %v4572, %v5105
        %v5138 = vadd.f32 %v4573, %v5106
        %v5139 = vadd.f32 %v4574, %v5107
        %v5140 = vadd.f32 %v4575, %v5108
        %v5141 = vadd.f32 %v4576, %v5109
        %v5142 = vadd.f32 %v4577, %v5110
        %v5143 = vadd.f32 %v4578, %v5111
        %v5144 = vadd.f32 %v4579, %v5112
        %v5145 = vadd.f32 %v4580, %v5113
        %v5146 = vadd.f32 %v4581, %v5114
        %v5147 = vadd.f32 %v4582, %v5115
        %v5148 = vadd.f32 %v4583, %v5116
        %v5149 = vadd.f32 %v4584, %v5117
        %v5150 = vadd.f32 %v4585, %v5118
        %v5151 = vadd.f32 %v4586, %v5119
        %v5152 = vmax.f32 %v5120, 0.0
        %v5153 = vmax.f32 %v5121, 0.0
        %v5154 = vmax.f32 %v5122, 0.0
        %v5155 = vmax.f32 %v5123, 0.0
        %v5156 = vmax.f32 %v5124, 0.0
        %v5157 = vmax.f32 %v5125, 0.0
        %v5158 = vmax.f32 %v5126, 0.0
        %v5159 = vmax.f32 %v5127, 0.0
        %v5160 = vmax.f32 %v5128, 0.0
        %v5161 = vmax.f32 %v5129, 0.0
        %v5162 = vmax.f32 %v5130, 0.0
        %v5163 = vmax.f32 %v5131, 0.0
        %v5164 = vmax.f32 %v5132, 0.0
        %v5165 = vmax.f32 %v5133, 0.0
        %v5166 = vmax.f32 %v5134, 0.0
        %v5167 = vmax.f32 %v5135, 0.0
        %v5168 = vmax.f32 %v5136, 0.0
        %v5169 = vmax.f32 %v5137, 0.0
        %v5170 = vmax.f32 %v5138, 0.0
        %v5171 = vmax.f32 %v5139, 0.0
        %v5172 = vmax.f32 %v5140, 0.0
        %v5173 = vmax.f32 %v5141, 0.0
        %v5174 = vmax.f32 %v5142, 0.0
        %v5175 = vmax.f32 %v5143, 0.0
        %v5176 = vmax.f32 %v5144, 0.0
        %v5177 = vmax.f32 %v5145, 0.0
        %v5178 = vmax.f32 %v5146, 0.0
        %v5179 = vmax.f32 %v5147, 0.0
        %v5180 = vmax.f32 %v5148, 0.0
        %v5181 = vmax.f32 %v5149, 0.0
        %v5182 = vmax.f32 %v5150, 0.0
        %v5183 = vmax.f32 %v5151, 0.0
        %5184 = vxpose.xlu0.b32.start [1/16] %v5152, 128
        %5185 = vxpose.xlu0.b32.cont [2/16] %v5153, 128
        %5186 = vxpose.xlu0.b32.cont [3/16] %v5154, 128
        %5187 = vxpose.xlu0.b32.cont [4/16] %v5155, 128
        %5188 = vxpose.xlu0.b32.cont [5/16] %v5156, 128
        %5189 = vxpose.xlu0.b32.cont [6/16] %v5157, 128
        %5190 = vxpose.xlu0.b32.cont [7/16] %v5158, 128
        %5191 = vxpose.xlu0.b32.cont [8/16] %v5159, 128
        %5192 = vxpose.xlu0.b32.cont [9/16] %v5160, 128
        %5193 = vxpose.xlu0.b32.cont [10/16] %v5161, 128
        %5194 = vxpose.xlu0.b32.cont [11/16] %v5162, 128
        %5195 = vxpose.xlu0.b32.cont [12/16] %v5163, 128
        %5196 = vxpose.xlu0.b32.cont [13/16] %v5164, 128
        %5197 = vxpose.xlu0.b32.cont [14/16] %v5165, 128
        %5198 = vxpose.xlu0.b32.cont [15/16] %v5166, 128
        %5199 = vxpose.xlu0.b32.end [16/16] %v5167, 128
        %v5200 = vpop.trf.xlu0
        %v5201 = vpop.trf.xlu0
        %v5202 = vpop.trf.xlu0
        %v5203 = vpop.trf.xlu0
        %v5204 = vpop.trf.xlu0
        %v5205 = vpop.trf.xlu0
        %v5206 = vpop.trf.xlu0
        %v5207 = vpop.trf.xlu0
        %v5208 = vpop.trf.xlu0
        %v5209 = vpop.trf.xlu0
        %v5210 = vpop.trf.xlu0
        %v5211 = vpop.trf.xlu0
        %v5212 = vpop.trf.xlu0
        %v5213 = vpop.trf.xlu0
        %v5214 = vpop.trf.xlu0
        %v5215 = vpop.trf.xlu0
        %5216 = vxpose.xlu0.b32.start [1/16] %v5168, 128
        %5217 = vxpose.xlu0.b32.cont [2/16] %v5169, 128
        %5218 = vxpose.xlu0.b32.cont [3/16] %v5170, 128
        %5219 = vxpose.xlu0.b32.cont [4/16] %v5171, 128
        %5220 = vxpose.xlu0.b32.cont [5/16] %v5172, 128
        %5221 = vxpose.xlu0.b32.cont [6/16] %v5173, 128
        %5222 = vxpose.xlu0.b32.cont [7/16] %v5174, 128
        %5223 = vxpose.xlu0.b32.cont [8/16] %v5175, 128
        %5224 = vxpose.xlu0.b32.cont [9/16] %v5176, 128
        %5225 = vxpose.xlu0.b32.cont [10/16] %v5177, 128
        %5226 = vxpose.xlu0.b32.cont [11/16] %v5178, 128
        %5227 = vxpose.xlu0.b32.cont [12/16] %v5179, 128
        %5228 = vxpose.xlu0.b32.cont [13/16] %v5180, 128
        %5229 = vxpose.xlu0.b32.cont [14/16] %v5181, 128
        %5230 = vxpose.xlu0.b32.cont [15/16] %v5182, 128
        %5231 = vxpose.xlu0.b32.end [16/16] %v5183, 128
        %v5232 = vpop.trf.xlu0
        %v5233 = vpop.trf.xlu0
        %v5234 = vpop.trf.xlu0
        %v5235 = vpop.trf.xlu0
        %v5236 = vpop.trf.xlu0
        %v5237 = vpop.trf.xlu0
        %v5238 = vpop.trf.xlu0
        %v5239 = vpop.trf.xlu0
        %v5240 = vpop.trf.xlu0
        %v5241 = vpop.trf.xlu0
        %v5242 = vpop.trf.xlu0
        %v5243 = vpop.trf.xlu0
        %v5244 = vpop.trf.xlu0
        %v5245 = vpop.trf.xlu0
        %v5246 = vpop.trf.xlu0
        %v5247 = vpop.trf.xlu0
        %5248 = vst [vmem:[%s190] sm:$0xff] %v5200
        %5249 = vst [vmem:[%s190 + $0x8] sm:$0xff] %v5232
        %s5250 = sand.u32 %s115, 1
        %s5251 = scalar_lea.sflag [#allocation5], %s5250
        %s5252 = sand.u32 %s115, 1
        %s5253 = smul.addr %s5252, 16
        %s5254 = scalar_lea.vmem [#allocation4], %s5253
        // Predicated region
        $region37: #{tpu_custom_call.1} parent=35 // pred_check
          %p5255 = pneg %p125
        $region38: #{tpu_custom_call.1} parent=35 // pred_check_branch
          %5257 = sbr.rel (%p5255) target = $region40
        $region39: #{tpu_custom_call.1} parent=35 // pred_region
          %s5259 = ssub.s32 256, 256
          %5260 = vsyncadd %s5251, %s5259
          %s5261 = smul.addr %s18, 2
          %s5262 = smul.addr %s5261, 128
          %s5263 = scalar_lea.hbm %s4, %s5262
          %s5265 = sshll.u32 %s5254, 4
          %s5266 = int_to_ptr.vmem [resolvable:$true] %s5265
          %5268 = dma.vmem_to_hbm [thread:$0]  %s5266, 256, %s5263, %s5251
        $region40: #{tpu_custom_call.1} parent=35 // pred_fallthru
          _
      $region36: #{tpu_custom_call.1} parent=5 // pred_fallthru
        _
      %p5269 = scmp.le.s32.totalorder 2, %s13
      // Predicated region
      $region41: #{tpu_custom_call.1} parent=5 // pred_check
        %p5270 = pneg %p5269
      $region42: #{tpu_custom_call.1} parent=5 // pred_check_branch
        %5272 = sbr.rel (%p5270) target = $region44
      $region43: #{tpu_custom_call.1} parent=5 // pred_region
        %s5273 = ssub.s32 %s13, 2
        // Predicated region
        $region45: #{tpu_custom_call.1} parent=43 // pred_check
          %p5274 = pneg %p131
        $region46: #{tpu_custom_call.1} parent=43 // pred_check_branch
          %5276 = sbr.rel (%p5274) target = $region48
        $region47: #{tpu_custom_call.1} parent=43 // pred_region
          %s5277 = sand.u32 %s116, 1
          %s5278 = scalar_lea.sflag [#allocation5], %s5277
          %s5279 = sand.u32 %s116, 1
          %s5280 = smul.addr %s5279, 16
          %s5281 = scalar_lea.vmem [#allocation4], %s5280
          %5282 = dma.done %s5278, 256
        $region48: #{tpu_custom_call.1} parent=43 // pred_fallthru
          _
      $region44: #{tpu_custom_call.1} parent=5 // pred_fallthru
        _
    $region6: #{tpu_custom_call.1} parent=1 // loop_footer
      %s17 = sadd.s32 1, %s13
    $region7: #{tpu_custom_call.1} parent=1 // loop_footer_branch
      %12 = sbr.rel target = $region3
    $region8: #{tpu_custom_call.1} parent=1 // loop_exit
      _
    %5283 = vsyncpa [#allocation5], 1
    %s5284 = scalar_lea.sflag [#allocation5], 1
    %5285 = vsyncpa %s5284, 1

</llo_original>
